<compile_context>
chip_gen: v7x
topology: tpu7x:2x2x1
jax: 0.10.0
libtpu: 0.0.40
codegen_flags: <defaults>
</compile_context>

<pallas_src>
import jax
import jax.numpy as jnp
from jax.experimental import pallas as pl
from jax.experimental.pallas import tpu as pltpu

# ----------------------------- model config ---------------------------------
IN_FEATURES = 32          # must equal width (module asserts this)
WIDTH = 32                # n_hidden
OUT_FEATURES = 1
NUM_LAYERS = 5            # -> NUM_LAYERS - 1 = 4 hidden Linear+ReLU layers
N_HIDDEN_LAYERS = NUM_LAYERS - 1
LANES = 128               # TPU vreg lane width


# ------------------------------ Pallas kernel -------------------------------
def time_transformer_kernel(x_ref, m_ref, wh_ref, bh_ref, wo_ref, bo_ref,
                            o_ref):
    """One batch tile of the whole MLP chain, in lane-packed layout.

    x_ref:  (tile_p, 128) bf16   4 batch rows packed per sublane row (streamed)
    m_ref:  (tile_p, 128) bf16   mask, same packing (streamed)
    wh_ref: (L, 128, 128) bf16   block-diagonal hidden weights (VMEM-resident)
    bh_ref: (L, 1, 128)   f32    lane-tiled hidden biases (VMEM-resident)
    wo_ref: (128, P)      bf16   block-diagonal output weights, P = 4*out_feat
    bo_ref: (1, P)        f32    lane-tiled output bias
    o_ref:  (tile_p, P)   f32    packed output
    """
    h = x_ref[...]                                   # bf16 MXU operand
    mask = m_ref[...].astype(jnp.float32)            # hoisted: converted once

    # Static unroll over the hidden layers: each is a lane-dense
    # (tile_p,128)@(128,128) bf16 MXU matmul with f32 accumulation, followed
    # by a fused f32 epilogue (bias + ReLU + mask) on the VPU.
    for i in range(wh_ref.shape[0]):
        y = jnp.dot(h, wh_ref[i], preferred_element_type=jnp.float32)
        y = jnp.maximum(y + bh_ref[i], 0.0) * mask   # f32 epilogue (v5e-safe)
        h = y.astype(jnp.bfloat16)                   # bf16 for the next MXU op

    out = jnp.dot(h, wo_ref[...], preferred_element_type=jnp.float32)
    o_ref[...] = out + bo_ref[...]


# ------------------------------ wrapper --------------------------------------
def time_transformer_forward(x, mask, w_hidden, b_hidden, w_out, b_out,
                             *, block_rows=512):
    """Streaming MLP forward.

    x, mask:   (B, 32) f32
    w_hidden:  (L, 32, 32) f32, already transposed to (in, out)
    b_hidden:  (L, 1, 32)  f32
    w_out:     (32, out)   f32, transposed (in, out)
    b_out:     (1, out)    f32
    returns    (B, out)    f32
    """
    B, F = x.shape
    assert F == WIDTH and LANES % F == 0
    L = w_hidden.shape[0]
    OUT = w_out.shape[1]
    PACK = LANES // F                       # 4 feature groups per 128 lanes

    # ---- pack 4 batch rows onto the lane axis (free row-major reshape) ------
    bp = pl.cdiv(B, PACK)                              # packed rows needed
    tile_p = min(block_rows, ((bp + 7) // 8) * 8)      # sublane-aligned tile
    bp_pad = pl.cdiv(bp, tile_p) * tile_p
    b_pad = bp_pad * PACK

    pad = ((0, b_pad - B), (0, 0))
    xp = jnp.pad(x, pad).astype(jnp.bfloat16).reshape(bp_pad, LANES)
    mp = jnp.pad(mask, pad).astype(jnp.bfloat16).reshape(bp_pad, LANES)

    # ---- block-diagonal weight packing (done once at trace time) ------------
    eye = jnp.eye(PACK, dtype=jnp.float32)
    wh_big = jnp.einsum('ab,lij->laibj', eye, w_hidden)
    wh_big = wh_big.reshape(L, LANES, LANES).astype(jnp.bfloat16)
    bh_big = jnp.tile(b_hidden.reshape(L, 1, F), (1, 1, PACK)).astype(jnp.float32)
    wo_big = jnp.kron(eye, w_out).astype(jnp.bfloat16)          # (128, PACK*OUT)
    bo_big = jnp.tile(b_out.reshape(1, OUT), (1, PACK)).astype(jnp.float32)

    grid = (bp_pad // tile_p,)
    out_p = pl.pallas_call(
        time_transformer_kernel,
        out_shape=jax.ShapeDtypeStruct((bp_pad, PACK * OUT), jnp.float32),
        grid=grid,
        in_specs=[
            pl.BlockSpec((tile_p, LANES), lambda i: (i, 0)),        # x (streamed)
            pl.BlockSpec((tile_p, LANES), lambda i: (i, 0)),        # mask (streamed)
            pl.BlockSpec((L, LANES, LANES), lambda i: (0, 0, 0)),   # W resident
            pl.BlockSpec((L, 1, LANES), lambda i: (0, 0, 0)),       # b resident
            pl.BlockSpec((LANES, PACK * OUT), lambda i: (0, 0)),    # W_out resident
            pl.BlockSpec((1, PACK * OUT), lambda i: (0, 0)),        # b_out resident
        ],
        out_specs=pl.BlockSpec((tile_p, PACK * OUT), lambda i: (i, 0)),
        compiler_params=pltpu.CompilerParams(
            dimension_semantics=("parallel",)),
    )(xp, mp, wh_big, bh_big, wo_big, bo_big)

    # unpack: packed row r, group g  ->  original row PACK*r + g
    return out_p.reshape(b_pad, OUT)[:B]


# --------------------------- parameter init ----------------------------------
def init_params(key):
    """Matches TimeTrasformer.init_weights(): weights ~ N(0, 0.001),
    biases ~ N(0, 1e-6)."""
    keys = jax.random.split(key, 2 * N_HIDDEN_LAYERS + 2)
    w_hidden, b_hidden = [], []
    for i in range(N_HIDDEN_LAYERS):
        # torch Linear weight is (out, in); store transposed (in, out).
        w = 0.001 * jax.random.normal(keys[2 * i], (WIDTH, WIDTH), jnp.float32)
        b = 1e-6 * jax.random.normal(keys[2 * i + 1], (1, WIDTH), jnp.float32)
        w_hidden.append(w)
        b_hidden.append(b)
    w_hidden = jnp.stack(w_hidden, axis=0)            # (L, 32, 32)
    b_hidden = jnp.stack(b_hidden, axis=0)            # (L, 1, 32)
    w_out = 0.001 * jax.random.normal(keys[-2], (WIDTH, OUT_FEATURES), jnp.float32)
    b_out = 1e-6 * jax.random.normal(keys[-1], (1, OUT_FEATURES), jnp.float32)
    return w_hidden, b_hidden, w_out, b_out


# --------------------------- pure-JAX reference ------------------------------
def reference_forward(x, mask, w_hidden, b_hidden, w_out, b_out):
    """f32 reference that mirrors the kernel's bf16 quantization of the matmul
    operands (the kernel accumulates in f32)."""
    bf = lambda a: a.astype(jnp.bfloat16).astype(jnp.float32)
    h = bf(x)
    m = mask.astype(jnp.float32)
    for i in range(N_HIDDEN_LAYERS):
        h = jnp.maximum(h @ bf(w_hidden[i]) + b_hidden[i], 0.0) * m
        h = bf(h)
    return h @ bf(w_out) + b_out


# --------------------------------- main --------------------------------------
if __name__ == "__main__":
    key = jax.random.PRNGKey(0)
    k_x, k_mask, k_params = jax.random.split(key, 3)

    # Thousands of rows so the streaming batch grid (2 tiles of 512 packed
    # rows = 2048 original rows each) actually amortizes launch/DMA overhead.
    B = 4096
    x = jax.random.normal(k_x, (B, IN_FEATURES), dtype=jnp.float32)
    mask = (jax.random.uniform(k_mask, (B, WIDTH)) > 0.2).astype(jnp.float32)

    w_hidden, b_hidden, w_out, b_out = init_params(k_params)

    fwd = jax.jit(time_transformer_forward)
    out = fwd(x, mask, w_hidden, b_hidden, w_out, b_out)
    out = jax.block_until_ready(out)

    ref = reference_forward(x, mask, w_hidden, b_hidden, w_out, b_out)
    assert out.shape == (B, OUT_FEATURES)
    assert jnp.allclose(out, ref, atol=1e-5, rtol=1e-4), "mismatch vs reference"

    print("KERNEL_OK")
</pallas_src>

<mosaic_0001>
module attributes {stable_mosaic.version = 11 : i64} {
  func.func @time_transformer_kernel(%arg0: i32, %arg1: memref<512x128xbf16, #tpu.memory_space<vmem>>, %arg2: memref<512x128xbf16, #tpu.memory_space<vmem>>, %arg3: memref<4x128x128xbf16, #tpu.memory_space<vmem>>, %arg4: memref<4x1x128xf32, #tpu.memory_space<vmem>>, %arg5: memref<128x4xbf16, #tpu.memory_space<vmem>>, %arg6: memref<1x4xf32, #tpu.memory_space<vmem>>, %arg7: memref<512x4xf32, #tpu.memory_space<vmem>>) attributes {dimension_semantics = [#tpu.dimension_semantics<parallel>], iteration_bounds = array<i64: 2>, scalar_prefetch = 0 : i64, scratch_operands = 0 : i64, tpu.core_type = #tpu.core_type<tc>, window_params = [{transform_indices = @transform_0, window_bounds = array<i64: 512, 128>}, {transform_indices = @transform_1, window_bounds = array<i64: 512, 128>}, {pipeline_mode = #tpu.pipeline_mode<synchronous>, transform_indices = @transform_2, window_bounds = array<i64: 4, 128, 128>}, {pipeline_mode = #tpu.pipeline_mode<synchronous>, transform_indices = @transform_3, window_bounds = array<i64: 4, 1, 128>}, {pipeline_mode = #tpu.pipeline_mode<synchronous>, transform_indices = @transform_4, window_bounds = array<i64: 128, 4>}, {pipeline_mode = #tpu.pipeline_mode<synchronous>, transform_indices = @transform_5, window_bounds = array<i64: 1, 4>}, {transform_indices = @transform_6, window_bounds = array<i64: 512, 4>}]} {
    %c0 = arith.constant 0 : index
    %c0_0 = arith.constant 0 : index
    %0 = vector.load %arg1[%c0, %c0_0] : memref<512x128xbf16, #tpu.memory_space<vmem>>, vector<512x128xbf16>
    %c0_1 = arith.constant 0 : index
    %c0_2 = arith.constant 0 : index
    %1 = vector.load %arg2[%c0_1, %c0_2] : memref<512x128xbf16, #tpu.memory_space<vmem>>, vector<512x128xbf16>
    %2 = arith.extf %1 : vector<512x128xbf16> to vector<512x128xf32>
    %c0_3 = arith.constant 0 : index
    %c0_4 = arith.constant 0 : index
    %c0_5 = arith.constant 0 : index
    %3 = vector.load %arg3[%c0_3, %c0_4, %c0_5] : memref<4x128x128xbf16, #tpu.memory_space<vmem>>, vector<1x128x128xbf16>
    %4 = vector.shape_cast %3 : vector<1x128x128xbf16> to vector<128x128xbf16>
    %cst = arith.constant dense<0.000000e+00> : vector<512x128xf32>
    %5 = tpu.matmul %0, %4, %cst {dimension_numbers = #tpu.dot_dimension_numbers<[1], [0], [0], [1], [0, 0, 1, 1], [], []>} : vector<512x128xbf16>, vector<128x128xbf16>, vector<512x128xf32> -> vector<512x128xf32>
    %c0_6 = arith.constant 0 : index
    %c0_7 = arith.constant 0 : index
    %c0_8 = arith.constant 0 : index
    %6 = vector.load %arg4[%c0_6, %c0_7, %c0_8] : memref<4x1x128xf32, #tpu.memory_space<vmem>>, vector<1x1x128xf32>
    %7 = vector.shape_cast %6 : vector<1x1x128xf32> to vector<1x128xf32>
    %8 = vector.broadcast %7 : vector<1x128xf32> to vector<512x128xf32>
    %9 = arith.addf %5, %8 : vector<512x128xf32>
    %cst_9 = arith.constant 0.000000e+00 : f32
    %10 = vector.broadcast %cst_9 : f32 to vector<512x128xf32>
    %11 = arith.maximumf %9, %10 : vector<512x128xf32>
    %12 = arith.mulf %11, %2 : vector<512x128xf32>
    %13 = arith.truncf %12 : vector<512x128xf32> to vector<512x128xbf16>
    %c1 = arith.constant 1 : index
    %c0_10 = arith.constant 0 : index
    %c0_11 = arith.constant 0 : index
    %14 = vector.load %arg3[%c1, %c0_10, %c0_11] : memref<4x128x128xbf16, #tpu.memory_space<vmem>>, vector<1x128x128xbf16>
    %15 = vector.shape_cast %14 : vector<1x128x128xbf16> to vector<128x128xbf16>
    %cst_12 = arith.constant dense<0.000000e+00> : vector<512x128xf32>
    %16 = tpu.matmul %13, %15, %cst_12 {dimension_numbers = #tpu.dot_dimension_numbers<[1], [0], [0], [1], [0, 0, 1, 1], [], []>} : vector<512x128xbf16>, vector<128x128xbf16>, vector<512x128xf32> -> vector<512x128xf32>
    %c1_13 = arith.constant 1 : index
    %c0_14 = arith.constant 0 : index
    %c0_15 = arith.constant 0 : index
    %17 = vector.load %arg4[%c1_13, %c0_14, %c0_15] : memref<4x1x128xf32, #tpu.memory_space<vmem>>, vector<1x1x128xf32>
    %18 = vector.shape_cast %17 : vector<1x1x128xf32> to vector<1x128xf32>
    %19 = vector.broadcast %18 : vector<1x128xf32> to vector<512x128xf32>
    %20 = arith.addf %16, %19 : vector<512x128xf32>
    %cst_16 = arith.constant 0.000000e+00 : f32
    %21 = vector.broadcast %cst_16 : f32 to vector<512x128xf32>
    %22 = arith.maximumf %20, %21 : vector<512x128xf32>
    %23 = arith.mulf %22, %2 : vector<512x128xf32>
    %24 = arith.truncf %23 : vector<512x128xf32> to vector<512x128xbf16>
    %c2 = arith.constant 2 : index
    %c0_17 = arith.constant 0 : index
    %c0_18 = arith.constant 0 : index
    %25 = vector.load %arg3[%c2, %c0_17, %c0_18] : memref<4x128x128xbf16, #tpu.memory_space<vmem>>, vector<1x128x128xbf16>
    %26 = vector.shape_cast %25 : vector<1x128x128xbf16> to vector<128x128xbf16>
    %cst_19 = arith.constant dense<0.000000e+00> : vector<512x128xf32>
    %27 = tpu.matmul %24, %26, %cst_19 {dimension_numbers = #tpu.dot_dimension_numbers<[1], [0], [0], [1], [0, 0, 1, 1], [], []>} : vector<512x128xbf16>, vector<128x128xbf16>, vector<512x128xf32> -> vector<512x128xf32>
    %c2_20 = arith.constant 2 : index
    %c0_21 = arith.constant 0 : index
    %c0_22 = arith.constant 0 : index
    %28 = vector.load %arg4[%c2_20, %c0_21, %c0_22] : memref<4x1x128xf32, #tpu.memory_space<vmem>>, vector<1x1x128xf32>
    %29 = vector.shape_cast %28 : vector<1x1x128xf32> to vector<1x128xf32>
    %30 = vector.broadcast %29 : vector<1x128xf32> to vector<512x128xf32>
    %31 = arith.addf %27, %30 : vector<512x128xf32>
    %cst_23 = arith.constant 0.000000e+00 : f32
    %32 = vector.broadcast %cst_23 : f32 to vector<512x128xf32>
    %33 = arith.maximumf %31, %32 : vector<512x128xf32>
    %34 = arith.mulf %33, %2 : vector<512x128xf32>
    %35 = arith.truncf %34 : vector<512x128xf32> to vector<512x128xbf16>
    %c3 = arith.constant 3 : index
    %c0_24 = arith.constant 0 : index
    %c0_25 = arith.constant 0 : index
    %36 = vector.load %arg3[%c3, %c0_24, %c0_25] : memref<4x128x128xbf16, #tpu.memory_space<vmem>>, vector<1x128x128xbf16>
    %37 = vector.shape_cast %36 : vector<1x128x128xbf16> to vector<128x128xbf16>
    %cst_26 = arith.constant dense<0.000000e+00> : vector<512x128xf32>
    %38 = tpu.matmul %35, %37, %cst_26 {dimension_numbers = #tpu.dot_dimension_numbers<[1], [0], [0], [1], [0, 0, 1, 1], [], []>} : vector<512x128xbf16>, vector<128x128xbf16>, vector<512x128xf32> -> vector<512x128xf32>
    %c3_27 = arith.constant 3 : index
    %c0_28 = arith.constant 0 : index
    %c0_29 = arith.constant 0 : index
    %39 = vector.load %arg4[%c3_27, %c0_28, %c0_29] : memref<4x1x128xf32, #tpu.memory_space<vmem>>, vector<1x1x128xf32>
    %40 = vector.shape_cast %39 : vector<1x1x128xf32> to vector<1x128xf32>
    %41 = vector.broadcast %40 : vector<1x128xf32> to vector<512x128xf32>
    %42 = arith.addf %38, %41 : vector<512x128xf32>
    %cst_30 = arith.constant 0.000000e+00 : f32
    %43 = vector.broadcast %cst_30 : f32 to vector<512x128xf32>
    %44 = arith.maximumf %42, %43 : vector<512x128xf32>
    %45 = arith.mulf %44, %2 : vector<512x128xf32>
    %46 = arith.truncf %45 : vector<512x128xf32> to vector<512x128xbf16>
    %c0_31 = arith.constant 0 : index
    %c0_32 = arith.constant 0 : index
    %47 = vector.load %arg5[%c0_31, %c0_32] : memref<128x4xbf16, #tpu.memory_space<vmem>>, vector<128x4xbf16>
    %cst_33 = arith.constant dense<0.000000e+00> : vector<512x4xf32>
    %48 = tpu.matmul %46, %47, %cst_33 {dimension_numbers = #tpu.dot_dimension_numbers<[1], [0], [0], [1], [0, 0, 1, 1], [], []>} : vector<512x128xbf16>, vector<128x4xbf16>, vector<512x4xf32> -> vector<512x4xf32>
    %c0_34 = arith.constant 0 : index
    %c0_35 = arith.constant 0 : index
    %49 = vector.load %arg6[%c0_34, %c0_35] : memref<1x4xf32, #tpu.memory_space<vmem>>, vector<1x4xf32>
    %50 = vector.broadcast %49 : vector<1x4xf32> to vector<512x4xf32>
    %51 = arith.addf %48, %50 : vector<512x4xf32>
    %c0_36 = arith.constant 0 : index
    %c0_37 = arith.constant 0 : index
    %52 = vector.load %arg7[%c0_36, %c0_37] : memref<512x4xf32, #tpu.memory_space<vmem>>, vector<512x4xf32>
    tpu.vector_store %arg7[%c0_36, %c0_37], %51 {strides = array<i32>} : memref<512x4xf32, #tpu.memory_space<vmem>>, vector<512x4xf32>,
    return
  }
  func.func @transform_0(%arg0: i32) -> (i32, i32) {
    %c0_i32 = arith.constant 0 : i32
    %c0_i32_0 = arith.constant 0 : i32
    return %arg0, %c0_i32 : i32, i32
  }
  func.func @transform_1(%arg0: i32) -> (i32, i32) {
    %c0_i32 = arith.constant 0 : i32
    %c0_i32_0 = arith.constant 0 : i32
    return %arg0, %c0_i32 : i32, i32
  }
  func.func @transform_2(%arg0: i32) -> (i32, i32, i32) {
    %c0_i32 = arith.constant 0 : i32
    %c0_i32_0 = arith.constant 0 : i32
    %c0_i32_1 = arith.constant 0 : i32
    %c0_i32_2 = arith.constant 0 : i32
    return %c0_i32, %c0_i32_0, %c0_i32_1 : i32, i32, i32
  }
  func.func @transform_3(%arg0: i32) -> (i32, i32, i32) {
    %c0_i32 = arith.constant 0 : i32
    %c0_i32_0 = arith.constant 0 : i32
    %c0_i32_1 = arith.constant 0 : i32
    %c0_i32_2 = arith.constant 0 : i32
    return %c0_i32, %c0_i32_0, %c0_i32_1 : i32, i32, i32
  }
  func.func @transform_4(%arg0: i32) -> (i32, i32) {
    %c0_i32 = arith.constant 0 : i32
    %c0_i32_0 = arith.constant 0 : i32
    %c0_i32_1 = arith.constant 0 : i32
    return %c0_i32, %c0_i32_0 : i32, i32
  }
  func.func @transform_5(%arg0: i32) -> (i32, i32) {
    %c0_i32 = arith.constant 0 : i32
    %c0_i32_0 = arith.constant 0 : i32
    %c0_i32_1 = arith.constant 0 : i32
    return %c0_i32, %c0_i32_0 : i32, i32
  }
  func.func @transform_6(%arg0: i32) -> (i32, i32) {
    %c0_i32 = arith.constant 0 : i32
    %c0_i32_0 = arith.constant 0 : i32
    return %arg0, %c0_i32 : i32, i32
  }
}

</mosaic_0001>

<llo_original>
// kernel: time_transformer_forward.1
$region0: #{time_transformer_forward.1}
  #allocation0 [shape = 'u32[]', space=smem, size = 0x4, offset = 0x4, fixed_abs, tag = 'smem constant byte address 0x4 - core index']
  #allocation1 [shape = 'u32[144,128]{1,0:T(1,128)}', space=vmem, size = 0x12000, scoped, tag = 'internal scratch']
  %s0 = inlined_call_operand.vmem [shape: bf16[1024,128], index: 0, kind: input, shape index: {}]
  %s1 = inlined_call_operand.vmem [shape: bf16[1024,128], index: 1, kind: input, shape index: {}]
  %s2 = inlined_call_operand.vmem [shape: bf16[4,128,128], index: 2, kind: input, shape index: {}]
  %s3 = inlined_call_operand.vmem [shape: f32[4,1,128], index: 3, kind: input, shape index: {}]
  %s4 = inlined_call_operand.vmem [shape: bf16[128,4], index: 4, kind: input, shape index: {}]
  %s5 = inlined_call_operand.vmem [shape: f32[1,4], index: 5, kind: input, shape index: {}]
  %s6 = inlined_call_operand.vmem [shape: f32[1024,4], index: 6, kind: output, shape index: {}]
  %s7 = sld [smem:[#allocation0]]
  $region57: #{time_transformer_forward.1} parent=0
    _
  %s9 = ssub.s32 1, %s7
  %s10 = scalar_select 0, %s9, %s7
  loop: start=0, step=1, limit=4
  $region2: #{time_transformer_forward.1} parent=0 // loop_pre_header
    _
  $region3: #{time_transformer_forward.1} parent=0 // loop_header
    %s12 = sphi 0, %s16
    %p13 = scmp.ge.s32.totalorder %s12, 4
    %s22 = sphi 0, %s24
    %s25 = sphi 0, %s22
    %s26 = sphi 0, %s25
    %s42 = sphi 0, %s26
    %s48 = sphi 0, %s50
    %s51 = sphi 0, %s48
    %s52 = sphi 0, %s51
    %s68 = sphi 0, %s52
    %s72 = sphi 0, %s72
    %s74 = sphi 0, %s72
    %s75 = sphi 0, %s74
    %s89 = sphi 0, %s75
    %s93 = sphi 0, %s93
    %s95 = sphi 0, %s93
    %s96 = sphi 0, %s95
    %s110 = sphi 0, %s96
    %s114 = sphi 0, %s114
    %s116 = sphi 0, %s114
    %s117 = sphi 0, %s116
    %s131 = sphi 0, %s117
    %s135 = sphi 0, %s135
    %s137 = sphi 0, %s135
    %s138 = sphi 0, %s137
    %s152 = sphi 0, %s138
    %s158 = sphi 0, %s160
    %s161 = sphi 0, %s158
    %s162 = sphi 0, %s161
    %s178 = sphi 0, %s162
  $region4: #{time_transformer_forward.1} parent=0 // loop_header_branch
    %15 = sbr.rel (%p13) target = $region8
  $region5: #{time_transformer_forward.1} parent=0 // loop_body
    %s17 = ssub.s32 %s12, 1
    %s18 = ssub.s32 %s12, 2
    %s19 = sadd.s32 %s12, 1
    %s20 = ssub.s32 %s12, %s19
    %p21 = scmp.eq.s32.totalorder %s20, 0
    %s23 = sadd.s32 %s22, 1
    %s24 = scalar_select %p21, %s22, %s23
    %p27 = pneg %p21
    %p28 = scmp.eq.s32.totalorder %s12, 1
    %p29 = por %p27, %p28
    %p30 = scmp.ne.s32.totalorder %s22, %s25
    %p31 = scmp.eq.s32.totalorder %s12, 0
    %p32 = por %p30, %p31
    %p33 = scmp.ne.s32.totalorder %s22, %s25
    %p34 = scmp.eq.s32.totalorder %s17, 1
    %p35 = por %p33, %p34
    %p36 = scmp.ne.s32.totalorder %s25, %s26
    %p37 = scmp.eq.s32.totalorder %s17, 0
    %p38 = por %p36, %p37
    %p39 = scmp.ne.s32.totalorder %s25, %s26
    %p40 = scmp.eq.s32.totalorder %s18, 1
    %p41 = por %p39, %p40
    %p43 = scmp.ne.s32.totalorder %s26, %s42
    %p44 = scmp.eq.s32.totalorder %s18, 0
    %p45 = por %p43, %p44
    %s46 = ssub.s32 %s12, %s19
    %p47 = scmp.eq.s32.totalorder %s46, 0
    %s49 = sadd.s32 %s48, 1
    %s50 = scalar_select %p47, %s48, %s49
    %p53 = pneg %p47
    %p54 = scmp.eq.s32.totalorder %s12, 1
    %p55 = por %p53, %p54
    %p56 = scmp.ne.s32.totalorder %s48, %s51
    %p57 = scmp.eq.s32.totalorder %s12, 0
    %p58 = por %p56, %p57
    %p59 = scmp.ne.s32.totalorder %s48, %s51
    %p60 = scmp.eq.s32.totalorder %s17, 1
    %p61 = por %p59, %p60
    %p62 = scmp.ne.s32.totalorder %s51, %s52
    %p63 = scmp.eq.s32.totalorder %s17, 0
    %p64 = por %p62, %p63
    %p65 = scmp.ne.s32.totalorder %s51, %s52
    %p66 = scmp.eq.s32.totalorder %s18, 1
    %p67 = por %p65, %p66
    %p69 = scmp.ne.s32.totalorder %s52, %s68
    %p70 = scmp.eq.s32.totalorder %s18, 0
    %p71 = por %p69, %p70
    %s73 = sadd.s32 %s72, 1
    %p76 = scmp.eq.s32.totalorder %s12, 1
    %p77 = scmp.ne.s32.totalorder %s72, %s74
    %p78 = scmp.eq.s32.totalorder %s12, 0
    %p79 = por %p77, %p78
    %p80 = scmp.ne.s32.totalorder %s72, %s74
    %p81 = scmp.eq.s32.totalorder %s17, 1
    %p82 = por %p80, %p81
    %p83 = scmp.ne.s32.totalorder %s74, %s75
    %p84 = scmp.eq.s32.totalorder %s17, 0
    %p85 = por %p83, %p84
    %p86 = scmp.ne.s32.totalorder %s74, %s75
    %p87 = scmp.eq.s32.totalorder %s18, 1
    %p88 = por %p86, %p87
    %p90 = scmp.ne.s32.totalorder %s75, %s89
    %p91 = scmp.eq.s32.totalorder %s18, 0
    %p92 = por %p90, %p91
    %s94 = sadd.s32 %s93, 1
    %p97 = scmp.eq.s32.totalorder %s12, 1
    %p98 = scmp.ne.s32.totalorder %s93, %s95
    %p99 = scmp.eq.s32.totalorder %s12, 0
    %p100 = por %p98, %p99
    %p101 = scmp.ne.s32.totalorder %s93, %s95
    %p102 = scmp.eq.s32.totalorder %s17, 1
    %p103 = por %p101, %p102
    %p104 = scmp.ne.s32.totalorder %s95, %s96
    %p105 = scmp.eq.s32.totalorder %s17, 0
    %p106 = por %p104, %p105
    %p107 = scmp.ne.s32.totalorder %s95, %s96
    %p108 = scmp.eq.s32.totalorder %s18, 1
    %p109 = por %p107, %p108
    %p111 = scmp.ne.s32.totalorder %s96, %s110
    %p112 = scmp.eq.s32.totalorder %s18, 0
    %p113 = por %p111, %p112
    %s115 = sadd.s32 %s114, 1
    %p118 = scmp.eq.s32.totalorder %s12, 1
    %p119 = scmp.ne.s32.totalorder %s114, %s116
    %p120 = scmp.eq.s32.totalorder %s12, 0
    %p121 = por %p119, %p120
    %p122 = scmp.ne.s32.totalorder %s114, %s116
    %p123 = scmp.eq.s32.totalorder %s17, 1
    %p124 = por %p122, %p123
    %p125 = scmp.ne.s32.totalorder %s116, %s117
    %p126 = scmp.eq.s32.totalorder %s17, 0
    %p127 = por %p125, %p126
    %p128 = scmp.ne.s32.totalorder %s116, %s117
    %p129 = scmp.eq.s32.totalorder %s18, 1
    %p130 = por %p128, %p129
    %p132 = scmp.ne.s32.totalorder %s117, %s131
    %p133 = scmp.eq.s32.totalorder %s18, 0
    %p134 = por %p132, %p133
    %s136 = sadd.s32 %s135, 1
    %p139 = scmp.eq.s32.totalorder %s12, 1
    %p140 = scmp.ne.s32.totalorder %s135, %s137
    %p141 = scmp.eq.s32.totalorder %s12, 0
    %p142 = por %p140, %p141
    %p143 = scmp.ne.s32.totalorder %s135, %s137
    %p144 = scmp.eq.s32.totalorder %s17, 1
    %p145 = por %p143, %p144
    %p146 = scmp.ne.s32.totalorder %s137, %s138
    %p147 = scmp.eq.s32.totalorder %s17, 0
    %p148 = por %p146, %p147
    %p149 = scmp.ne.s32.totalorder %s137, %s138
    %p150 = scmp.eq.s32.totalorder %s18, 1
    %p151 = por %p149, %p150
    %p153 = scmp.ne.s32.totalorder %s138, %s152
    %p154 = scmp.eq.s32.totalorder %s18, 0
    %p155 = por %p153, %p154
    %s156 = ssub.s32 %s12, %s19
    %p157 = scmp.eq.s32.totalorder %s156, 0
    %s159 = sadd.s32 %s158, 1
    %s160 = scalar_select %p157, %s158, %s159
    %p163 = pneg %p157
    %p164 = scmp.eq.s32.totalorder %s12, 1
    %p165 = por %p163, %p164
    %p166 = scmp.ne.s32.totalorder %s158, %s161
    %p167 = scmp.eq.s32.totalorder %s12, 0
    %p168 = por %p166, %p167
    %p169 = scmp.ne.s32.totalorder %s158, %s161
    %p170 = scmp.eq.s32.totalorder %s17, 1
    %p171 = por %p169, %p170
    %p172 = scmp.ne.s32.totalorder %s161, %s162
    %p173 = scmp.eq.s32.totalorder %s17, 0
    %p174 = por %p172, %p173
    %p175 = scmp.ne.s32.totalorder %s161, %s162
    %p176 = scmp.eq.s32.totalorder %s18, 1
    %p177 = por %p175, %p176
    %p179 = scmp.ne.s32.totalorder %s162, %s178
    %p180 = scmp.eq.s32.totalorder %s18, 0
    %p181 = por %p179, %p180
    %p182 = scmp.le.s32.totalorder 1, %s12
    %p183 = scmp.lt.s32.totalorder %s12, 3
    %p184 = pnand %p182, %p183
    %p185 = pneg %p184
    // Predicated region
    $region9: #{time_transformer_forward.1} parent=5 // pred_check
      _
    $region10: #{time_transformer_forward.1} parent=5 // pred_check_branch
      %187 = sbr.rel (%p184) target = $region12
    $region11: #{time_transformer_forward.1} parent=5 // pred_region
      %s188 = ssub.s32 %s12, 1
      // Predicated region
      $region13: #{time_transformer_forward.1} parent=11 // pred_check
        %p189 = pneg %p85
      $region14: #{time_transformer_forward.1} parent=11 // pred_check_branch
        %191 = sbr.rel (%p189) target = $region16
      $region15: #{time_transformer_forward.1} parent=11 // pred_region
        _
      $region16: #{time_transformer_forward.1} parent=11 // pred_fallthru
        _
      // Predicated region
      $region17: #{time_transformer_forward.1} parent=11 // pred_check
        %p192 = pneg %p106
      $region18: #{time_transformer_forward.1} parent=11 // pred_check_branch
        %194 = sbr.rel (%p192) target = $region20
      $region19: #{time_transformer_forward.1} parent=11 // pred_region
        _
      $region20: #{time_transformer_forward.1} parent=11 // pred_fallthru
        _
      // Predicated region
      $region21: #{time_transformer_forward.1} parent=11 // pred_check
        %p195 = pneg %p127
      $region22: #{time_transformer_forward.1} parent=11 // pred_check_branch
        %197 = sbr.rel (%p195) target = $region24
      $region23: #{time_transformer_forward.1} parent=11 // pred_region
        _
      $region24: #{time_transformer_forward.1} parent=11 // pred_fallthru
        _
      // Predicated region
      $region25: #{time_transformer_forward.1} parent=11 // pred_check
        %p198 = pneg %p148
      $region26: #{time_transformer_forward.1} parent=11 // pred_check_branch
        %200 = sbr.rel (%p198) target = $region28
      $region27: #{time_transformer_forward.1} parent=11 // pred_region
        _
      $region28: #{time_transformer_forward.1} parent=11 // pred_fallthru
        _
    $region12: #{time_transformer_forward.1} parent=5 // pred_fallthru
      _
    %p201 = scmp.lt.s32.totalorder %s12, 2
    // Predicated region
    $region29: #{time_transformer_forward.1} parent=5 // pred_check
      %p202 = pneg %p201
    $region30: #{time_transformer_forward.1} parent=5 // pred_check_branch
      %204 = sbr.rel (%p202) target = $region32
    $region31: #{time_transformer_forward.1} parent=5 // pred_region
      // Predicated region
      $region33: #{time_transformer_forward.1} parent=31 // pred_check
        %p205 = pneg %p32
      $region34: #{time_transformer_forward.1} parent=31 // pred_check_branch
        %207 = sbr.rel (%p205) target = $region36
      $region35: #{time_transformer_forward.1} parent=31 // pred_region
        %s208 = smul.u32 64, %s12
        %p209 = scmp.lt.s32.totalorder %s208, 127
        %s210 = scalar_select %p209, %s208, 127
        %s211 = smul.addr %s210, 4
        %s212 = scalar_lea.vmem %s0, %s211
        %s213 = smul.u32 64, %s12
      $region36: #{time_transformer_forward.1} parent=31 // pred_fallthru
        _
      // Predicated region
      $region37: #{time_transformer_forward.1} parent=31 // pred_check
        %p214 = pneg %p58
      $region38: #{time_transformer_forward.1} parent=31 // pred_check_branch
        %216 = sbr.rel (%p214) target = $region40
      $region39: #{time_transformer_forward.1} parent=31 // pred_region
        %s217 = smul.u32 64, %s12
        %p218 = scmp.lt.s32.totalorder %s217, 127
        %s219 = scalar_select %p218, %s217, 127
        %s220 = smul.addr %s219, 4
        %s221 = scalar_lea.vmem %s1, %s220
        %s222 = smul.u32 64, %s12
      $region40: #{time_transformer_forward.1} parent=31 // pred_fallthru
        _
    $region32: #{time_transformer_forward.1} parent=5 // pred_fallthru
      _
    %p223 = scmp.le.s32.totalorder 1, %s12
    %p224 = scmp.lt.s32.totalorder %s12, 3
    %p225 = pnand %p223, %p224
    %p226 = pneg %p225
    // Predicated region
    $region41: #{time_transformer_forward.1} parent=5 // pred_check
      _
    $region42: #{time_transformer_forward.1} parent=5 // pred_check_branch
      %228 = sbr.rel (%p225) target = $region44
    $region43: #{time_transformer_forward.1} parent=5 // pred_region
      %s229 = ssub.s32 %s12, 1
      %s230 = smul.u32 64, %s17
      %p231 = scmp.lt.s32.totalorder %s230, 127
      %s232 = scalar_select %p231, %s230, 127
      %s233 = smul.addr %s232, 4
      %s234 = scalar_lea.vmem %s0, %s233
      %p235 = pneg %p38
      %p236 = pneg %p35
      %s237 = smul.u32 64, %s17
      %p238 = scmp.lt.s32.totalorder %s237, 127
      %s239 = scalar_select %p238, %s237, 127
      %s240 = smul.addr %s239, 4
      %s241 = scalar_lea.vmem %s1, %s240
      %p242 = pneg %p64
      %p243 = pneg %p61
      %p244 = pneg %p85
      %p245 = pneg %p82
      %p246 = pneg %p106
      %p247 = pneg %p103
      %p248 = pneg %p127
      %p249 = pneg %p124
      %p250 = pneg %p148
      %p251 = pneg %p145
      %p252 = pneg %p174
      %p253 = pneg %p171
      %s254 = smul.u32 64, %s17
      %p255 = scmp.lt.s32.totalorder %s254, 127
      %s256 = scalar_select %p255, %s254, 127
      %s257 = smul.addr %s256, 8
      %s258 = scalar_lea.vmem %s6, %s257
      %s259 = smul.u32 64, %s17
      %p260 = scmp.lt.s32.totalorder %s259, 127
      %s261 = scalar_select %p260, %s259, 127
      %s262 = smul.addr %s261, 4
      %s263 = scalar_lea.vmem %s0, %s262
      %s264 = smul.u32 64, %s17
      %s265 = smul.u32 64, %s17
      %p266 = scmp.lt.s32.totalorder %s265, 127
      %s267 = scalar_select %p266, %s265, 127
      %s268 = smul.addr %s267, 4
      %s269 = scalar_lea.vmem %s1, %s268
      %s270 = smul.u32 64, %s17
      %s271 = smul.u32 64, %s17
      %p272 = scmp.lt.s32.totalorder %s271, 127
      %s273 = scalar_select %p272, %s271, 127
      %s274 = smul.addr %s273, 8
      %s275 = scalar_lea.vmem %s6, %s274
      %s276 = smul.u32 64, %s17
      %v278 = vld [vmem:[%s263] sm:$0xf]
      %v279 = vld [vmem:[%s263 + $0x4] sm:$0xf]
      %v280 = vld [vmem:[%s263 + $0x8] sm:$0xf]
      %v281 = vld [vmem:[%s263 + $0xc] sm:$0xf]
      %v282 = vld [vmem:[%s263 + $0x10] sm:$0xf]
      %v283 = vld [vmem:[%s263 + $0x14] sm:$0xf]
      %v284 = vld [vmem:[%s263 + $0x18] sm:$0xf]
      %v285 = vld [vmem:[%s263 + $0x1c] sm:$0xf]
      %v286 = vld [vmem:[%s263 + $0x20] sm:$0xf]
      %v287 = vld [vmem:[%s263 + $0x24] sm:$0xf]
      %v288 = vld [vmem:[%s263 + $0x28] sm:$0xf]
      %v289 = vld [vmem:[%s263 + $0x2c] sm:$0xf]
      %v290 = vld [vmem:[%s263 + $0x30] sm:$0xf]
      %v291 = vld [vmem:[%s263 + $0x34] sm:$0xf]
      %v292 = vld [vmem:[%s263 + $0x38] sm:$0xf]
      %v293 = vld [vmem:[%s263 + $0x3c] sm:$0xf]
      %v294 = vld [vmem:[%s263 + $0x40] sm:$0xf]
      %v295 = vld [vmem:[%s263 + $0x44] sm:$0xf]
      %v296 = vld [vmem:[%s263 + $0x48] sm:$0xf]
      %v297 = vld [vmem:[%s263 + $0x4c] sm:$0xf]
      %v298 = vld [vmem:[%s263 + $0x50] sm:$0xf]
      %v299 = vld [vmem:[%s263 + $0x54] sm:$0xf]
      %v300 = vld [vmem:[%s263 + $0x58] sm:$0xf]
      %v301 = vld [vmem:[%s263 + $0x5c] sm:$0xf]
      %v302 = vld [vmem:[%s263 + $0x60] sm:$0xf]
      %v303 = vld [vmem:[%s263 + $0x64] sm:$0xf]
      %v304 = vld [vmem:[%s263 + $0x68] sm:$0xf]
      %v305 = vld [vmem:[%s263 + $0x6c] sm:$0xf]
      %v306 = vld [vmem:[%s263 + $0x70] sm:$0xf]
      %v307 = vld [vmem:[%s263 + $0x74] sm:$0xf]
      %v308 = vld [vmem:[%s263 + $0x78] sm:$0xf]
      %v309 = vld [vmem:[%s263 + $0x7c] sm:$0xf]
      %v310 = vld [vmem:[%s263 + $0x80] sm:$0xf]
      %v311 = vld [vmem:[%s263 + $0x84] sm:$0xf]
      %v312 = vld [vmem:[%s263 + $0x88] sm:$0xf]
      %v313 = vld [vmem:[%s263 + $0x8c] sm:$0xf]
      %v314 = vld [vmem:[%s263 + $0x90] sm:$0xf]
      %v315 = vld [vmem:[%s263 + $0x94] sm:$0xf]
      %v316 = vld [vmem:[%s263 + $0x98] sm:$0xf]
      %v317 = vld [vmem:[%s263 + $0x9c] sm:$0xf]
      %v318 = vld [vmem:[%s263 + $0xa0] sm:$0xf]
      %v319 = vld [vmem:[%s263 + $0xa4] sm:$0xf]
      %v320 = vld [vmem:[%s263 + $0xa8] sm:$0xf]
      %v321 = vld [vmem:[%s263 + $0xac] sm:$0xf]
      %v322 = vld [vmem:[%s263 + $0xb0] sm:$0xf]
      %v323 = vld [vmem:[%s263 + $0xb4] sm:$0xf]
      %v324 = vld [vmem:[%s263 + $0xb8] sm:$0xf]
      %v325 = vld [vmem:[%s263 + $0xbc] sm:$0xf]
      %v326 = vld [vmem:[%s263 + $0xc0] sm:$0xf]
      %v327 = vld [vmem:[%s263 + $0xc4] sm:$0xf]
      %v328 = vld [vmem:[%s263 + $0xc8] sm:$0xf]
      %v329 = vld [vmem:[%s263 + $0xcc] sm:$0xf]
      %v330 = vld [vmem:[%s263 + $0xd0] sm:$0xf]
      %v331 = vld [vmem:[%s263 + $0xd4] sm:$0xf]
      %v332 = vld [vmem:[%s263 + $0xd8] sm:$0xf]
      %v333 = vld [vmem:[%s263 + $0xdc] sm:$0xf]
      %v334 = vld [vmem:[%s263 + $0xe0] sm:$0xf]
      %v335 = vld [vmem:[%s263 + $0xe4] sm:$0xf]
      %v336 = vld [vmem:[%s263 + $0xe8] sm:$0xf]
      %v337 = vld [vmem:[%s263 + $0xec] sm:$0xf]
      %v338 = vld [vmem:[%s263 + $0xf0] sm:$0xf]
      %v339 = vld [vmem:[%s263 + $0xf4] sm:$0xf]
      %v340 = vld [vmem:[%s263 + $0xf8] sm:$0xf]
      %v341 = vld [vmem:[%s263 + $0xfc] sm:$0xf]
      %v342 = vld [vmem:[%s269] sm:$0xf]
      %v343 = vld [vmem:[%s269 + $0x4] sm:$0xf]
      %v344 = vld [vmem:[%s269 + $0x8] sm:$0xf]
      %v345 = vld [vmem:[%s269 + $0xc] sm:$0xf]
      %v346 = vld [vmem:[%s269 + $0x10] sm:$0xf]
      %v347 = vld [vmem:[%s269 + $0x14] sm:$0xf]
      %v348 = vld [vmem:[%s269 + $0x18] sm:$0xf]
      %v349 = vld [vmem:[%s269 + $0x1c] sm:$0xf]
      %v350 = vld [vmem:[%s269 + $0x20] sm:$0xf]
      %v351 = vld [vmem:[%s269 + $0x24] sm:$0xf]
      %v352 = vld [vmem:[%s269 + $0x28] sm:$0xf]
      %v353 = vld [vmem:[%s269 + $0x2c] sm:$0xf]
      %v354 = vld [vmem:[%s269 + $0x30] sm:$0xf]
      %v355 = vld [vmem:[%s269 + $0x34] sm:$0xf]
      %v356 = vld [vmem:[%s269 + $0x38] sm:$0xf]
      %v357 = vld [vmem:[%s269 + $0x3c] sm:$0xf]
      %v358 = vld [vmem:[%s269 + $0x40] sm:$0xf]
      %v359 = vld [vmem:[%s269 + $0x44] sm:$0xf]
      %v360 = vld [vmem:[%s269 + $0x48] sm:$0xf]
      %v361 = vld [vmem:[%s269 + $0x4c] sm:$0xf]
      %v362 = vld [vmem:[%s269 + $0x50] sm:$0xf]
      %v363 = vld [vmem:[%s269 + $0x54] sm:$0xf]
      %v364 = vld [vmem:[%s269 + $0x58] sm:$0xf]
      %v365 = vld [vmem:[%s269 + $0x5c] sm:$0xf]
      %v366 = vld [vmem:[%s269 + $0x60] sm:$0xf]
      %v367 = vld [vmem:[%s269 + $0x64] sm:$0xf]
      %v368 = vld [vmem:[%s269 + $0x68] sm:$0xf]
      %v369 = vld [vmem:[%s269 + $0x6c] sm:$0xf]
      %v370 = vld [vmem:[%s269 + $0x70] sm:$0xf]
      %v371 = vld [vmem:[%s269 + $0x74] sm:$0xf]
      %v372 = vld [vmem:[%s269 + $0x78] sm:$0xf]
      %v373 = vld [vmem:[%s269 + $0x7c] sm:$0xf]
      %v374 = vld [vmem:[%s269 + $0x80] sm:$0xf]
      %v375 = vld [vmem:[%s269 + $0x84] sm:$0xf]
      %v376 = vld [vmem:[%s269 + $0x88] sm:$0xf]
      %v377 = vld [vmem:[%s269 + $0x8c] sm:$0xf]
      %v378 = vld [vmem:[%s269 + $0x90] sm:$0xf]
      %v379 = vld [vmem:[%s269 + $0x94] sm:$0xf]
      %v380 = vld [vmem:[%s269 + $0x98] sm:$0xf]
      %v381 = vld [vmem:[%s269 + $0x9c] sm:$0xf]
      %v382 = vld [vmem:[%s269 + $0xa0] sm:$0xf]
      %v383 = vld [vmem:[%s269 + $0xa4] sm:$0xf]
      %v384 = vld [vmem:[%s269 + $0xa8] sm:$0xf]
      %v385 = vld [vmem:[%s269 + $0xac] sm:$0xf]
      %v386 = vld [vmem:[%s269 + $0xb0] sm:$0xf]
      %v387 = vld [vmem:[%s269 + $0xb4] sm:$0xf]
      %v388 = vld [vmem:[%s269 + $0xb8] sm:$0xf]
      %v389 = vld [vmem:[%s269 + $0xbc] sm:$0xf]
      %v390 = vld [vmem:[%s269 + $0xc0] sm:$0xf]
      %v391 = vld [vmem:[%s269 + $0xc4] sm:$0xf]
      %v392 = vld [vmem:[%s269 + $0xc8] sm:$0xf]
      %v393 = vld [vmem:[%s269 + $0xcc] sm:$0xf]
      %v394 = vld [vmem:[%s269 + $0xd0] sm:$0xf]
      %v395 = vld [vmem:[%s269 + $0xd4] sm:$0xf]
      %v396 = vld [vmem:[%s269 + $0xd8] sm:$0xf]
      %v397 = vld [vmem:[%s269 + $0xdc] sm:$0xf]
      %v398 = vld [vmem:[%s269 + $0xe0] sm:$0xf]
      %v399 = vld [vmem:[%s269 + $0xe4] sm:$0xf]
      %v400 = vld [vmem:[%s269 + $0xe8] sm:$0xf]
      %v401 = vld [vmem:[%s269 + $0xec] sm:$0xf]
      %v402 = vld [vmem:[%s269 + $0xf0] sm:$0xf]
      %v403 = vld [vmem:[%s269 + $0xf4] sm:$0xf]
      %v404 = vld [vmem:[%s269 + $0xf8] sm:$0xf]
      %v405 = vld [vmem:[%s269 + $0xfc] sm:$0xf]
      %v406 = vunpack.c.l.bf16 %v342
      %v407 = vunpack.c.l.bf16 %v343
      %v408 = vunpack.c.l.bf16 %v344
      %v409 = vunpack.c.l.bf16 %v345
      %v410 = vunpack.c.l.bf16 %v346
      %v411 = vunpack.c.l.bf16 %v347
      %v412 = vunpack.c.l.bf16 %v348
      %v413 = vunpack.c.l.bf16 %v349
      %v414 = vunpack.c.l.bf16 %v350
      %v415 = vunpack.c.l.bf16 %v351
      %v416 = vunpack.c.l.bf16 %v352
      %v417 = vunpack.c.l.bf16 %v353
      %v418 = vunpack.c.l.bf16 %v354
      %v419 = vunpack.c.l.bf16 %v355
      %v420 = vunpack.c.l.bf16 %v356
      %v421 = vunpack.c.l.bf16 %v357
      %v422 = vunpack.c.l.bf16 %v358
      %v423 = vunpack.c.l.bf16 %v359
      %v424 = vunpack.c.l.bf16 %v360
      %v425 = vunpack.c.l.bf16 %v361
      %v426 = vunpack.c.l.bf16 %v362
      %v427 = vunpack.c.l.bf16 %v363
      %v428 = vunpack.c.l.bf16 %v364
      %v429 = vunpack.c.l.bf16 %v365
      %v430 = vunpack.c.l.bf16 %v366
      %v431 = vunpack.c.l.bf16 %v367
      %v432 = vunpack.c.l.bf16 %v368
      %v433 = vunpack.c.l.bf16 %v369
      %v434 = vunpack.c.l.bf16 %v370
      %v435 = vunpack.c.l.bf16 %v371
      %v436 = vunpack.c.l.bf16 %v372
      %v437 = vunpack.c.l.bf16 %v373
      %v438 = vunpack.c.l.bf16 %v374
      %v439 = vunpack.c.l.bf16 %v375
      %v440 = vunpack.c.l.bf16 %v376
      %v441 = vunpack.c.l.bf16 %v377
      %v442 = vunpack.c.l.bf16 %v378
      %v443 = vunpack.c.l.bf16 %v379
      %v444 = vunpack.c.l.bf16 %v380
      %v445 = vunpack.c.l.bf16 %v381
      %v446 = vunpack.c.l.bf16 %v382
      %v447 = vunpack.c.l.bf16 %v383
      %v448 = vunpack.c.l.bf16 %v384
      %v449 = vunpack.c.l.bf16 %v385
      %v450 = vunpack.c.l.bf16 %v386
      %v451 = vunpack.c.l.bf16 %v387
      %v452 = vunpack.c.l.bf16 %v388
      %v453 = vunpack.c.l.bf16 %v389
      %v454 = vunpack.c.l.bf16 %v390
      %v455 = vunpack.c.l.bf16 %v391
      %v456 = vunpack.c.l.bf16 %v392
      %v457 = vunpack.c.l.bf16 %v393
      %v458 = vunpack.c.l.bf16 %v394
      %v459 = vunpack.c.l.bf16 %v395
      %v460 = vunpack.c.l.bf16 %v396
      %v461 = vunpack.c.l.bf16 %v397
      %v462 = vunpack.c.l.bf16 %v398
      %v463 = vunpack.c.l.bf16 %v399
      %v464 = vunpack.c.l.bf16 %v400
      %v465 = vunpack.c.l.bf16 %v401
      %v466 = vunpack.c.l.bf16 %v402
      %v467 = vunpack.c.l.bf16 %v403
      %v468 = vunpack.c.l.bf16 %v404
      %v469 = vunpack.c.l.bf16 %v405
      %v470 = vld [vmem:[%s2] sm:$0xf]
      %v471 = vld [vmem:[%s2 + $0x4] sm:$0xf]
      %v472 = vld [vmem:[%s2 + $0x8] sm:$0xf]
      %v473 = vld [vmem:[%s2 + $0xc] sm:$0xf]
      %v474 = vld [vmem:[%s2 + $0x10] sm:$0xf]
      %v475 = vld [vmem:[%s2 + $0x14] sm:$0xf]
      %v476 = vld [vmem:[%s2 + $0x18] sm:$0xf]
      %v477 = vld [vmem:[%s2 + $0x1c] sm:$0xf]
      %v478 = vld [vmem:[%s2 + $0x20] sm:$0xf]
      %v479 = vld [vmem:[%s2 + $0x24] sm:$0xf]
      %v480 = vld [vmem:[%s2 + $0x28] sm:$0xf]
      %v481 = vld [vmem:[%s2 + $0x2c] sm:$0xf]
      %v482 = vld [vmem:[%s2 + $0x30] sm:$0xf]
      %v483 = vld [vmem:[%s2 + $0x34] sm:$0xf]
      %v484 = vld [vmem:[%s2 + $0x38] sm:$0xf]
      %v485 = vld [vmem:[%s2 + $0x3c] sm:$0xf]
      %v486 = vld [vmem:[%s3] sm:$0x1]
      %v488 = vlaneseq
      %v489 = vshrl.u32 %v488, 7
      %v490 = vsub.s32 0, %v489
      %v491 = vrot.slane %v486, %v490
      %v557 = vunpack.c.l.b16 %v278
      %v558 = vunpack.c.l.b16 %v279
      %v559 = vunpack.c.l.b16 %v280
      %v560 = vunpack.c.l.b16 %v281
      %v561 = vunpack.c.l.b16 %v282
      %v562 = vunpack.c.l.b16 %v283
      %v563 = vunpack.c.l.b16 %v284
      %v564 = vunpack.c.l.b16 %v285
      %v565 = vunpack.c.l.b16 %v286
      %v566 = vunpack.c.l.b16 %v287
      %v567 = vunpack.c.l.b16 %v288
      %v568 = vunpack.c.l.b16 %v289
      %v569 = vunpack.c.l.b16 %v290
      %v570 = vunpack.c.l.b16 %v291
      %v571 = vunpack.c.l.b16 %v292
      %v572 = vunpack.c.l.b16 %v293
      %v573 = vunpack.c.l.b16 %v294
      %v574 = vunpack.c.l.b16 %v295
      %v575 = vunpack.c.l.b16 %v296
      %v576 = vunpack.c.l.b16 %v297
      %v577 = vunpack.c.l.b16 %v298
      %v578 = vunpack.c.l.b16 %v299
      %v579 = vunpack.c.l.b16 %v300
      %v580 = vunpack.c.l.b16 %v301
      %v581 = vunpack.c.l.b16 %v302
      %v582 = vunpack.c.l.b16 %v303
      %v583 = vunpack.c.l.b16 %v304
      %v584 = vunpack.c.l.b16 %v305
      %v585 = vunpack.c.l.b16 %v306
      %v586 = vunpack.c.l.b16 %v307
      %v587 = vunpack.c.l.b16 %v308
      %v588 = vunpack.c.l.b16 %v309
      %v589 = vunpack.c.l.b16 %v310
      %v590 = vunpack.c.l.b16 %v311
      %v591 = vunpack.c.l.b16 %v312
      %v592 = vunpack.c.l.b16 %v313
      %v593 = vunpack.c.l.b16 %v314
      %v594 = vunpack.c.l.b16 %v315
      %v595 = vunpack.c.l.b16 %v316
      %v596 = vunpack.c.l.b16 %v317
      %v597 = vunpack.c.l.b16 %v318
      %v598 = vunpack.c.l.b16 %v319
      %v599 = vunpack.c.l.b16 %v320
      %v600 = vunpack.c.l.b16 %v321
      %v601 = vunpack.c.l.b16 %v322
      %v602 = vunpack.c.l.b16 %v323
      %v603 = vunpack.c.l.b16 %v324
      %v604 = vunpack.c.l.b16 %v325
      %v605 = vunpack.c.l.b16 %v326
      %v606 = vunpack.c.l.b16 %v327
      %v607 = vunpack.c.l.b16 %v328
      %v608 = vunpack.c.l.b16 %v329
      %v609 = vunpack.c.l.b16 %v330
      %v610 = vunpack.c.l.b16 %v331
      %v611 = vunpack.c.l.b16 %v332
      %v612 = vunpack.c.l.b16 %v333
      %v613 = vunpack.c.l.b16 %v334
      %v614 = vunpack.c.l.b16 %v335
      %v615 = vunpack.c.l.b16 %v336
      %v616 = vunpack.c.l.b16 %v337
      %v617 = vunpack.c.l.b16 %v338
      %v618 = vunpack.c.l.b16 %v339
      %v619 = vunpack.c.l.b16 %v340
      %v620 = vunpack.c.l.b16 %v341
      %v621 = vpack.c.b16 %v558, %v557
      %v622 = vpack.c.b16 %v560, %v559
      %v623 = vpack.c.b16 %v562, %v561
      %v624 = vpack.c.b16 %v564, %v563
      %v625 = vpack.c.b16 %v566, %v565
      %v626 = vpack.c.b16 %v568, %v567
      %v627 = vpack.c.b16 %v570, %v569
      %v628 = vpack.c.b16 %v572, %v571
      %v629 = vpack.c.b16 %v574, %v573
      %v630 = vpack.c.b16 %v576, %v575
      %v631 = vpack.c.b16 %v578, %v577
      %v632 = vpack.c.b16 %v580, %v579
      %v633 = vpack.c.b16 %v582, %v581
      %v634 = vpack.c.b16 %v584, %v583
      %v635 = vpack.c.b16 %v586, %v585
      %v636 = vpack.c.b16 %v588, %v587
      %v637 = vpack.c.b16 %v590, %v589
      %v638 = vpack.c.b16 %v592, %v591
      %v639 = vpack.c.b16 %v594, %v593
      %v640 = vpack.c.b16 %v596, %v595
      %v641 = vpack.c.b16 %v598, %v597
      %v642 = vpack.c.b16 %v600, %v599
      %v643 = vpack.c.b16 %v602, %v601
      %v644 = vpack.c.b16 %v604, %v603
      %v645 = vpack.c.b16 %v606, %v605
      %v646 = vpack.c.b16 %v608, %v607
      %v647 = vpack.c.b16 %v610, %v609
      %v648 = vpack.c.b16 %v612, %v611
      %v649 = vpack.c.b16 %v614, %v613
      %v650 = vpack.c.b16 %v616, %v615
      %v651 = vpack.c.b16 %v618, %v617
      %v652 = vpack.c.b16 %v620, %v619
      %v701 = vunpack.c.l.b16 %v470
      %v702 = vunpack.c.l.b16 %v471
      %v703 = vunpack.c.l.b16 %v472
      %v704 = vunpack.c.l.b16 %v473
      %v705 = vunpack.c.l.b16 %v474
      %v706 = vunpack.c.l.b16 %v475
      %v707 = vunpack.c.l.b16 %v476
      %v708 = vunpack.c.l.b16 %v477
      %v709 = vunpack.c.l.b16 %v478
      %v710 = vunpack.c.l.b16 %v479
      %v711 = vunpack.c.l.b16 %v480
      %v712 = vunpack.c.l.b16 %v481
      %v713 = vunpack.c.l.b16 %v482
      %v714 = vunpack.c.l.b16 %v483
      %v715 = vunpack.c.l.b16 %v484
      %v716 = vunpack.c.l.b16 %v485
      %v717 = vpack.c.b16 %v702, %v701
      %v718 = vpack.c.b16 %v704, %v703
      %v719 = vpack.c.b16 %v706, %v705
      %v720 = vpack.c.b16 %v708, %v707
      %v721 = vpack.c.b16 %v710, %v709
      %v722 = vpack.c.b16 %v712, %v711
      %v723 = vpack.c.b16 %v714, %v713
      %v724 = vpack.c.b16 %v716, %v715
      %733 = vmatprep.subr.bf16.mxu0 0
      %734 = vmatpush1.bf16.msra.mxu0 %v717
      %735 = vmatprep.subr.bf16.mxu0 0
      %736 = vmatpush1.bf16.msra.mxu0 %v718
      %737 = vmatprep.subr.bf16.mxu0 0
      %738 = vmatpush1.bf16.msra.mxu0 %v719
      %739 = vmatprep.subr.bf16.mxu0 0
      %740 = vmatpush1.bf16.msra.mxu0 %v720
      %741 = vmatprep.subr.bf16.mxu0 0
      %742 = vmatpush1.bf16.msra.mxu0 %v721
      %743 = vmatprep.subr.bf16.mxu0 0
      %744 = vmatpush1.bf16.msra.mxu0 %v722
      %745 = vmatprep.subr.bf16.mxu0 0
      %746 = vmatpush1.bf16.msra.mxu0 %v723
      %747 = vmatprep.subr.bf16.mxu0 0
      %748 = vmatpush1.bf16.msra.mxu0 %v724
      %749 = vmatprep.subr.bf16.mxu0 0
      %750 = vmatpush1.bf16.msra.mxu0 0
      %751 = vmatprep.subr.bf16.mxu0 0
      %752 = vmatpush1.bf16.msra.mxu0 0
      %753 = vmatprep.subr.bf16.mxu0 0
      %754 = vmatpush1.bf16.msra.mxu0 0
      %755 = vmatprep.subr.bf16.mxu0 0
      %756 = vmatpush1.bf16.msra.mxu0 0
      %757 = vmatprep.subr.bf16.mxu0 0
      %758 = vmatpush1.bf16.msra.mxu0 0
      %759 = vmatprep.subr.bf16.mxu0 0
      %760 = vmatpush1.bf16.msra.mxu0 0
      %761 = vmatprep.subr.bf16.mxu0 0
      %762 = vmatpush1.bf16.msra.mxu0 0
      %763 = vmatprep.subr.bf16.mxu0 0
      %764 = vmatpush1.bf16.msra.mxu0 0
      %765 = vmatprep.mubr.bf16.mxu0 0
      %766 = vmatmul.mubr.bf16.gmra.mrb[0].mxu0 %v621
      %v767 = vpop.f32.mrb[0].mxu0
      %v768 = vadd.f32 %v491, %v767
      %v769 = vpop.f32.mrb[0].mxu0
      %v770 = vpop.f32.mrb[0].mxu0
      %v771 = vadd.f32 %v491, %v770
      %v772 = vpop.f32.mrb[0].mxu0
      %773 = vmatprep.mubr.bf16.mxu0 0
      %774 = vmatmul.mubr.bf16.gmra.mrb[0].mxu0 %v622
      %v775 = vpop.f32.mrb[0].mxu0
      %v776 = vadd.f32 %v491, %v775
      %v777 = vpop.f32.mrb[0].mxu0
      %v778 = vpop.f32.mrb[0].mxu0
      %v779 = vadd.f32 %v491, %v778
      %v780 = vpop.f32.mrb[0].mxu0
      %781 = vmatprep.mubr.bf16.mxu0 0
      %782 = vmatmul.mubr.bf16.gmra.mrb[0].mxu0 %v623
      %v783 = vpop.f32.mrb[0].mxu0
      %v784 = vadd.f32 %v491, %v783
      %v785 = vpop.f32.mrb[0].mxu0
      %v786 = vpop.f32.mrb[0].mxu0
      %v787 = vadd.f32 %v491, %v786
      %v788 = vpop.f32.mrb[0].mxu0
      %789 = vmatprep.mubr.bf16.mxu0 0
      %790 = vmatmul.mubr.bf16.gmra.mrb[0].mxu0 %v624
      %v791 = vpop.f32.mrb[0].mxu0
      %v792 = vadd.f32 %v491, %v791
      %v793 = vpop.f32.mrb[0].mxu0
      %v794 = vpop.f32.mrb[0].mxu0
      %v795 = vadd.f32 %v491, %v794
      %v796 = vpop.f32.mrb[0].mxu0
      %797 = vmatprep.mubr.bf16.mxu0 0
      %798 = vmatmul.mubr.bf16.gmra.mrb[0].mxu0 %v625
      %v799 = vpop.f32.mrb[0].mxu0
      %v800 = vadd.f32 %v491, %v799
      %v801 = vpop.f32.mrb[0].mxu0
      %v802 = vpop.f32.mrb[0].mxu0
      %v803 = vadd.f32 %v491, %v802
      %v804 = vpop.f32.mrb[0].mxu0
      %805 = vmatprep.mubr.bf16.mxu0 0
      %806 = vmatmul.mubr.bf16.gmra.mrb[0].mxu0 %v626
      %v807 = vpop.f32.mrb[0].mxu0
      %v808 = vadd.f32 %v491, %v807
      %v809 = vpop.f32.mrb[0].mxu0
      %v810 = vpop.f32.mrb[0].mxu0
      %v811 = vadd.f32 %v491, %v810
      %v812 = vpop.f32.mrb[0].mxu0
      %813 = vmatprep.mubr.bf16.mxu0 0
      %814 = vmatmul.mubr.bf16.gmra.mrb[0].mxu0 %v627
      %v815 = vpop.f32.mrb[0].mxu0
      %v816 = vadd.f32 %v491, %v815
      %v817 = vpop.f32.mrb[0].mxu0
      %v818 = vpop.f32.mrb[0].mxu0
      %v819 = vadd.f32 %v491, %v818
      %v820 = vpop.f32.mrb[0].mxu0
      %821 = vmatprep.mubr.bf16.mxu0 0
      %822 = vmatmul.mubr.bf16.gmra.mrb[0].mxu0 %v628
      %v823 = vpop.f32.mrb[0].mxu0
      %v824 = vadd.f32 %v491, %v823
      %v825 = vpop.f32.mrb[0].mxu0
      %v826 = vpop.f32.mrb[0].mxu0
      %v827 = vadd.f32 %v491, %v826
      %v828 = vpop.f32.mrb[0].mxu0
      %829 = vmatprep.mubr.bf16.mxu0 0
      %830 = vmatmul.mubr.bf16.gmra.mrb[0].mxu0 %v629
      %v831 = vpop.f32.mrb[0].mxu0
      %v832 = vadd.f32 %v491, %v831
      %v833 = vpop.f32.mrb[0].mxu0
      %v834 = vpop.f32.mrb[0].mxu0
      %v835 = vadd.f32 %v491, %v834
      %v836 = vpop.f32.mrb[0].mxu0
      %837 = vmatprep.mubr.bf16.mxu0 0
      %838 = vmatmul.mubr.bf16.gmra.mrb[0].mxu0 %v630
      %v839 = vpop.f32.mrb[0].mxu0
      %v840 = vadd.f32 %v491, %v839
      %v841 = vpop.f32.mrb[0].mxu0
      %v842 = vpop.f32.mrb[0].mxu0
      %v843 = vadd.f32 %v491, %v842
      %v844 = vpop.f32.mrb[0].mxu0
      %845 = vmatprep.mubr.bf16.mxu0 0
      %846 = vmatmul.mubr.bf16.gmra.mrb[0].mxu0 %v631
      %v847 = vpop.f32.mrb[0].mxu0
      %v848 = vadd.f32 %v491, %v847
      %v849 = vpop.f32.mrb[0].mxu0
      %v850 = vpop.f32.mrb[0].mxu0
      %v851 = vadd.f32 %v491, %v850
      %v852 = vpop.f32.mrb[0].mxu0
      %853 = vmatprep.mubr.bf16.mxu0 0
      %854 = vmatmul.mubr.bf16.gmra.mrb[0].mxu0 %v632
      %v855 = vpop.f32.mrb[0].mxu0
      %v856 = vadd.f32 %v491, %v855
      %v857 = vpop.f32.mrb[0].mxu0
      %v858 = vpop.f32.mrb[0].mxu0
      %v859 = vadd.f32 %v491, %v858
      %v860 = vpop.f32.mrb[0].mxu0
      %861 = vmatprep.mubr.bf16.mxu0 0
      %862 = vmatmul.mubr.bf16.gmra.mrb[0].mxu0 %v633
      %v863 = vpop.f32.mrb[0].mxu0
      %v864 = vadd.f32 %v491, %v863
      %v865 = vpop.f32.mrb[0].mxu0
      %v866 = vpop.f32.mrb[0].mxu0
      %v867 = vadd.f32 %v491, %v866
      %v868 = vpop.f32.mrb[0].mxu0
      %869 = vmatprep.mubr.bf16.mxu0 0
      %870 = vmatmul.mubr.bf16.gmra.mrb[0].mxu0 %v634
      %v871 = vpop.f32.mrb[0].mxu0
      %v872 = vadd.f32 %v491, %v871
      %v873 = vpop.f32.mrb[0].mxu0
      %v874 = vpop.f32.mrb[0].mxu0
      %v875 = vadd.f32 %v491, %v874
      %v876 = vpop.f32.mrb[0].mxu0
      %877 = vmatprep.mubr.bf16.mxu0 0
      %878 = vmatmul.mubr.bf16.gmra.mrb[0].mxu0 %v635
      %v879 = vpop.f32.mrb[0].mxu0
      %v880 = vadd.f32 %v491, %v879
      %v881 = vpop.f32.mrb[0].mxu0
      %v882 = vpop.f32.mrb[0].mxu0
      %v883 = vadd.f32 %v491, %v882
      %v884 = vpop.f32.mrb[0].mxu0
      %885 = vmatprep.mubr.bf16.mxu0 0
      %886 = vmatmul.mubr.bf16.gmra.mrb[0].mxu0 %v636
      %v887 = vpop.f32.mrb[0].mxu0
      %v888 = vadd.f32 %v491, %v887
      %v889 = vpop.f32.mrb[0].mxu0
      %v890 = vpop.f32.mrb[0].mxu0
      %v891 = vadd.f32 %v491, %v890
      %v892 = vpop.f32.mrb[0].mxu0
      %893 = vmatprep.mubr.bf16.mxu0 0
      %894 = vmatmul.mubr.bf16.gmra.mrb[0].mxu0 %v637
      %v895 = vpop.f32.mrb[0].mxu0
      %v896 = vadd.f32 %v491, %v895
      %v897 = vpop.f32.mrb[0].mxu0
      %v898 = vpop.f32.mrb[0].mxu0
      %v899 = vadd.f32 %v491, %v898
      %v900 = vpop.f32.mrb[0].mxu0
      %901 = vmatprep.mubr.bf16.mxu0 0
      %902 = vmatmul.mubr.bf16.gmra.mrb[0].mxu0 %v638
      %v903 = vpop.f32.mrb[0].mxu0
      %v904 = vadd.f32 %v491, %v903
      %v905 = vpop.f32.mrb[0].mxu0
      %v906 = vpop.f32.mrb[0].mxu0
      %v907 = vadd.f32 %v491, %v906
      %v908 = vpop.f32.mrb[0].mxu0
      %909 = vmatprep.mubr.bf16.mxu0 0
      %910 = vmatmul.mubr.bf16.gmra.mrb[0].mxu0 %v639
      %v911 = vpop.f32.mrb[0].mxu0
      %v912 = vadd.f32 %v491, %v911
      %v913 = vpop.f32.mrb[0].mxu0
      %v914 = vpop.f32.mrb[0].mxu0
      %v915 = vadd.f32 %v491, %v914
      %v916 = vpop.f32.mrb[0].mxu0
      %917 = vmatprep.mubr.bf16.mxu0 0
      %918 = vmatmul.mubr.bf16.gmra.mrb[0].mxu0 %v640
      %v919 = vpop.f32.mrb[0].mxu0
      %v920 = vadd.f32 %v491, %v919
      %v921 = vpop.f32.mrb[0].mxu0
      %v922 = vpop.f32.mrb[0].mxu0
      %v923 = vadd.f32 %v491, %v922
      %v924 = vpop.f32.mrb[0].mxu0
      %925 = vmatprep.mubr.bf16.mxu0 0
      %926 = vmatmul.mubr.bf16.gmra.mrb[0].mxu0 %v641
      %v927 = vpop.f32.mrb[0].mxu0
      %v928 = vadd.f32 %v491, %v927
      %v929 = vpop.f32.mrb[0].mxu0
      %v930 = vpop.f32.mrb[0].mxu0
      %v931 = vadd.f32 %v491, %v930
      %v932 = vpop.f32.mrb[0].mxu0
      %933 = vmatprep.mubr.bf16.mxu0 0
      %934 = vmatmul.mubr.bf16.gmra.mrb[0].mxu0 %v642
      %v935 = vpop.f32.mrb[0].mxu0
      %v936 = vadd.f32 %v491, %v935
      %v937 = vpop.f32.mrb[0].mxu0
      %v938 = vpop.f32.mrb[0].mxu0
      %v939 = vadd.f32 %v491, %v938
      %v940 = vpop.f32.mrb[0].mxu0
      %941 = vmatprep.mubr.bf16.mxu0 0
      %942 = vmatmul.mubr.bf16.gmra.mrb[0].mxu0 %v643
      %v943 = vpop.f32.mrb[0].mxu0
      %v944 = vadd.f32 %v491, %v943
      %v945 = vpop.f32.mrb[0].mxu0
      %v946 = vpop.f32.mrb[0].mxu0
      %v947 = vadd.f32 %v491, %v946
      %v948 = vpop.f32.mrb[0].mxu0
      %949 = vmatprep.mubr.bf16.mxu0 0
      %950 = vmatmul.mubr.bf16.gmra.mrb[0].mxu0 %v644
      %v951 = vpop.f32.mrb[0].mxu0
      %v952 = vadd.f32 %v491, %v951
      %v953 = vpop.f32.mrb[0].mxu0
      %v954 = vpop.f32.mrb[0].mxu0
      %v955 = vadd.f32 %v491, %v954
      %v956 = vpop.f32.mrb[0].mxu0
      %957 = vmatprep.mubr.bf16.mxu0 0
      %958 = vmatmul.mubr.bf16.gmra.mrb[0].mxu0 %v645
      %v959 = vpop.f32.mrb[0].mxu0
      %v960 = vadd.f32 %v491, %v959
      %v961 = vpop.f32.mrb[0].mxu0
      %v962 = vpop.f32.mrb[0].mxu0
      %v963 = vadd.f32 %v491, %v962
      %v964 = vpop.f32.mrb[0].mxu0
      %965 = vmatprep.mubr.bf16.mxu0 0
      %966 = vmatmul.mubr.bf16.gmra.mrb[0].mxu0 %v646
      %v967 = vpop.f32.mrb[0].mxu0
      %v968 = vadd.f32 %v491, %v967
      %v969 = vpop.f32.mrb[0].mxu0
      %v970 = vpop.f32.mrb[0].mxu0
      %v971 = vadd.f32 %v491, %v970
      %v972 = vpop.f32.mrb[0].mxu0
      %973 = vmatprep.mubr.bf16.mxu0 0
      %974 = vmatmul.mubr.bf16.gmra.mrb[0].mxu0 %v647
      %v975 = vpop.f32.mrb[0].mxu0
      %v976 = vadd.f32 %v491, %v975
      %v977 = vpop.f32.mrb[0].mxu0
      %v978 = vpop.f32.mrb[0].mxu0
      %v979 = vadd.f32 %v491, %v978
      %v980 = vpop.f32.mrb[0].mxu0
      %981 = vmatprep.mubr.bf16.mxu0 0
      %982 = vmatmul.mubr.bf16.gmra.mrb[0].mxu0 %v648
      %v983 = vpop.f32.mrb[0].mxu0
      %v984 = vadd.f32 %v491, %v983
      %v985 = vpop.f32.mrb[0].mxu0
      %v986 = vpop.f32.mrb[0].mxu0
      %v987 = vadd.f32 %v491, %v986
      %v988 = vpop.f32.mrb[0].mxu0
      %989 = vmatprep.mubr.bf16.mxu0 0
      %990 = vmatmul.mubr.bf16.gmra.mrb[0].mxu0 %v649
      %v991 = vpop.f32.mrb[0].mxu0
      %v992 = vadd.f32 %v491, %v991
      %v993 = vpop.f32.mrb[0].mxu0
      %v994 = vpop.f32.mrb[0].mxu0
      %v995 = vadd.f32 %v491, %v994
      %v996 = vpop.f32.mrb[0].mxu0
      %997 = vmatprep.mubr.bf16.mxu0 0
      %998 = vmatmul.mubr.bf16.gmra.mrb[0].mxu0 %v650
      %v999 = vpop.f32.mrb[0].mxu0
      %v1000 = vadd.f32 %v491, %v999
      %v1001 = vpop.f32.mrb[0].mxu0
      %v1002 = vpop.f32.mrb[0].mxu0
      %v1003 = vadd.f32 %v491, %v1002
      %v1004 = vpop.f32.mrb[0].mxu0
      %1005 = vmatprep.mubr.bf16.mxu0 0
      %1006 = vmatmul.mubr.bf16.gmra.mrb[0].mxu0 %v651
      %v1007 = vpop.f32.mrb[0].mxu0
      %v1008 = vadd.f32 %v491, %v1007
      %v1009 = vpop.f32.mrb[0].mxu0
      %v1010 = vpop.f32.mrb[0].mxu0
      %v1011 = vadd.f32 %v491, %v1010
      %v1012 = vpop.f32.mrb[0].mxu0
      %1013 = vmatprep.mubr.bf16.mxu0 0
      %1014 = vmatmul.mubr.bf16.gmra.mrb[0].mxu0 %v652
      %v1015 = vpop.f32.mrb[0].mxu0
      %v1016 = vadd.f32 %v491, %v1015
      %v1017 = vpop.f32.mrb[0].mxu0
      %v1018 = vpop.f32.mrb[0].mxu0
      %v1019 = vadd.f32 %v491, %v1018
      %v1020 = vpop.f32.mrb[0].mxu0
      %1021 = vdwg.mxu0
      %v1022 = vmax.f32 %v768, 0.0
      %v1023 = vmax.f32 %v771, 0.0
      %v1024 = vmax.f32 %v776, 0.0
      %v1025 = vmax.f32 %v779, 0.0
      %v1026 = vmax.f32 %v784, 0.0
      %v1027 = vmax.f32 %v787, 0.0
      %v1028 = vmax.f32 %v792, 0.0
      %v1029 = vmax.f32 %v795, 0.0
      %v1030 = vmax.f32 %v800, 0.0
      %v1031 = vmax.f32 %v803, 0.0
      %v1032 = vmax.f32 %v808, 0.0
      %v1033 = vmax.f32 %v811, 0.0
      %v1034 = vmax.f32 %v816, 0.0
      %v1035 = vmax.f32 %v819, 0.0
      %v1036 = vmax.f32 %v824, 0.0
      %v1037 = vmax.f32 %v827, 0.0
      %v1038 = vmax.f32 %v832, 0.0
      %v1039 = vmax.f32 %v835, 0.0
      %v1040 = vmax.f32 %v840, 0.0
      %v1041 = vmax.f32 %v843, 0.0
      %v1042 = vmax.f32 %v848, 0.0
      %v1043 = vmax.f32 %v851, 0.0
      %v1044 = vmax.f32 %v856, 0.0
      %v1045 = vmax.f32 %v859, 0.0
      %v1046 = vmax.f32 %v864, 0.0
      %v1047 = vmax.f32 %v867, 0.0
      %v1048 = vmax.f32 %v872, 0.0
      %v1049 = vmax.f32 %v875, 0.0
      %v1050 = vmax.f32 %v880, 0.0
      %v1051 = vmax.f32 %v883, 0.0
      %v1052 = vmax.f32 %v888, 0.0
      %v1053 = vmax.f32 %v891, 0.0
      %v1054 = vmax.f32 %v896, 0.0
      %v1055 = vmax.f32 %v899, 0.0
      %v1056 = vmax.f32 %v904, 0.0
      %v1057 = vmax.f32 %v907, 0.0
      %v1058 = vmax.f32 %v912, 0.0
      %v1059 = vmax.f32 %v915, 0.0
      %v1060 = vmax.f32 %v920, 0.0
      %v1061 = vmax.f32 %v923, 0.0
      %v1062 = vmax.f32 %v928, 0.0
      %v1063 = vmax.f32 %v931, 0.0
      %v1064 = vmax.f32 %v936, 0.0
      %v1065 = vmax.f32 %v939, 0.0
      %v1066 = vmax.f32 %v944, 0.0
      %v1067 = vmax.f32 %v947, 0.0
      %v1068 = vmax.f32 %v952, 0.0
      %v1069 = vmax.f32 %v955, 0.0
      %v1070 = vmax.f32 %v960, 0.0
      %v1071 = vmax.f32 %v963, 0.0
      %v1072 = vmax.f32 %v968, 0.0
      %v1073 = vmax.f32 %v971, 0.0
      %v1074 = vmax.f32 %v976, 0.0
      %v1075 = vmax.f32 %v979, 0.0
      %v1076 = vmax.f32 %v984, 0.0
      %v1077 = vmax.f32 %v987, 0.0
      %v1078 = vmax.f32 %v992, 0.0
      %v1079 = vmax.f32 %v995, 0.0
      %v1080 = vmax.f32 %v1000, 0.0
      %v1081 = vmax.f32 %v1003, 0.0
      %v1082 = vmax.f32 %v1008, 0.0
      %v1083 = vmax.f32 %v1011, 0.0
      %v1084 = vmax.f32 %v1016, 0.0
      %v1085 = vmax.f32 %v1019, 0.0
      %v1086 = vmul.f32 %v1022, %v406
      %v1087 = vmul.f32 %v1023, %v407
      %v1088 = vmul.f32 %v1024, %v408
      %v1089 = vmul.f32 %v1025, %v409
      %v1090 = vmul.f32 %v1026, %v410
      %v1091 = vmul.f32 %v1027, %v411
      %v1092 = vmul.f32 %v1028, %v412
      %v1093 = vmul.f32 %v1029, %v413
      %v1094 = vmul.f32 %v1030, %v414
      %v1095 = vmul.f32 %v1031, %v415
      %v1096 = vmul.f32 %v1032, %v416
      %v1097 = vmul.f32 %v1033, %v417
      %v1098 = vmul.f32 %v1034, %v418
      %v1099 = vmul.f32 %v1035, %v419
      %v1100 = vmul.f32 %v1036, %v420
      %v1101 = vmul.f32 %v1037, %v421
      %v1102 = vmul.f32 %v1038, %v422
      %v1103 = vmul.f32 %v1039, %v423
      %v1104 = vmul.f32 %v1040, %v424
      %v1105 = vmul.f32 %v1041, %v425
      %v1106 = vmul.f32 %v1042, %v426
      %v1107 = vmul.f32 %v1043, %v427
      %v1108 = vmul.f32 %v1044, %v428
      %v1109 = vmul.f32 %v1045, %v429
      %v1110 = vmul.f32 %v1046, %v430
      %v1111 = vmul.f32 %v1047, %v431
      %v1112 = vmul.f32 %v1048, %v432
      %v1113 = vmul.f32 %v1049, %v433
      %v1114 = vmul.f32 %v1050, %v434
      %v1115 = vmul.f32 %v1051, %v435
      %v1116 = vmul.f32 %v1052, %v436
      %v1117 = vmul.f32 %v1053, %v437
      %v1118 = vmul.f32 %v1054, %v438
      %v1119 = vmul.f32 %v1055, %v439
      %v1120 = vmul.f32 %v1056, %v440
      %v1121 = vmul.f32 %v1057, %v441
      %v1122 = vmul.f32 %v1058, %v442
      %v1123 = vmul.f32 %v1059, %v443
      %v1124 = vmul.f32 %v1060, %v444
      %v1125 = vmul.f32 %v1061, %v445
      %v1126 = vmul.f32 %v1062, %v446
      %v1127 = vmul.f32 %v1063, %v447
      %v1128 = vmul.f32 %v1064, %v448
      %v1129 = vmul.f32 %v1065, %v449
      %v1130 = vmul.f32 %v1066, %v450
      %v1131 = vmul.f32 %v1067, %v451
      %v1132 = vmul.f32 %v1068, %v452
      %v1133 = vmul.f32 %v1069, %v453
      %v1134 = vmul.f32 %v1070, %v454
      %v1135 = vmul.f32 %v1071, %v455
      %v1136 = vmul.f32 %v1072, %v456
      %v1137 = vmul.f32 %v1073, %v457
      %v1138 = vmul.f32 %v1074, %v458
      %v1139 = vmul.f32 %v1075, %v459
      %v1140 = vmul.f32 %v1076, %v460
      %v1141 = vmul.f32 %v1077, %v461
      %v1142 = vmul.f32 %v1078, %v462
      %v1143 = vmul.f32 %v1079, %v463
      %v1144 = vmul.f32 %v1080, %v464
      %v1145 = vmul.f32 %v1081, %v465
      %v1146 = vmul.f32 %v1082, %v466
      %v1147 = vmul.f32 %v1083, %v467
      %v1148 = vmul.f32 %v1084, %v468
      %v1149 = vmul.f32 %v1085, %v469
      %v1150 = vpack.c.bf16 %v1087, %v1086
      %v1151 = vpack.c.bf16 %v1089, %v1088
      %v1152 = vpack.c.bf16 %v1091, %v1090
      %v1153 = vpack.c.bf16 %v1093, %v1092
      %v1154 = vpack.c.bf16 %v1095, %v1094
      %v1155 = vpack.c.bf16 %v1097, %v1096
      %v1156 = vpack.c.bf16 %v1099, %v1098
      %v1157 = vpack.c.bf16 %v1101, %v1100
      %v1158 = vpack.c.bf16 %v1103, %v1102
      %v1159 = vpack.c.bf16 %v1105, %v1104
      %v1160 = vpack.c.bf16 %v1107, %v1106
      %v1161 = vpack.c.bf16 %v1109, %v1108
      %v1162 = vpack.c.bf16 %v1111, %v1110
      %v1163 = vpack.c.bf16 %v1113, %v1112
      %v1164 = vpack.c.bf16 %v1115, %v1114
      %v1165 = vpack.c.bf16 %v1117, %v1116
      %v1166 = vpack.c.bf16 %v1119, %v1118
      %v1167 = vpack.c.bf16 %v1121, %v1120
      %v1168 = vpack.c.bf16 %v1123, %v1122
      %v1169 = vpack.c.bf16 %v1125, %v1124
      %v1170 = vpack.c.bf16 %v1127, %v1126
      %v1171 = vpack.c.bf16 %v1129, %v1128
      %v1172 = vpack.c.bf16 %v1131, %v1130
      %v1173 = vpack.c.bf16 %v1133, %v1132
      %v1174 = vpack.c.bf16 %v1135, %v1134
      %v1175 = vpack.c.bf16 %v1137, %v1136
      %v1176 = vpack.c.bf16 %v1139, %v1138
      %v1177 = vpack.c.bf16 %v1141, %v1140
      %v1178 = vpack.c.bf16 %v1143, %v1142
      %v1179 = vpack.c.bf16 %v1145, %v1144
      %v1180 = vpack.c.bf16 %v1147, %v1146
      %v1181 = vpack.c.bf16 %v1149, %v1148
      %s1182 = scalar_lea.vmem %s2, 64
      %v1183 = vld [vmem:[%s1182] sm:$0xf]
      %v1184 = vld [vmem:[%s1182 + $0x4] sm:$0xf]
      %v1185 = vld [vmem:[%s1182 + $0x8] sm:$0xf]
      %v1186 = vld [vmem:[%s1182 + $0xc] sm:$0xf]
      %v1187 = vld [vmem:[%s1182 + $0x10] sm:$0xf]
      %v1188 = vld [vmem:[%s1182 + $0x14] sm:$0xf]
      %v1189 = vld [vmem:[%s1182 + $0x18] sm:$0xf]
      %v1190 = vld [vmem:[%s1182 + $0x1c] sm:$0xf]
      %v1191 = vld [vmem:[%s1182 + $0x20] sm:$0xf]
      %v1192 = vld [vmem:[%s1182 + $0x24] sm:$0xf]
      %v1193 = vld [vmem:[%s1182 + $0x28] sm:$0xf]
      %v1194 = vld [vmem:[%s1182 + $0x2c] sm:$0xf]
      %v1195 = vld [vmem:[%s1182 + $0x30] sm:$0xf]
      %v1196 = vld [vmem:[%s1182 + $0x34] sm:$0xf]
      %v1197 = vld [vmem:[%s1182 + $0x38] sm:$0xf]
      %v1198 = vld [vmem:[%s1182 + $0x3c] sm:$0xf]
      %s1199 = scalar_lea.vmem %s3, 1
      %v1200 = vld [vmem:[%s1199] sm:$0x1]
      %v1202 = vlaneseq
      %v1203 = vshrl.u32 %v1202, 7
      %v1204 = vsub.s32 0, %v1203
      %v1205 = vrot.slane %v1200, %v1204
      %v1223 = vunpack.c.l.b16 %v1183
      %v1224 = vunpack.c.l.b16 %v1184
      %v1225 = vunpack.c.l.b16 %v1185
      %v1226 = vunpack.c.l.b16 %v1186
      %v1227 = vunpack.c.l.b16 %v1187
      %v1228 = vunpack.c.l.b16 %v1188
      %v1229 = vunpack.c.l.b16 %v1189
      %v1230 = vunpack.c.l.b16 %v1190
      %v1231 = vunpack.c.l.b16 %v1191
      %v1232 = vunpack.c.l.b16 %v1192
      %v1233 = vunpack.c.l.b16 %v1193
      %v1234 = vunpack.c.l.b16 %v1194
      %v1235 = vunpack.c.l.b16 %v1195
      %v1236 = vunpack.c.l.b16 %v1196
      %v1237 = vunpack.c.l.b16 %v1197
      %v1238 = vunpack.c.l.b16 %v1198
      %v1239 = vpack.c.b16 %v1224, %v1223
      %v1240 = vpack.c.b16 %v1226, %v1225
      %v1241 = vpack.c.b16 %v1228, %v1227
      %v1242 = vpack.c.b16 %v1230, %v1229
      %v1243 = vpack.c.b16 %v1232, %v1231
      %v1244 = vpack.c.b16 %v1234, %v1233
      %v1245 = vpack.c.b16 %v1236, %v1235
      %v1246 = vpack.c.b16 %v1238, %v1237
      %1255 = vmatprep.subr.bf16.mxu0 0
      %1256 = vmatpush1.bf16.msra.mxu0 %v1239
      %1257 = vmatprep.subr.bf16.mxu0 0
      %1258 = vmatpush1.bf16.msra.mxu0 %v1240
      %1259 = vmatprep.subr.bf16.mxu0 0
      %1260 = vmatpush1.bf16.msra.mxu0 %v1241
      %1261 = vmatprep.subr.bf16.mxu0 0
      %1262 = vmatpush1.bf16.msra.mxu0 %v1242
      %1263 = vmatprep.subr.bf16.mxu0 0
      %1264 = vmatpush1.bf16.msra.mxu0 %v1243
      %1265 = vmatprep.subr.bf16.mxu0 0
      %1266 = vmatpush1.bf16.msra.mxu0 %v1244
      %1267 = vmatprep.subr.bf16.mxu0 0
      %1268 = vmatpush1.bf16.msra.mxu0 %v1245
      %1269 = vmatprep.subr.bf16.mxu0 0
      %1270 = vmatpush1.bf16.msra.mxu0 %v1246
      %1271 = vmatprep.subr.bf16.mxu0 0
      %1272 = vmatpush1.bf16.msra.mxu0 0
      %1273 = vmatprep.subr.bf16.mxu0 0
      %1274 = vmatpush1.bf16.msra.mxu0 0
      %1275 = vmatprep.subr.bf16.mxu0 0
      %1276 = vmatpush1.bf16.msra.mxu0 0
      %1277 = vmatprep.subr.bf16.mxu0 0
      %1278 = vmatpush1.bf16.msra.mxu0 0
      %1279 = vmatprep.subr.bf16.mxu0 0
      %1280 = vmatpush1.bf16.msra.mxu0 0
      %1281 = vmatprep.subr.bf16.mxu0 0
      %1282 = vmatpush1.bf16.msra.mxu0 0
      %1283 = vmatprep.subr.bf16.mxu0 0
      %1284 = vmatpush1.bf16.msra.mxu0 0
      %1285 = vmatprep.subr.bf16.mxu0 0
      %1286 = vmatpush1.bf16.msra.mxu0 0
      %1287 = vmatprep.mubr.bf16.mxu0 0
      %1288 = vmatmul.mubr.bf16.gmra.mrb[0].mxu0 %v1150
      %v1289 = vpop.f32.mrb[0].mxu0
      %v1290 = vadd.f32 %v1205, %v1289
      %v1291 = vpop.f32.mrb[0].mxu0
      %v1292 = vpop.f32.mrb[0].mxu0
      %v1293 = vadd.f32 %v1205, %v1292
      %v1294 = vpop.f32.mrb[0].mxu0
      %1295 = vmatprep.mubr.bf16.mxu0 0
      %1296 = vmatmul.mubr.bf16.gmra.mrb[0].mxu0 %v1151
      %v1297 = vpop.f32.mrb[0].mxu0
      %v1298 = vadd.f32 %v1205, %v1297
      %v1299 = vpop.f32.mrb[0].mxu0
      %v1300 = vpop.f32.mrb[0].mxu0
      %v1301 = vadd.f32 %v1205, %v1300
      %v1302 = vpop.f32.mrb[0].mxu0
      %1303 = vmatprep.mubr.bf16.mxu0 0
      %1304 = vmatmul.mubr.bf16.gmra.mrb[0].mxu0 %v1152
      %v1305 = vpop.f32.mrb[0].mxu0
      %v1306 = vadd.f32 %v1205, %v1305
      %v1307 = vpop.f32.mrb[0].mxu0
      %v1308 = vpop.f32.mrb[0].mxu0
      %v1309 = vadd.f32 %v1205, %v1308
      %v1310 = vpop.f32.mrb[0].mxu0
      %1311 = vmatprep.mubr.bf16.mxu0 0
      %1312 = vmatmul.mubr.bf16.gmra.mrb[0].mxu0 %v1153
      %v1313 = vpop.f32.mrb[0].mxu0
      %v1314 = vadd.f32 %v1205, %v1313
      %v1315 = vpop.f32.mrb[0].mxu0
      %v1316 = vpop.f32.mrb[0].mxu0
      %v1317 = vadd.f32 %v1205, %v1316
      %v1318 = vpop.f32.mrb[0].mxu0
      %1319 = vmatprep.mubr.bf16.mxu0 0
      %1320 = vmatmul.mubr.bf16.gmra.mrb[0].mxu0 %v1154
      %v1321 = vpop.f32.mrb[0].mxu0
      %v1322 = vadd.f32 %v1205, %v1321
      %v1323 = vpop.f32.mrb[0].mxu0
      %v1324 = vpop.f32.mrb[0].mxu0
      %v1325 = vadd.f32 %v1205, %v1324
      %v1326 = vpop.f32.mrb[0].mxu0
      %1327 = vmatprep.mubr.bf16.mxu0 0
      %1328 = vmatmul.mubr.bf16.gmra.mrb[0].mxu0 %v1155
      %v1329 = vpop.f32.mrb[0].mxu0
      %v1330 = vadd.f32 %v1205, %v1329
      %v1331 = vpop.f32.mrb[0].mxu0
      %v1332 = vpop.f32.mrb[0].mxu0
      %v1333 = vadd.f32 %v1205, %v1332
      %v1334 = vpop.f32.mrb[0].mxu0
      %1335 = vmatprep.mubr.bf16.mxu0 0
      %1336 = vmatmul.mubr.bf16.gmra.mrb[0].mxu0 %v1156
      %v1337 = vpop.f32.mrb[0].mxu0
      %v1338 = vadd.f32 %v1205, %v1337
      %v1339 = vpop.f32.mrb[0].mxu0
      %v1340 = vpop.f32.mrb[0].mxu0
      %v1341 = vadd.f32 %v1205, %v1340
      %v1342 = vpop.f32.mrb[0].mxu0
      %1343 = vmatprep.mubr.bf16.mxu0 0
      %1344 = vmatmul.mubr.bf16.gmra.mrb[0].mxu0 %v1157
      %v1345 = vpop.f32.mrb[0].mxu0
      %v1346 = vadd.f32 %v1205, %v1345
      %v1347 = vpop.f32.mrb[0].mxu0
      %v1348 = vpop.f32.mrb[0].mxu0
      %v1349 = vadd.f32 %v1205, %v1348
      %v1350 = vpop.f32.mrb[0].mxu0
      %1351 = vmatprep.mubr.bf16.mxu0 0
      %1352 = vmatmul.mubr.bf16.gmra.mrb[0].mxu0 %v1158
      %v1353 = vpop.f32.mrb[0].mxu0
      %v1354 = vadd.f32 %v1205, %v1353
      %v1355 = vpop.f32.mrb[0].mxu0
      %v1356 = vpop.f32.mrb[0].mxu0
      %v1357 = vadd.f32 %v1205, %v1356
      %v1358 = vpop.f32.mrb[0].mxu0
      %1359 = vmatprep.mubr.bf16.mxu0 0
      %1360 = vmatmul.mubr.bf16.gmra.mrb[0].mxu0 %v1159
      %v1361 = vpop.f32.mrb[0].mxu0
      %v1362 = vadd.f32 %v1205, %v1361
      %v1363 = vpop.f32.mrb[0].mxu0
      %v1364 = vpop.f32.mrb[0].mxu0
      %v1365 = vadd.f32 %v1205, %v1364
      %v1366 = vpop.f32.mrb[0].mxu0
      %1367 = vmatprep.mubr.bf16.mxu0 0
      %1368 = vmatmul.mubr.bf16.gmra.mrb[0].mxu0 %v1160
      %v1369 = vpop.f32.mrb[0].mxu0
      %v1370 = vadd.f32 %v1205, %v1369
      %v1371 = vpop.f32.mrb[0].mxu0
      %v1372 = vpop.f32.mrb[0].mxu0
      %v1373 = vadd.f32 %v1205, %v1372
      %v1374 = vpop.f32.mrb[0].mxu0
      %1375 = vmatprep.mubr.bf16.mxu0 0
      %1376 = vmatmul.mubr.bf16.gmra.mrb[0].mxu0 %v1161
      %v1377 = vpop.f32.mrb[0].mxu0
      %v1378 = vadd.f32 %v1205, %v1377
      %v1379 = vpop.f32.mrb[0].mxu0
      %v1380 = vpop.f32.mrb[0].mxu0
      %v1381 = vadd.f32 %v1205, %v1380
      %v1382 = vpop.f32.mrb[0].mxu0
      %1383 = vmatprep.mubr.bf16.mxu0 0
      %1384 = vmatmul.mubr.bf16.gmra.mrb[0].mxu0 %v1162
      %v1385 = vpop.f32.mrb[0].mxu0
      %v1386 = vadd.f32 %v1205, %v1385
      %v1387 = vpop.f32.mrb[0].mxu0
      %v1388 = vpop.f32.mrb[0].mxu0
      %v1389 = vadd.f32 %v1205, %v1388
      %v1390 = vpop.f32.mrb[0].mxu0
      %1391 = vmatprep.mubr.bf16.mxu0 0
      %1392 = vmatmul.mubr.bf16.gmra.mrb[0].mxu0 %v1163
      %v1393 = vpop.f32.mrb[0].mxu0
      %v1394 = vadd.f32 %v1205, %v1393
      %v1395 = vpop.f32.mrb[0].mxu0
      %v1396 = vpop.f32.mrb[0].mxu0
      %v1397 = vadd.f32 %v1205, %v1396
      %v1398 = vpop.f32.mrb[0].mxu0
      %1399 = vmatprep.mubr.bf16.mxu0 0
      %1400 = vmatmul.mubr.bf16.gmra.mrb[0].mxu0 %v1164
      %v1401 = vpop.f32.mrb[0].mxu0
      %v1402 = vadd.f32 %v1205, %v1401
      %v1403 = vpop.f32.mrb[0].mxu0
      %v1404 = vpop.f32.mrb[0].mxu0
      %v1405 = vadd.f32 %v1205, %v1404
      %v1406 = vpop.f32.mrb[0].mxu0
      %1407 = vmatprep.mubr.bf16.mxu0 0
      %1408 = vmatmul.mubr.bf16.gmra.mrb[0].mxu0 %v1165
      %v1409 = vpop.f32.mrb[0].mxu0
      %v1410 = vadd.f32 %v1205, %v1409
      %v1411 = vpop.f32.mrb[0].mxu0
      %v1412 = vpop.f32.mrb[0].mxu0
      %v1413 = vadd.f32 %v1205, %v1412
      %v1414 = vpop.f32.mrb[0].mxu0
      %1415 = vmatprep.mubr.bf16.mxu0 0
      %1416 = vmatmul.mubr.bf16.gmra.mrb[0].mxu0 %v1166
      %v1417 = vpop.f32.mrb[0].mxu0
      %v1418 = vadd.f32 %v1205, %v1417
      %v1419 = vpop.f32.mrb[0].mxu0
      %v1420 = vpop.f32.mrb[0].mxu0
      %v1421 = vadd.f32 %v1205, %v1420
      %v1422 = vpop.f32.mrb[0].mxu0
      %1423 = vmatprep.mubr.bf16.mxu0 0
      %1424 = vmatmul.mubr.bf16.gmra.mrb[0].mxu0 %v1167
      %v1425 = vpop.f32.mrb[0].mxu0
      %v1426 = vadd.f32 %v1205, %v1425
      %v1427 = vpop.f32.mrb[0].mxu0
      %v1428 = vpop.f32.mrb[0].mxu0
      %v1429 = vadd.f32 %v1205, %v1428
      %v1430 = vpop.f32.mrb[0].mxu0
      %1431 = vmatprep.mubr.bf16.mxu0 0
      %1432 = vmatmul.mubr.bf16.gmra.mrb[0].mxu0 %v1168
      %v1433 = vpop.f32.mrb[0].mxu0
      %v1434 = vadd.f32 %v1205, %v1433
      %v1435 = vpop.f32.mrb[0].mxu0
      %v1436 = vpop.f32.mrb[0].mxu0
      %v1437 = vadd.f32 %v1205, %v1436
      %v1438 = vpop.f32.mrb[0].mxu0
      %1439 = vmatprep.mubr.bf16.mxu0 0
      %1440 = vmatmul.mubr.bf16.gmra.mrb[0].mxu0 %v1169
      %v1441 = vpop.f32.mrb[0].mxu0
      %v1442 = vadd.f32 %v1205, %v1441
      %v1443 = vpop.f32.mrb[0].mxu0
      %v1444 = vpop.f32.mrb[0].mxu0
      %v1445 = vadd.f32 %v1205, %v1444
      %v1446 = vpop.f32.mrb[0].mxu0
      %1447 = vmatprep.mubr.bf16.mxu0 0
      %1448 = vmatmul.mubr.bf16.gmra.mrb[0].mxu0 %v1170
      %v1449 = vpop.f32.mrb[0].mxu0
      %v1450 = vadd.f32 %v1205, %v1449
      %v1451 = vpop.f32.mrb[0].mxu0
      %v1452 = vpop.f32.mrb[0].mxu0
      %v1453 = vadd.f32 %v1205, %v1452
      %v1454 = vpop.f32.mrb[0].mxu0
      %1455 = vmatprep.mubr.bf16.mxu0 0
      %1456 = vmatmul.mubr.bf16.gmra.mrb[0].mxu0 %v1171
      %v1457 = vpop.f32.mrb[0].mxu0
      %v1458 = vadd.f32 %v1205, %v1457
      %v1459 = vpop.f32.mrb[0].mxu0
      %v1460 = vpop.f32.mrb[0].mxu0
      %v1461 = vadd.f32 %v1205, %v1460
      %v1462 = vpop.f32.mrb[0].mxu0
      %1463 = vmatprep.mubr.bf16.mxu0 0
      %1464 = vmatmul.mubr.bf16.gmra.mrb[0].mxu0 %v1172
      %v1465 = vpop.f32.mrb[0].mxu0
      %v1466 = vadd.f32 %v1205, %v1465
      %v1467 = vpop.f32.mrb[0].mxu0
      %v1468 = vpop.f32.mrb[0].mxu0
      %v1469 = vadd.f32 %v1205, %v1468
      %v1470 = vpop.f32.mrb[0].mxu0
      %1471 = vmatprep.mubr.bf16.mxu0 0
      %1472 = vmatmul.mubr.bf16.gmra.mrb[0].mxu0 %v1173
      %v1473 = vpop.f32.mrb[0].mxu0
      %v1474 = vadd.f32 %v1205, %v1473
      %v1475 = vpop.f32.mrb[0].mxu0
      %v1476 = vpop.f32.mrb[0].mxu0
      %v1477 = vadd.f32 %v1205, %v1476
      %v1478 = vpop.f32.mrb[0].mxu0
      %1479 = vmatprep.mubr.bf16.mxu0 0
      %1480 = vmatmul.mubr.bf16.gmra.mrb[0].mxu0 %v1174
      %v1481 = vpop.f32.mrb[0].mxu0
      %v1482 = vadd.f32 %v1205, %v1481
      %v1483 = vpop.f32.mrb[0].mxu0
      %v1484 = vpop.f32.mrb[0].mxu0
      %v1485 = vadd.f32 %v1205, %v1484
      %v1486 = vpop.f32.mrb[0].mxu0
      %1487 = vmatprep.mubr.bf16.mxu0 0
      %1488 = vmatmul.mubr.bf16.gmra.mrb[0].mxu0 %v1175
      %v1489 = vpop.f32.mrb[0].mxu0
      %v1490 = vadd.f32 %v1205, %v1489
      %v1491 = vpop.f32.mrb[0].mxu0
      %v1492 = vpop.f32.mrb[0].mxu0
      %v1493 = vadd.f32 %v1205, %v1492
      %v1494 = vpop.f32.mrb[0].mxu0
      %1495 = vmatprep.mubr.bf16.mxu0 0
      %1496 = vmatmul.mubr.bf16.gmra.mrb[0].mxu0 %v1176
      %v1497 = vpop.f32.mrb[0].mxu0
      %v1498 = vadd.f32 %v1205, %v1497
      %v1499 = vpop.f32.mrb[0].mxu0
      %v1500 = vpop.f32.mrb[0].mxu0
      %v1501 = vadd.f32 %v1205, %v1500
      %v1502 = vpop.f32.mrb[0].mxu0
      %1503 = vmatprep.mubr.bf16.mxu0 0
      %1504 = vmatmul.mubr.bf16.gmra.mrb[0].mxu0 %v1177
      %v1505 = vpop.f32.mrb[0].mxu0
      %v1506 = vadd.f32 %v1205, %v1505
      %v1507 = vpop.f32.mrb[0].mxu0
      %v1508 = vpop.f32.mrb[0].mxu0
      %v1509 = vadd.f32 %v1205, %v1508
      %v1510 = vpop.f32.mrb[0].mxu0
      %1511 = vmatprep.mubr.bf16.mxu0 0
      %1512 = vmatmul.mubr.bf16.gmra.mrb[0].mxu0 %v1178
      %v1513 = vpop.f32.mrb[0].mxu0
      %v1514 = vadd.f32 %v1205, %v1513
      %v1515 = vpop.f32.mrb[0].mxu0
      %v1516 = vpop.f32.mrb[0].mxu0
      %v1517 = vadd.f32 %v1205, %v1516
      %v1518 = vpop.f32.mrb[0].mxu0
      %1519 = vmatprep.mubr.bf16.mxu0 0
      %1520 = vmatmul.mubr.bf16.gmra.mrb[0].mxu0 %v1179
      %v1521 = vpop.f32.mrb[0].mxu0
      %v1522 = vadd.f32 %v1205, %v1521
      %v1523 = vpop.f32.mrb[0].mxu0
      %v1524 = vpop.f32.mrb[0].mxu0
      %v1525 = vadd.f32 %v1205, %v1524
      %v1526 = vpop.f32.mrb[0].mxu0
      %1527 = vmatprep.mubr.bf16.mxu0 0
      %1528 = vmatmul.mubr.bf16.gmra.mrb[0].mxu0 %v1180
      %v1529 = vpop.f32.mrb[0].mxu0
      %v1530 = vadd.f32 %v1205, %v1529
      %v1531 = vpop.f32.mrb[0].mxu0
      %v1532 = vpop.f32.mrb[0].mxu0
      %v1533 = vadd.f32 %v1205, %v1532
      %v1534 = vpop.f32.mrb[0].mxu0
      %1535 = vmatprep.mubr.bf16.mxu0 0
      %1536 = vmatmul.mubr.bf16.gmra.mrb[0].mxu0 %v1181
      %v1537 = vpop.f32.mrb[0].mxu0
      %v1538 = vadd.f32 %v1205, %v1537
      %v1539 = vpop.f32.mrb[0].mxu0
      %v1540 = vpop.f32.mrb[0].mxu0
      %v1541 = vadd.f32 %v1205, %v1540
      %v1542 = vpop.f32.mrb[0].mxu0
      %1543 = vdwg.mxu0
      %v1544 = vmax.f32 %v1290, 0.0
      %v1545 = vmax.f32 %v1293, 0.0
      %v1546 = vmax.f32 %v1298, 0.0
      %v1547 = vmax.f32 %v1301, 0.0
      %v1548 = vmax.f32 %v1306, 0.0
      %v1549 = vmax.f32 %v1309, 0.0
      %v1550 = vmax.f32 %v1314, 0.0
      %v1551 = vmax.f32 %v1317, 0.0
      %v1552 = vmax.f32 %v1322, 0.0
      %v1553 = vmax.f32 %v1325, 0.0
      %v1554 = vmax.f32 %v1330, 0.0
      %v1555 = vmax.f32 %v1333, 0.0
      %v1556 = vmax.f32 %v1338, 0.0
      %v1557 = vmax.f32 %v1341, 0.0
      %v1558 = vmax.f32 %v1346, 0.0
      %v1559 = vmax.f32 %v1349, 0.0
      %v1560 = vmax.f32 %v1354, 0.0
      %v1561 = vmax.f32 %v1357, 0.0
      %v1562 = vmax.f32 %v1362, 0.0
      %v1563 = vmax.f32 %v1365, 0.0
      %v1564 = vmax.f32 %v1370, 0.0
      %v1565 = vmax.f32 %v1373, 0.0
      %v1566 = vmax.f32 %v1378, 0.0
      %v1567 = vmax.f32 %v1381, 0.0
      %v1568 = vmax.f32 %v1386, 0.0
      %v1569 = vmax.f32 %v1389, 0.0
      %v1570 = vmax.f32 %v1394, 0.0
      %v1571 = vmax.f32 %v1397, 0.0
      %v1572 = vmax.f32 %v1402, 0.0
      %v1573 = vmax.f32 %v1405, 0.0
      %v1574 = vmax.f32 %v1410, 0.0
      %v1575 = vmax.f32 %v1413, 0.0
      %v1576 = vmax.f32 %v1418, 0.0
      %v1577 = vmax.f32 %v1421, 0.0
      %v1578 = vmax.f32 %v1426, 0.0
      %v1579 = vmax.f32 %v1429, 0.0
      %v1580 = vmax.f32 %v1434, 0.0
      %v1581 = vmax.f32 %v1437, 0.0
      %v1582 = vmax.f32 %v1442, 0.0
      %v1583 = vmax.f32 %v1445, 0.0
      %v1584 = vmax.f32 %v1450, 0.0
      %v1585 = vmax.f32 %v1453, 0.0
      %v1586 = vmax.f32 %v1458, 0.0
      %v1587 = vmax.f32 %v1461, 0.0
      %v1588 = vmax.f32 %v1466, 0.0
      %v1589 = vmax.f32 %v1469, 0.0
      %v1590 = vmax.f32 %v1474, 0.0
      %v1591 = vmax.f32 %v1477, 0.0
      %v1592 = vmax.f32 %v1482, 0.0
      %v1593 = vmax.f32 %v1485, 0.0
      %v1594 = vmax.f32 %v1490, 0.0
      %v1595 = vmax.f32 %v1493, 0.0
      %v1596 = vmax.f32 %v1498, 0.0
      %v1597 = vmax.f32 %v1501, 0.0
      %v1598 = vmax.f32 %v1506, 0.0
      %v1599 = vmax.f32 %v1509, 0.0
      %v1600 = vmax.f32 %v1514, 0.0
      %v1601 = vmax.f32 %v1517, 0.0
      %v1602 = vmax.f32 %v1522, 0.0
      %v1603 = vmax.f32 %v1525, 0.0
      %v1604 = vmax.f32 %v1530, 0.0
      %v1605 = vmax.f32 %v1533, 0.0
      %v1606 = vmax.f32 %v1538, 0.0
      %v1607 = vmax.f32 %v1541, 0.0
      %v1608 = vmul.f32 %v1544, %v406
      %v1609 = vmul.f32 %v1545, %v407
      %v1610 = vmul.f32 %v1546, %v408
      %v1611 = vmul.f32 %v1547, %v409
      %v1612 = vmul.f32 %v1548, %v410
      %v1613 = vmul.f32 %v1549, %v411
      %v1614 = vmul.f32 %v1550, %v412
      %v1615 = vmul.f32 %v1551, %v413
      %v1616 = vmul.f32 %v1552, %v414
      %v1617 = vmul.f32 %v1553, %v415
      %v1618 = vmul.f32 %v1554, %v416
      %v1619 = vmul.f32 %v1555, %v417
      %v1620 = vmul.f32 %v1556, %v418
      %v1621 = vmul.f32 %v1557, %v419
      %v1622 = vmul.f32 %v1558, %v420
      %v1623 = vmul.f32 %v1559, %v421
      %v1624 = vmul.f32 %v1560, %v422
      %v1625 = vmul.f32 %v1561, %v423
      %v1626 = vmul.f32 %v1562, %v424
      %v1627 = vmul.f32 %v1563, %v425
      %v1628 = vmul.f32 %v1564, %v426
      %v1629 = vmul.f32 %v1565, %v427
      %v1630 = vmul.f32 %v1566, %v428
      %v1631 = vmul.f32 %v1567, %v429
      %v1632 = vmul.f32 %v1568, %v430
      %v1633 = vmul.f32 %v1569, %v431
      %v1634 = vmul.f32 %v1570, %v432
      %v1635 = vmul.f32 %v1571, %v433
      %v1636 = vmul.f32 %v1572, %v434
      %v1637 = vmul.f32 %v1573, %v435
      %v1638 = vmul.f32 %v1574, %v436
      %v1639 = vmul.f32 %v1575, %v437
      %v1640 = vmul.f32 %v1576, %v438
      %v1641 = vmul.f32 %v1577, %v439
      %v1642 = vmul.f32 %v1578, %v440
      %v1643 = vmul.f32 %v1579, %v441
      %v1644 = vmul.f32 %v1580, %v442
      %v1645 = vmul.f32 %v1581, %v443
      %v1646 = vmul.f32 %v1582, %v444
      %v1647 = vmul.f32 %v1583, %v445
      %v1648 = vmul.f32 %v1584, %v446
      %v1649 = vmul.f32 %v1585, %v447
      %v1650 = vmul.f32 %v1586, %v448
      %v1651 = vmul.f32 %v1587, %v449
      %v1652 = vmul.f32 %v1588, %v450
      %v1653 = vmul.f32 %v1589, %v451
      %v1654 = vmul.f32 %v1590, %v452
      %v1655 = vmul.f32 %v1591, %v453
      %v1656 = vmul.f32 %v1592, %v454
      %v1657 = vmul.f32 %v1593, %v455
      %v1658 = vmul.f32 %v1594, %v456
      %v1659 = vmul.f32 %v1595, %v457
      %v1660 = vmul.f32 %v1596, %v458
      %v1661 = vmul.f32 %v1597, %v459
      %v1662 = vmul.f32 %v1598, %v460
      %v1663 = vmul.f32 %v1599, %v461
      %v1664 = vmul.f32 %v1600, %v462
      %v1665 = vmul.f32 %v1601, %v463
      %v1666 = vmul.f32 %v1602, %v464
      %v1667 = vmul.f32 %v1603, %v465
      %v1668 = vmul.f32 %v1604, %v466
      %v1669 = vmul.f32 %v1605, %v467
      %v1670 = vmul.f32 %v1606, %v468
      %v1671 = vmul.f32 %v1607, %v469
      %v1672 = vpack.c.bf16 %v1609, %v1608
      %v1673 = vpack.c.bf16 %v1611, %v1610
      %v1674 = vpack.c.bf16 %v1613, %v1612
      %v1675 = vpack.c.bf16 %v1615, %v1614
      %v1676 = vpack.c.bf16 %v1617, %v1616
      %v1677 = vpack.c.bf16 %v1619, %v1618
      %v1678 = vpack.c.bf16 %v1621, %v1620
      %v1679 = vpack.c.bf16 %v1623, %v1622
      %v1680 = vpack.c.bf16 %v1625, %v1624
      %v1681 = vpack.c.bf16 %v1627, %v1626
      %v1682 = vpack.c.bf16 %v1629, %v1628
      %v1683 = vpack.c.bf16 %v1631, %v1630
      %v1684 = vpack.c.bf16 %v1633, %v1632
      %v1685 = vpack.c.bf16 %v1635, %v1634
      %v1686 = vpack.c.bf16 %v1637, %v1636
      %v1687 = vpack.c.bf16 %v1639, %v1638
      %v1688 = vpack.c.bf16 %v1641, %v1640
      %v1689 = vpack.c.bf16 %v1643, %v1642
      %v1690 = vpack.c.bf16 %v1645, %v1644
      %v1691 = vpack.c.bf16 %v1647, %v1646
      %v1692 = vpack.c.bf16 %v1649, %v1648
      %v1693 = vpack.c.bf16 %v1651, %v1650
      %v1694 = vpack.c.bf16 %v1653, %v1652
      %v1695 = vpack.c.bf16 %v1655, %v1654
      %v1696 = vpack.c.bf16 %v1657, %v1656
      %v1697 = vpack.c.bf16 %v1659, %v1658
      %v1698 = vpack.c.bf16 %v1661, %v1660
      %v1699 = vpack.c.bf16 %v1663, %v1662
      %v1700 = vpack.c.bf16 %v1665, %v1664
      %v1701 = vpack.c.bf16 %v1667, %v1666
      %v1702 = vpack.c.bf16 %v1669, %v1668
      %v1703 = vpack.c.bf16 %v1671, %v1670
      %s1704 = scalar_lea.vmem %s2, 128
      %v1705 = vld [vmem:[%s1704] sm:$0xf]
      %v1706 = vld [vmem:[%s1704 + $0x4] sm:$0xf]
      %v1707 = vld [vmem:[%s1704 + $0x8] sm:$0xf]
      %v1708 = vld [vmem:[%s1704 + $0xc] sm:$0xf]
      %v1709 = vld [vmem:[%s1704 + $0x10] sm:$0xf]
      %v1710 = vld [vmem:[%s1704 + $0x14] sm:$0xf]
      %v1711 = vld [vmem:[%s1704 + $0x18] sm:$0xf]
      %v1712 = vld [vmem:[%s1704 + $0x1c] sm:$0xf]
      %v1713 = vld [vmem:[%s1704 + $0x20] sm:$0xf]
      %v1714 = vld [vmem:[%s1704 + $0x24] sm:$0xf]
      %v1715 = vld [vmem:[%s1704 + $0x28] sm:$0xf]
      %v1716 = vld [vmem:[%s1704 + $0x2c] sm:$0xf]
      %v1717 = vld [vmem:[%s1704 + $0x30] sm:$0xf]
      %v1718 = vld [vmem:[%s1704 + $0x34] sm:$0xf]
      %v1719 = vld [vmem:[%s1704 + $0x38] sm:$0xf]
      %v1720 = vld [vmem:[%s1704 + $0x3c] sm:$0xf]
      %s1721 = scalar_lea.vmem %s3, 2
      %v1722 = vld [vmem:[%s1721] sm:$0x1]
      %v1724 = vlaneseq
      %v1725 = vshrl.u32 %v1724, 7
      %v1726 = vsub.s32 0, %v1725
      %v1727 = vrot.slane %v1722, %v1726
      %v1745 = vunpack.c.l.b16 %v1705
      %v1746 = vunpack.c.l.b16 %v1706
      %v1747 = vunpack.c.l.b16 %v1707
      %v1748 = vunpack.c.l.b16 %v1708
      %v1749 = vunpack.c.l.b16 %v1709
      %v1750 = vunpack.c.l.b16 %v1710
      %v1751 = vunpack.c.l.b16 %v1711
      %v1752 = vunpack.c.l.b16 %v1712
      %v1753 = vunpack.c.l.b16 %v1713
      %v1754 = vunpack.c.l.b16 %v1714
      %v1755 = vunpack.c.l.b16 %v1715
      %v1756 = vunpack.c.l.b16 %v1716
      %v1757 = vunpack.c.l.b16 %v1717
      %v1758 = vunpack.c.l.b16 %v1718
      %v1759 = vunpack.c.l.b16 %v1719
      %v1760 = vunpack.c.l.b16 %v1720
      %v1761 = vpack.c.b16 %v1746, %v1745
      %v1762 = vpack.c.b16 %v1748, %v1747
      %v1763 = vpack.c.b16 %v1750, %v1749
      %v1764 = vpack.c.b16 %v1752, %v1751
      %v1765 = vpack.c.b16 %v1754, %v1753
      %v1766 = vpack.c.b16 %v1756, %v1755
      %v1767 = vpack.c.b16 %v1758, %v1757
      %v1768 = vpack.c.b16 %v1760, %v1759
      %1777 = vmatprep.subr.bf16.mxu0 0
      %1778 = vmatpush1.bf16.msra.mxu0 %v1761
      %1779 = vmatprep.subr.bf16.mxu0 0
      %1780 = vmatpush1.bf16.msra.mxu0 %v1762
      %1781 = vmatprep.subr.bf16.mxu0 0
      %1782 = vmatpush1.bf16.msra.mxu0 %v1763
      %1783 = vmatprep.subr.bf16.mxu0 0
      %1784 = vmatpush1.bf16.msra.mxu0 %v1764
      %1785 = vmatprep.subr.bf16.mxu0 0
      %1786 = vmatpush1.bf16.msra.mxu0 %v1765
      %1787 = vmatprep.subr.bf16.mxu0 0
      %1788 = vmatpush1.bf16.msra.mxu0 %v1766
      %1789 = vmatprep.subr.bf16.mxu0 0
      %1790 = vmatpush1.bf16.msra.mxu0 %v1767
      %1791 = vmatprep.subr.bf16.mxu0 0
      %1792 = vmatpush1.bf16.msra.mxu0 %v1768
      %1793 = vmatprep.subr.bf16.mxu0 0
      %1794 = vmatpush1.bf16.msra.mxu0 0
      %1795 = vmatprep.subr.bf16.mxu0 0
      %1796 = vmatpush1.bf16.msra.mxu0 0
      %1797 = vmatprep.subr.bf16.mxu0 0
      %1798 = vmatpush1.bf16.msra.mxu0 0
      %1799 = vmatprep.subr.bf16.mxu0 0
      %1800 = vmatpush1.bf16.msra.mxu0 0
      %1801 = vmatprep.subr.bf16.mxu0 0
      %1802 = vmatpush1.bf16.msra.mxu0 0
      %1803 = vmatprep.subr.bf16.mxu0 0
      %1804 = vmatpush1.bf16.msra.mxu0 0
      %1805 = vmatprep.subr.bf16.mxu0 0
      %1806 = vmatpush1.bf16.msra.mxu0 0
      %1807 = vmatprep.subr.bf16.mxu0 0
      %1808 = vmatpush1.bf16.msra.mxu0 0
      %1809 = vmatprep.mubr.bf16.mxu0 0
      %1810 = vmatmul.mubr.bf16.gmra.mrb[0].mxu0 %v1672
      %v1811 = vpop.f32.mrb[0].mxu0
      %v1812 = vadd.f32 %v1727, %v1811
      %v1813 = vpop.f32.mrb[0].mxu0
      %v1814 = vpop.f32.mrb[0].mxu0
      %v1815 = vadd.f32 %v1727, %v1814
      %v1816 = vpop.f32.mrb[0].mxu0
      %1817 = vmatprep.mubr.bf16.mxu0 0
      %1818 = vmatmul.mubr.bf16.gmra.mrb[0].mxu0 %v1673
      %v1819 = vpop.f32.mrb[0].mxu0
      %v1820 = vadd.f32 %v1727, %v1819
      %v1821 = vpop.f32.mrb[0].mxu0
      %v1822 = vpop.f32.mrb[0].mxu0
      %v1823 = vadd.f32 %v1727, %v1822
      %v1824 = vpop.f32.mrb[0].mxu0
      %1825 = vmatprep.mubr.bf16.mxu0 0
      %1826 = vmatmul.mubr.bf16.gmra.mrb[0].mxu0 %v1674
      %v1827 = vpop.f32.mrb[0].mxu0
      %v1828 = vadd.f32 %v1727, %v1827
      %v1829 = vpop.f32.mrb[0].mxu0
      %v1830 = vpop.f32.mrb[0].mxu0
      %v1831 = vadd.f32 %v1727, %v1830
      %v1832 = vpop.f32.mrb[0].mxu0
      %1833 = vmatprep.mubr.bf16.mxu0 0
      %1834 = vmatmul.mubr.bf16.gmra.mrb[0].mxu0 %v1675
      %v1835 = vpop.f32.mrb[0].mxu0
      %v1836 = vadd.f32 %v1727, %v1835
      %v1837 = vpop.f32.mrb[0].mxu0
      %v1838 = vpop.f32.mrb[0].mxu0
      %v1839 = vadd.f32 %v1727, %v1838
      %v1840 = vpop.f32.mrb[0].mxu0
      %1841 = vmatprep.mubr.bf16.mxu0 0
      %1842 = vmatmul.mubr.bf16.gmra.mrb[0].mxu0 %v1676
      %v1843 = vpop.f32.mrb[0].mxu0
      %v1844 = vadd.f32 %v1727, %v1843
      %v1845 = vpop.f32.mrb[0].mxu0
      %v1846 = vpop.f32.mrb[0].mxu0
      %v1847 = vadd.f32 %v1727, %v1846
      %v1848 = vpop.f32.mrb[0].mxu0
      %1849 = vmatprep.mubr.bf16.mxu0 0
      %1850 = vmatmul.mubr.bf16.gmra.mrb[0].mxu0 %v1677
      %v1851 = vpop.f32.mrb[0].mxu0
      %v1852 = vadd.f32 %v1727, %v1851
      %v1853 = vpop.f32.mrb[0].mxu0
      %v1854 = vpop.f32.mrb[0].mxu0
      %v1855 = vadd.f32 %v1727, %v1854
      %v1856 = vpop.f32.mrb[0].mxu0
      %1857 = vmatprep.mubr.bf16.mxu0 0
      %1858 = vmatmul.mubr.bf16.gmra.mrb[0].mxu0 %v1678
      %v1859 = vpop.f32.mrb[0].mxu0
      %v1860 = vadd.f32 %v1727, %v1859
      %v1861 = vpop.f32.mrb[0].mxu0
      %v1862 = vpop.f32.mrb[0].mxu0
      %v1863 = vadd.f32 %v1727, %v1862
      %v1864 = vpop.f32.mrb[0].mxu0
      %1865 = vmatprep.mubr.bf16.mxu0 0
      %1866 = vmatmul.mubr.bf16.gmra.mrb[0].mxu0 %v1679
      %v1867 = vpop.f32.mrb[0].mxu0
      %v1868 = vadd.f32 %v1727, %v1867
      %v1869 = vpop.f32.mrb[0].mxu0
      %v1870 = vpop.f32.mrb[0].mxu0
      %v1871 = vadd.f32 %v1727, %v1870
      %v1872 = vpop.f32.mrb[0].mxu0
      %1873 = vmatprep.mubr.bf16.mxu0 0
      %1874 = vmatmul.mubr.bf16.gmra.mrb[0].mxu0 %v1680
      %v1875 = vpop.f32.mrb[0].mxu0
      %v1876 = vadd.f32 %v1727, %v1875
      %v1877 = vpop.f32.mrb[0].mxu0
      %v1878 = vpop.f32.mrb[0].mxu0
      %v1879 = vadd.f32 %v1727, %v1878
      %v1880 = vpop.f32.mrb[0].mxu0
      %1881 = vmatprep.mubr.bf16.mxu0 0
      %1882 = vmatmul.mubr.bf16.gmra.mrb[0].mxu0 %v1681
      %v1883 = vpop.f32.mrb[0].mxu0
      %v1884 = vadd.f32 %v1727, %v1883
      %v1885 = vpop.f32.mrb[0].mxu0
      %v1886 = vpop.f32.mrb[0].mxu0
      %v1887 = vadd.f32 %v1727, %v1886
      %v1888 = vpop.f32.mrb[0].mxu0
      %1889 = vmatprep.mubr.bf16.mxu0 0
      %1890 = vmatmul.mubr.bf16.gmra.mrb[0].mxu0 %v1682
      %v1891 = vpop.f32.mrb[0].mxu0
      %v1892 = vadd.f32 %v1727, %v1891
      %v1893 = vpop.f32.mrb[0].mxu0
      %v1894 = vpop.f32.mrb[0].mxu0
      %v1895 = vadd.f32 %v1727, %v1894
      %v1896 = vpop.f32.mrb[0].mxu0
      %1897 = vmatprep.mubr.bf16.mxu0 0
      %1898 = vmatmul.mubr.bf16.gmra.mrb[0].mxu0 %v1683
      %v1899 = vpop.f32.mrb[0].mxu0
      %v1900 = vadd.f32 %v1727, %v1899
      %v1901 = vpop.f32.mrb[0].mxu0
      %v1902 = vpop.f32.mrb[0].mxu0
      %v1903 = vadd.f32 %v1727, %v1902
      %v1904 = vpop.f32.mrb[0].mxu0
      %1905 = vmatprep.mubr.bf16.mxu0 0
      %1906 = vmatmul.mubr.bf16.gmra.mrb[0].mxu0 %v1684
      %v1907 = vpop.f32.mrb[0].mxu0
      %v1908 = vadd.f32 %v1727, %v1907
      %v1909 = vpop.f32.mrb[0].mxu0
      %v1910 = vpop.f32.mrb[0].mxu0
      %v1911 = vadd.f32 %v1727, %v1910
      %v1912 = vpop.f32.mrb[0].mxu0
      %1913 = vmatprep.mubr.bf16.mxu0 0
      %1914 = vmatmul.mubr.bf16.gmra.mrb[0].mxu0 %v1685
      %v1915 = vpop.f32.mrb[0].mxu0
      %v1916 = vadd.f32 %v1727, %v1915
      %v1917 = vpop.f32.mrb[0].mxu0
      %v1918 = vpop.f32.mrb[0].mxu0
      %v1919 = vadd.f32 %v1727, %v1918
      %v1920 = vpop.f32.mrb[0].mxu0
      %1921 = vmatprep.mubr.bf16.mxu0 0
      %1922 = vmatmul.mubr.bf16.gmra.mrb[0].mxu0 %v1686
      %v1923 = vpop.f32.mrb[0].mxu0
      %v1924 = vadd.f32 %v1727, %v1923
      %v1925 = vpop.f32.mrb[0].mxu0
      %v1926 = vpop.f32.mrb[0].mxu0
      %v1927 = vadd.f32 %v1727, %v1926
      %v1928 = vpop.f32.mrb[0].mxu0
      %1929 = vmatprep.mubr.bf16.mxu0 0
      %1930 = vmatmul.mubr.bf16.gmra.mrb[0].mxu0 %v1687
      %v1931 = vpop.f32.mrb[0].mxu0
      %v1932 = vadd.f32 %v1727, %v1931
      %v1933 = vpop.f32.mrb[0].mxu0
      %v1934 = vpop.f32.mrb[0].mxu0
      %v1935 = vadd.f32 %v1727, %v1934
      %v1936 = vpop.f32.mrb[0].mxu0
      %1937 = vmatprep.mubr.bf16.mxu0 0
      %1938 = vmatmul.mubr.bf16.gmra.mrb[0].mxu0 %v1688
      %v1939 = vpop.f32.mrb[0].mxu0
      %v1940 = vadd.f32 %v1727, %v1939
      %v1941 = vpop.f32.mrb[0].mxu0
      %v1942 = vpop.f32.mrb[0].mxu0
      %v1943 = vadd.f32 %v1727, %v1942
      %v1944 = vpop.f32.mrb[0].mxu0
      %1945 = vmatprep.mubr.bf16.mxu0 0
      %1946 = vmatmul.mubr.bf16.gmra.mrb[0].mxu0 %v1689
      %v1947 = vpop.f32.mrb[0].mxu0
      %v1948 = vadd.f32 %v1727, %v1947
      %v1949 = vpop.f32.mrb[0].mxu0
      %v1950 = vpop.f32.mrb[0].mxu0
      %v1951 = vadd.f32 %v1727, %v1950
      %v1952 = vpop.f32.mrb[0].mxu0
      %1953 = vmatprep.mubr.bf16.mxu0 0
      %1954 = vmatmul.mubr.bf16.gmra.mrb[0].mxu0 %v1690
      %v1955 = vpop.f32.mrb[0].mxu0
      %v1956 = vadd.f32 %v1727, %v1955
      %v1957 = vpop.f32.mrb[0].mxu0
      %v1958 = vpop.f32.mrb[0].mxu0
      %v1959 = vadd.f32 %v1727, %v1958
      %v1960 = vpop.f32.mrb[0].mxu0
      %1961 = vmatprep.mubr.bf16.mxu0 0
      %1962 = vmatmul.mubr.bf16.gmra.mrb[0].mxu0 %v1691
      %v1963 = vpop.f32.mrb[0].mxu0
      %v1964 = vadd.f32 %v1727, %v1963
      %v1965 = vpop.f32.mrb[0].mxu0
      %v1966 = vpop.f32.mrb[0].mxu0
      %v1967 = vadd.f32 %v1727, %v1966
      %v1968 = vpop.f32.mrb[0].mxu0
      %1969 = vmatprep.mubr.bf16.mxu0 0
      %1970 = vmatmul.mubr.bf16.gmra.mrb[0].mxu0 %v1692
      %v1971 = vpop.f32.mrb[0].mxu0
      %v1972 = vadd.f32 %v1727, %v1971
      %v1973 = vpop.f32.mrb[0].mxu0
      %v1974 = vpop.f32.mrb[0].mxu0
      %v1975 = vadd.f32 %v1727, %v1974
      %v1976 = vpop.f32.mrb[0].mxu0
      %1977 = vmatprep.mubr.bf16.mxu0 0
      %1978 = vmatmul.mubr.bf16.gmra.mrb[0].mxu0 %v1693
      %v1979 = vpop.f32.mrb[0].mxu0
      %v1980 = vadd.f32 %v1727, %v1979
      %v1981 = vpop.f32.mrb[0].mxu0
      %v1982 = vpop.f32.mrb[0].mxu0
      %v1983 = vadd.f32 %v1727, %v1982
      %v1984 = vpop.f32.mrb[0].mxu0
      %1985 = vmatprep.mubr.bf16.mxu0 0
      %1986 = vmatmul.mubr.bf16.gmra.mrb[0].mxu0 %v1694
      %v1987 = vpop.f32.mrb[0].mxu0
      %v1988 = vadd.f32 %v1727, %v1987
      %v1989 = vpop.f32.mrb[0].mxu0
      %v1990 = vpop.f32.mrb[0].mxu0
      %v1991 = vadd.f32 %v1727, %v1990
      %v1992 = vpop.f32.mrb[0].mxu0
      %1993 = vmatprep.mubr.bf16.mxu0 0
      %1994 = vmatmul.mubr.bf16.gmra.mrb[0].mxu0 %v1695
      %v1995 = vpop.f32.mrb[0].mxu0
      %v1996 = vadd.f32 %v1727, %v1995
      %v1997 = vpop.f32.mrb[0].mxu0
      %v1998 = vpop.f32.mrb[0].mxu0
      %v1999 = vadd.f32 %v1727, %v1998
      %v2000 = vpop.f32.mrb[0].mxu0
      %2001 = vmatprep.mubr.bf16.mxu0 0
      %2002 = vmatmul.mubr.bf16.gmra.mrb[0].mxu0 %v1696
      %v2003 = vpop.f32.mrb[0].mxu0
      %v2004 = vadd.f32 %v1727, %v2003
      %v2005 = vpop.f32.mrb[0].mxu0
      %v2006 = vpop.f32.mrb[0].mxu0
      %v2007 = vadd.f32 %v1727, %v2006
      %v2008 = vpop.f32.mrb[0].mxu0
      %2009 = vmatprep.mubr.bf16.mxu0 0
      %2010 = vmatmul.mubr.bf16.gmra.mrb[0].mxu0 %v1697
      %v2011 = vpop.f32.mrb[0].mxu0
      %v2012 = vadd.f32 %v1727, %v2011
      %v2013 = vpop.f32.mrb[0].mxu0
      %v2014 = vpop.f32.mrb[0].mxu0
      %v2015 = vadd.f32 %v1727, %v2014
      %v2016 = vpop.f32.mrb[0].mxu0
      %2017 = vmatprep.mubr.bf16.mxu0 0
      %2018 = vmatmul.mubr.bf16.gmra.mrb[0].mxu0 %v1698
      %v2019 = vpop.f32.mrb[0].mxu0
      %v2020 = vadd.f32 %v1727, %v2019
      %v2021 = vpop.f32.mrb[0].mxu0
      %v2022 = vpop.f32.mrb[0].mxu0
      %v2023 = vadd.f32 %v1727, %v2022
      %v2024 = vpop.f32.mrb[0].mxu0
      %2025 = vmatprep.mubr.bf16.mxu0 0
      %2026 = vmatmul.mubr.bf16.gmra.mrb[0].mxu0 %v1699
      %v2027 = vpop.f32.mrb[0].mxu0
      %v2028 = vadd.f32 %v1727, %v2027
      %v2029 = vpop.f32.mrb[0].mxu0
      %v2030 = vpop.f32.mrb[0].mxu0
      %v2031 = vadd.f32 %v1727, %v2030
      %v2032 = vpop.f32.mrb[0].mxu0
      %2033 = vmatprep.mubr.bf16.mxu0 0
      %2034 = vmatmul.mubr.bf16.gmra.mrb[0].mxu0 %v1700
      %v2035 = vpop.f32.mrb[0].mxu0
      %v2036 = vadd.f32 %v1727, %v2035
      %v2037 = vpop.f32.mrb[0].mxu0
      %v2038 = vpop.f32.mrb[0].mxu0
      %v2039 = vadd.f32 %v1727, %v2038
      %v2040 = vpop.f32.mrb[0].mxu0
      %2041 = vmatprep.mubr.bf16.mxu0 0
      %2042 = vmatmul.mubr.bf16.gmra.mrb[0].mxu0 %v1701
      %v2043 = vpop.f32.mrb[0].mxu0
      %v2044 = vadd.f32 %v1727, %v2043
      %v2045 = vpop.f32.mrb[0].mxu0
      %v2046 = vpop.f32.mrb[0].mxu0
      %v2047 = vadd.f32 %v1727, %v2046
      %v2048 = vpop.f32.mrb[0].mxu0
      %2049 = vmatprep.mubr.bf16.mxu0 0
      %2050 = vmatmul.mubr.bf16.gmra.mrb[0].mxu0 %v1702
      %v2051 = vpop.f32.mrb[0].mxu0
      %v2052 = vadd.f32 %v1727, %v2051
      %v2053 = vpop.f32.mrb[0].mxu0
      %v2054 = vpop.f32.mrb[0].mxu0
      %v2055 = vadd.f32 %v1727, %v2054
      %v2056 = vpop.f32.mrb[0].mxu0
      %2057 = vmatprep.mubr.bf16.mxu0 0
      %2058 = vmatmul.mubr.bf16.gmra.mrb[0].mxu0 %v1703
      %v2059 = vpop.f32.mrb[0].mxu0
      %v2060 = vadd.f32 %v1727, %v2059
      %v2061 = vpop.f32.mrb[0].mxu0
      %v2062 = vpop.f32.mrb[0].mxu0
      %v2063 = vadd.f32 %v1727, %v2062
      %v2064 = vpop.f32.mrb[0].mxu0
      %2065 = vdwg.mxu0
      %v2066 = vmax.f32 %v1812, 0.0
      %v2067 = vmax.f32 %v1815, 0.0
      %v2068 = vmax.f32 %v1820, 0.0
      %v2069 = vmax.f32 %v1823, 0.0
      %v2070 = vmax.f32 %v1828, 0.0
      %v2071 = vmax.f32 %v1831, 0.0
      %v2072 = vmax.f32 %v1836, 0.0
      %v2073 = vmax.f32 %v1839, 0.0
      %v2074 = vmax.f32 %v1844, 0.0
      %v2075 = vmax.f32 %v1847, 0.0
      %v2076 = vmax.f32 %v1852, 0.0
      %v2077 = vmax.f32 %v1855, 0.0
      %v2078 = vmax.f32 %v1860, 0.0
      %v2079 = vmax.f32 %v1863, 0.0
      %v2080 = vmax.f32 %v1868, 0.0
      %v2081 = vmax.f32 %v1871, 0.0
      %v2082 = vmax.f32 %v1876, 0.0
      %v2083 = vmax.f32 %v1879, 0.0
      %v2084 = vmax.f32 %v1884, 0.0
      %v2085 = vmax.f32 %v1887, 0.0
      %v2086 = vmax.f32 %v1892, 0.0
      %v2087 = vmax.f32 %v1895, 0.0
      %v2088 = vmax.f32 %v1900, 0.0
      %v2089 = vmax.f32 %v1903, 0.0
      %v2090 = vmax.f32 %v1908, 0.0
      %v2091 = vmax.f32 %v1911, 0.0
      %v2092 = vmax.f32 %v1916, 0.0
      %v2093 = vmax.f32 %v1919, 0.0
      %v2094 = vmax.f32 %v1924, 0.0
      %v2095 = vmax.f32 %v1927, 0.0
      %v2096 = vmax.f32 %v1932, 0.0
      %v2097 = vmax.f32 %v1935, 0.0
      %v2098 = vmax.f32 %v1940, 0.0
      %v2099 = vmax.f32 %v1943, 0.0
      %v2100 = vmax.f32 %v1948, 0.0
      %v2101 = vmax.f32 %v1951, 0.0
      %v2102 = vmax.f32 %v1956, 0.0
      %v2103 = vmax.f32 %v1959, 0.0
      %v2104 = vmax.f32 %v1964, 0.0
      %v2105 = vmax.f32 %v1967, 0.0
      %v2106 = vmax.f32 %v1972, 0.0
      %v2107 = vmax.f32 %v1975, 0.0
      %v2108 = vmax.f32 %v1980, 0.0
      %v2109 = vmax.f32 %v1983, 0.0
      %v2110 = vmax.f32 %v1988, 0.0
      %v2111 = vmax.f32 %v1991, 0.0
      %v2112 = vmax.f32 %v1996, 0.0
      %v2113 = vmax.f32 %v1999, 0.0
      %v2114 = vmax.f32 %v2004, 0.0
      %v2115 = vmax.f32 %v2007, 0.0
      %v2116 = vmax.f32 %v2012, 0.0
      %v2117 = vmax.f32 %v2015, 0.0
      %v2118 = vmax.f32 %v2020, 0.0
      %v2119 = vmax.f32 %v2023, 0.0
      %v2120 = vmax.f32 %v2028, 0.0
      %v2121 = vmax.f32 %v2031, 0.0
      %v2122 = vmax.f32 %v2036, 0.0
      %v2123 = vmax.f32 %v2039, 0.0
      %v2124 = vmax.f32 %v2044, 0.0
      %v2125 = vmax.f32 %v2047, 0.0
      %v2126 = vmax.f32 %v2052, 0.0
      %v2127 = vmax.f32 %v2055, 0.0
      %v2128 = vmax.f32 %v2060, 0.0
      %v2129 = vmax.f32 %v2063, 0.0
      %v2130 = vmul.f32 %v2066, %v406
      %v2131 = vmul.f32 %v2067, %v407
      %v2132 = vmul.f32 %v2068, %v408
      %v2133 = vmul.f32 %v2069, %v409
      %v2134 = vmul.f32 %v2070, %v410
      %v2135 = vmul.f32 %v2071, %v411
      %v2136 = vmul.f32 %v2072, %v412
      %v2137 = vmul.f32 %v2073, %v413
      %v2138 = vmul.f32 %v2074, %v414
      %v2139 = vmul.f32 %v2075, %v415
      %v2140 = vmul.f32 %v2076, %v416
      %v2141 = vmul.f32 %v2077, %v417
      %v2142 = vmul.f32 %v2078, %v418
      %v2143 = vmul.f32 %v2079, %v419
      %v2144 = vmul.f32 %v2080, %v420
      %v2145 = vmul.f32 %v2081, %v421
      %v2146 = vmul.f32 %v2082, %v422
      %v2147 = vmul.f32 %v2083, %v423
      %v2148 = vmul.f32 %v2084, %v424
      %v2149 = vmul.f32 %v2085, %v425
      %v2150 = vmul.f32 %v2086, %v426
      %v2151 = vmul.f32 %v2087, %v427
      %v2152 = vmul.f32 %v2088, %v428
      %v2153 = vmul.f32 %v2089, %v429
      %v2154 = vmul.f32 %v2090, %v430
      %v2155 = vmul.f32 %v2091, %v431
      %v2156 = vmul.f32 %v2092, %v432
      %v2157 = vmul.f32 %v2093, %v433
      %v2158 = vmul.f32 %v2094, %v434
      %v2159 = vmul.f32 %v2095, %v435
      %v2160 = vmul.f32 %v2096, %v436
      %v2161 = vmul.f32 %v2097, %v437
      %v2162 = vmul.f32 %v2098, %v438
      %v2163 = vmul.f32 %v2099, %v439
      %v2164 = vmul.f32 %v2100, %v440
      %v2165 = vmul.f32 %v2101, %v441
      %v2166 = vmul.f32 %v2102, %v442
      %v2167 = vmul.f32 %v2103, %v443
      %v2168 = vmul.f32 %v2104, %v444
      %v2169 = vmul.f32 %v2105, %v445
      %v2170 = vmul.f32 %v2106, %v446
      %v2171 = vmul.f32 %v2107, %v447
      %v2172 = vmul.f32 %v2108, %v448
      %v2173 = vmul.f32 %v2109, %v449
      %v2174 = vmul.f32 %v2110, %v450
      %v2175 = vmul.f32 %v2111, %v451
      %v2176 = vmul.f32 %v2112, %v452
      %v2177 = vmul.f32 %v2113, %v453
      %v2178 = vmul.f32 %v2114, %v454
      %v2179 = vmul.f32 %v2115, %v455
      %v2180 = vmul.f32 %v2116, %v456
      %v2181 = vmul.f32 %v2117, %v457
      %v2182 = vmul.f32 %v2118, %v458
      %v2183 = vmul.f32 %v2119, %v459
      %v2184 = vmul.f32 %v2120, %v460
      %v2185 = vmul.f32 %v2121, %v461
      %v2186 = vmul.f32 %v2122, %v462
      %v2187 = vmul.f32 %v2123, %v463
      %v2188 = vmul.f32 %v2124, %v464
      %v2189 = vmul.f32 %v2125, %v465
      %v2190 = vmul.f32 %v2126, %v466
      %v2191 = vmul.f32 %v2127, %v467
      %v2192 = vmul.f32 %v2128, %v468
      %v2193 = vmul.f32 %v2129, %v469
      %v2194 = vpack.c.bf16 %v2131, %v2130
      %v2195 = vpack.c.bf16 %v2133, %v2132
      %v2196 = vpack.c.bf16 %v2135, %v2134
      %v2197 = vpack.c.bf16 %v2137, %v2136
      %v2198 = vpack.c.bf16 %v2139, %v2138
      %v2199 = vpack.c.bf16 %v2141, %v2140
      %v2200 = vpack.c.bf16 %v2143, %v2142
      %v2201 = vpack.c.bf16 %v2145, %v2144
      %v2202 = vpack.c.bf16 %v2147, %v2146
      %v2203 = vpack.c.bf16 %v2149, %v2148
      %v2204 = vpack.c.bf16 %v2151, %v2150
      %v2205 = vpack.c.bf16 %v2153, %v2152
      %v2206 = vpack.c.bf16 %v2155, %v2154
      %v2207 = vpack.c.bf16 %v2157, %v2156
      %v2208 = vpack.c.bf16 %v2159, %v2158
      %v2209 = vpack.c.bf16 %v2161, %v2160
      %v2210 = vpack.c.bf16 %v2163, %v2162
      %v2211 = vpack.c.bf16 %v2165, %v2164
      %v2212 = vpack.c.bf16 %v2167, %v2166
      %v2213 = vpack.c.bf16 %v2169, %v2168
      %v2214 = vpack.c.bf16 %v2171, %v2170
      %v2215 = vpack.c.bf16 %v2173, %v2172
      %v2216 = vpack.c.bf16 %v2175, %v2174
      %v2217 = vpack.c.bf16 %v2177, %v2176
      %v2218 = vpack.c.bf16 %v2179, %v2178
      %v2219 = vpack.c.bf16 %v2181, %v2180
      %v2220 = vpack.c.bf16 %v2183, %v2182
      %v2221 = vpack.c.bf16 %v2185, %v2184
      %v2222 = vpack.c.bf16 %v2187, %v2186
      %v2223 = vpack.c.bf16 %v2189, %v2188
      %v2224 = vpack.c.bf16 %v2191, %v2190
      %v2225 = vpack.c.bf16 %v2193, %v2192
      %s2226 = scalar_lea.vmem %s2, 192
      %v2227 = vld [vmem:[%s2226] sm:$0xf]
      %v2228 = vld [vmem:[%s2226 + $0x4] sm:$0xf]
      %v2229 = vld [vmem:[%s2226 + $0x8] sm:$0xf]
      %v2230 = vld [vmem:[%s2226 + $0xc] sm:$0xf]
      %v2231 = vld [vmem:[%s2226 + $0x10] sm:$0xf]
      %v2232 = vld [vmem:[%s2226 + $0x14] sm:$0xf]
      %v2233 = vld [vmem:[%s2226 + $0x18] sm:$0xf]
      %v2234 = vld [vmem:[%s2226 + $0x1c] sm:$0xf]
      %v2235 = vld [vmem:[%s2226 + $0x20] sm:$0xf]
      %v2236 = vld [vmem:[%s2226 + $0x24] sm:$0xf]
      %v2237 = vld [vmem:[%s2226 + $0x28] sm:$0xf]
      %v2238 = vld [vmem:[%s2226 + $0x2c] sm:$0xf]
      %v2239 = vld [vmem:[%s2226 + $0x30] sm:$0xf]
      %v2240 = vld [vmem:[%s2226 + $0x34] sm:$0xf]
      %v2241 = vld [vmem:[%s2226 + $0x38] sm:$0xf]
      %v2242 = vld [vmem:[%s2226 + $0x3c] sm:$0xf]
      %s2243 = scalar_lea.vmem %s3, 3
      %v2244 = vld [vmem:[%s2243] sm:$0x1]
      %v2246 = vlaneseq
      %v2247 = vshrl.u32 %v2246, 7
      %v2248 = vsub.s32 0, %v2247
      %v2249 = vrot.slane %v2244, %v2248
      %v2267 = vunpack.c.l.b16 %v2227
      %v2268 = vunpack.c.l.b16 %v2228
      %v2269 = vunpack.c.l.b16 %v2229
      %v2270 = vunpack.c.l.b16 %v2230
      %v2271 = vunpack.c.l.b16 %v2231
      %v2272 = vunpack.c.l.b16 %v2232
      %v2273 = vunpack.c.l.b16 %v2233
      %v2274 = vunpack.c.l.b16 %v2234
      %v2275 = vunpack.c.l.b16 %v2235
      %v2276 = vunpack.c.l.b16 %v2236
      %v2277 = vunpack.c.l.b16 %v2237
      %v2278 = vunpack.c.l.b16 %v2238
      %v2279 = vunpack.c.l.b16 %v2239
      %v2280 = vunpack.c.l.b16 %v2240
      %v2281 = vunpack.c.l.b16 %v2241
      %v2282 = vunpack.c.l.b16 %v2242
      %v2283 = vpack.c.b16 %v2268, %v2267
      %v2284 = vpack.c.b16 %v2270, %v2269
      %v2285 = vpack.c.b16 %v2272, %v2271
      %v2286 = vpack.c.b16 %v2274, %v2273
      %v2287 = vpack.c.b16 %v2276, %v2275
      %v2288 = vpack.c.b16 %v2278, %v2277
      %v2289 = vpack.c.b16 %v2280, %v2279
      %v2290 = vpack.c.b16 %v2282, %v2281
      %2299 = vmatprep.subr.bf16.mxu0 0
      %2300 = vmatpush1.bf16.msra.mxu0 %v2283
      %2301 = vmatprep.subr.bf16.mxu0 0
      %2302 = vmatpush1.bf16.msra.mxu0 %v2284
      %2303 = vmatprep.subr.bf16.mxu0 0
      %2304 = vmatpush1.bf16.msra.mxu0 %v2285
      %2305 = vmatprep.subr.bf16.mxu0 0
      %2306 = vmatpush1.bf16.msra.mxu0 %v2286
      %2307 = vmatprep.subr.bf16.mxu0 0
      %2308 = vmatpush1.bf16.msra.mxu0 %v2287
      %2309 = vmatprep.subr.bf16.mxu0 0
      %2310 = vmatpush1.bf16.msra.mxu0 %v2288
      %2311 = vmatprep.subr.bf16.mxu0 0
      %2312 = vmatpush1.bf16.msra.mxu0 %v2289
      %2313 = vmatprep.subr.bf16.mxu0 0
      %2314 = vmatpush1.bf16.msra.mxu0 %v2290
      %2315 = vmatprep.subr.bf16.mxu0 0
      %2316 = vmatpush1.bf16.msra.mxu0 0
      %2317 = vmatprep.subr.bf16.mxu0 0
      %2318 = vmatpush1.bf16.msra.mxu0 0
      %2319 = vmatprep.subr.bf16.mxu0 0
      %2320 = vmatpush1.bf16.msra.mxu0 0
      %2321 = vmatprep.subr.bf16.mxu0 0
      %2322 = vmatpush1.bf16.msra.mxu0 0
      %2323 = vmatprep.subr.bf16.mxu0 0
      %2324 = vmatpush1.bf16.msra.mxu0 0
      %2325 = vmatprep.subr.bf16.mxu0 0
      %2326 = vmatpush1.bf16.msra.mxu0 0
      %2327 = vmatprep.subr.bf16.mxu0 0
      %2328 = vmatpush1.bf16.msra.mxu0 0
      %2329 = vmatprep.subr.bf16.mxu0 0
      %2330 = vmatpush1.bf16.msra.mxu0 0
      %2331 = vmatprep.mubr.bf16.mxu0 0
      %2332 = vmatmul.mubr.bf16.gmra.mrb[0].mxu0 %v2194
      %v2333 = vpop.f32.mrb[0].mxu0
      %v2334 = vadd.f32 %v2249, %v2333
      %v2335 = vpop.f32.mrb[0].mxu0
      %v2336 = vpop.f32.mrb[0].mxu0
      %v2337 = vadd.f32 %v2249, %v2336
      %v2338 = vpop.f32.mrb[0].mxu0
      %2339 = vmatprep.mubr.bf16.mxu0 0
      %2340 = vmatmul.mubr.bf16.gmra.mrb[0].mxu0 %v2195
      %v2341 = vpop.f32.mrb[0].mxu0
      %v2342 = vadd.f32 %v2249, %v2341
      %v2343 = vpop.f32.mrb[0].mxu0
      %v2344 = vpop.f32.mrb[0].mxu0
      %v2345 = vadd.f32 %v2249, %v2344
      %v2346 = vpop.f32.mrb[0].mxu0
      %2347 = vmatprep.mubr.bf16.mxu0 0
      %2348 = vmatmul.mubr.bf16.gmra.mrb[0].mxu0 %v2196
      %v2349 = vpop.f32.mrb[0].mxu0
      %v2350 = vadd.f32 %v2249, %v2349
      %v2351 = vpop.f32.mrb[0].mxu0
      %v2352 = vpop.f32.mrb[0].mxu0
      %v2353 = vadd.f32 %v2249, %v2352
      %v2354 = vpop.f32.mrb[0].mxu0
      %2355 = vmatprep.mubr.bf16.mxu0 0
      %2356 = vmatmul.mubr.bf16.gmra.mrb[0].mxu0 %v2197
      %v2357 = vpop.f32.mrb[0].mxu0
      %v2358 = vadd.f32 %v2249, %v2357
      %v2359 = vpop.f32.mrb[0].mxu0
      %v2360 = vpop.f32.mrb[0].mxu0
      %v2361 = vadd.f32 %v2249, %v2360
      %v2362 = vpop.f32.mrb[0].mxu0
      %2363 = vmatprep.mubr.bf16.mxu0 0
      %2364 = vmatmul.mubr.bf16.gmra.mrb[0].mxu0 %v2198
      %v2365 = vpop.f32.mrb[0].mxu0
      %v2366 = vadd.f32 %v2249, %v2365
      %v2367 = vpop.f32.mrb[0].mxu0
      %v2368 = vpop.f32.mrb[0].mxu0
      %v2369 = vadd.f32 %v2249, %v2368
      %v2370 = vpop.f32.mrb[0].mxu0
      %2371 = vmatprep.mubr.bf16.mxu0 0
      %2372 = vmatmul.mubr.bf16.gmra.mrb[0].mxu0 %v2199
      %v2373 = vpop.f32.mrb[0].mxu0
      %v2374 = vadd.f32 %v2249, %v2373
      %v2375 = vpop.f32.mrb[0].mxu0
      %v2376 = vpop.f32.mrb[0].mxu0
      %v2377 = vadd.f32 %v2249, %v2376
      %v2378 = vpop.f32.mrb[0].mxu0
      %2379 = vmatprep.mubr.bf16.mxu0 0
      %2380 = vmatmul.mubr.bf16.gmra.mrb[0].mxu0 %v2200
      %v2381 = vpop.f32.mrb[0].mxu0
      %v2382 = vadd.f32 %v2249, %v2381
      %v2383 = vpop.f32.mrb[0].mxu0
      %v2384 = vpop.f32.mrb[0].mxu0
      %v2385 = vadd.f32 %v2249, %v2384
      %v2386 = vpop.f32.mrb[0].mxu0
      %2387 = vmatprep.mubr.bf16.mxu0 0
      %2388 = vmatmul.mubr.bf16.gmra.mrb[0].mxu0 %v2201
      %v2389 = vpop.f32.mrb[0].mxu0
      %v2390 = vadd.f32 %v2249, %v2389
      %v2391 = vpop.f32.mrb[0].mxu0
      %v2392 = vpop.f32.mrb[0].mxu0
      %v2393 = vadd.f32 %v2249, %v2392
      %v2394 = vpop.f32.mrb[0].mxu0
      %2395 = vmatprep.mubr.bf16.mxu0 0
      %2396 = vmatmul.mubr.bf16.gmra.mrb[0].mxu0 %v2202
      %v2397 = vpop.f32.mrb[0].mxu0
      %v2398 = vadd.f32 %v2249, %v2397
      %v2399 = vpop.f32.mrb[0].mxu0
      %v2400 = vpop.f32.mrb[0].mxu0
      %v2401 = vadd.f32 %v2249, %v2400
      %v2402 = vpop.f32.mrb[0].mxu0
      %2403 = vmatprep.mubr.bf16.mxu0 0
      %2404 = vmatmul.mubr.bf16.gmra.mrb[0].mxu0 %v2203
      %v2405 = vpop.f32.mrb[0].mxu0
      %v2406 = vadd.f32 %v2249, %v2405
      %v2407 = vpop.f32.mrb[0].mxu0
      %v2408 = vpop.f32.mrb[0].mxu0
      %v2409 = vadd.f32 %v2249, %v2408
      %v2410 = vpop.f32.mrb[0].mxu0
      %2411 = vmatprep.mubr.bf16.mxu0 0
      %2412 = vmatmul.mubr.bf16.gmra.mrb[0].mxu0 %v2204
      %v2413 = vpop.f32.mrb[0].mxu0
      %v2414 = vadd.f32 %v2249, %v2413
      %v2415 = vpop.f32.mrb[0].mxu0
      %v2416 = vpop.f32.mrb[0].mxu0
      %v2417 = vadd.f32 %v2249, %v2416
      %v2418 = vpop.f32.mrb[0].mxu0
      %2419 = vmatprep.mubr.bf16.mxu0 0
      %2420 = vmatmul.mubr.bf16.gmra.mrb[0].mxu0 %v2205
      %v2421 = vpop.f32.mrb[0].mxu0
      %v2422 = vadd.f32 %v2249, %v2421
      %v2423 = vpop.f32.mrb[0].mxu0
      %v2424 = vpop.f32.mrb[0].mxu0
      %v2425 = vadd.f32 %v2249, %v2424
      %v2426 = vpop.f32.mrb[0].mxu0
      %2427 = vmatprep.mubr.bf16.mxu0 0
      %2428 = vmatmul.mubr.bf16.gmra.mrb[0].mxu0 %v2206
      %v2429 = vpop.f32.mrb[0].mxu0
      %v2430 = vadd.f32 %v2249, %v2429
      %v2431 = vpop.f32.mrb[0].mxu0
      %v2432 = vpop.f32.mrb[0].mxu0
      %v2433 = vadd.f32 %v2249, %v2432
      %v2434 = vpop.f32.mrb[0].mxu0
      %2435 = vmatprep.mubr.bf16.mxu0 0
      %2436 = vmatmul.mubr.bf16.gmra.mrb[0].mxu0 %v2207
      %v2437 = vpop.f32.mrb[0].mxu0
      %v2438 = vadd.f32 %v2249, %v2437
      %v2439 = vpop.f32.mrb[0].mxu0
      %v2440 = vpop.f32.mrb[0].mxu0
      %v2441 = vadd.f32 %v2249, %v2440
      %v2442 = vpop.f32.mrb[0].mxu0
      %2443 = vmatprep.mubr.bf16.mxu0 0
      %2444 = vmatmul.mubr.bf16.gmra.mrb[0].mxu0 %v2208
      %v2445 = vpop.f32.mrb[0].mxu0
      %v2446 = vadd.f32 %v2249, %v2445
      %v2447 = vpop.f32.mrb[0].mxu0
      %v2448 = vpop.f32.mrb[0].mxu0
      %v2449 = vadd.f32 %v2249, %v2448
      %v2450 = vpop.f32.mrb[0].mxu0
      %2451 = vmatprep.mubr.bf16.mxu0 0
      %2452 = vmatmul.mubr.bf16.gmra.mrb[0].mxu0 %v2209
      %v2453 = vpop.f32.mrb[0].mxu0
      %v2454 = vadd.f32 %v2249, %v2453
      %v2455 = vpop.f32.mrb[0].mxu0
      %v2456 = vpop.f32.mrb[0].mxu0
      %v2457 = vadd.f32 %v2249, %v2456
      %v2458 = vpop.f32.mrb[0].mxu0
      %2459 = vmatprep.mubr.bf16.mxu0 0
      %2460 = vmatmul.mubr.bf16.gmra.mrb[0].mxu0 %v2210
      %v2461 = vpop.f32.mrb[0].mxu0
      %v2462 = vadd.f32 %v2249, %v2461
      %v2463 = vpop.f32.mrb[0].mxu0
      %v2464 = vpop.f32.mrb[0].mxu0
      %v2465 = vadd.f32 %v2249, %v2464
      %v2466 = vpop.f32.mrb[0].mxu0
      %2467 = vmatprep.mubr.bf16.mxu0 0
      %2468 = vmatmul.mubr.bf16.gmra.mrb[0].mxu0 %v2211
      %v2469 = vpop.f32.mrb[0].mxu0
      %v2470 = vadd.f32 %v2249, %v2469
      %v2471 = vpop.f32.mrb[0].mxu0
      %v2472 = vpop.f32.mrb[0].mxu0
      %v2473 = vadd.f32 %v2249, %v2472
      %v2474 = vpop.f32.mrb[0].mxu0
      %2475 = vmatprep.mubr.bf16.mxu0 0
      %2476 = vmatmul.mubr.bf16.gmra.mrb[0].mxu0 %v2212
      %v2477 = vpop.f32.mrb[0].mxu0
      %v2478 = vadd.f32 %v2249, %v2477
      %v2479 = vpop.f32.mrb[0].mxu0
      %v2480 = vpop.f32.mrb[0].mxu0
      %v2481 = vadd.f32 %v2249, %v2480
      %v2482 = vpop.f32.mrb[0].mxu0
      %2483 = vmatprep.mubr.bf16.mxu0 0
      %2484 = vmatmul.mubr.bf16.gmra.mrb[0].mxu0 %v2213
      %v2485 = vpop.f32.mrb[0].mxu0
      %v2486 = vadd.f32 %v2249, %v2485
      %v2487 = vpop.f32.mrb[0].mxu0
      %v2488 = vpop.f32.mrb[0].mxu0
      %v2489 = vadd.f32 %v2249, %v2488
      %v2490 = vpop.f32.mrb[0].mxu0
      %2491 = vmatprep.mubr.bf16.mxu0 0
      %2492 = vmatmul.mubr.bf16.gmra.mrb[0].mxu0 %v2214
      %v2493 = vpop.f32.mrb[0].mxu0
      %v2494 = vadd.f32 %v2249, %v2493
      %v2495 = vpop.f32.mrb[0].mxu0
      %v2496 = vpop.f32.mrb[0].mxu0
      %v2497 = vadd.f32 %v2249, %v2496
      %v2498 = vpop.f32.mrb[0].mxu0
      %2499 = vmatprep.mubr.bf16.mxu0 0
      %2500 = vmatmul.mubr.bf16.gmra.mrb[0].mxu0 %v2215
      %v2501 = vpop.f32.mrb[0].mxu0
      %v2502 = vadd.f32 %v2249, %v2501
      %v2503 = vpop.f32.mrb[0].mxu0
      %v2504 = vpop.f32.mrb[0].mxu0
      %v2505 = vadd.f32 %v2249, %v2504
      %v2506 = vpop.f32.mrb[0].mxu0
      %2507 = vmatprep.mubr.bf16.mxu0 0
      %2508 = vmatmul.mubr.bf16.gmra.mrb[0].mxu0 %v2216
      %v2509 = vpop.f32.mrb[0].mxu0
      %v2510 = vadd.f32 %v2249, %v2509
      %v2511 = vpop.f32.mrb[0].mxu0
      %v2512 = vpop.f32.mrb[0].mxu0
      %v2513 = vadd.f32 %v2249, %v2512
      %v2514 = vpop.f32.mrb[0].mxu0
      %2515 = vmatprep.mubr.bf16.mxu0 0
      %2516 = vmatmul.mubr.bf16.gmra.mrb[0].mxu0 %v2217
      %v2517 = vpop.f32.mrb[0].mxu0
      %v2518 = vadd.f32 %v2249, %v2517
      %v2519 = vpop.f32.mrb[0].mxu0
      %v2520 = vpop.f32.mrb[0].mxu0
      %v2521 = vadd.f32 %v2249, %v2520
      %v2522 = vpop.f32.mrb[0].mxu0
      %2523 = vmatprep.mubr.bf16.mxu0 0
      %2524 = vmatmul.mubr.bf16.gmra.mrb[0].mxu0 %v2218
      %v2525 = vpop.f32.mrb[0].mxu0
      %v2526 = vadd.f32 %v2249, %v2525
      %v2527 = vpop.f32.mrb[0].mxu0
      %v2528 = vpop.f32.mrb[0].mxu0
      %v2529 = vadd.f32 %v2249, %v2528
      %v2530 = vpop.f32.mrb[0].mxu0
      %2531 = vmatprep.mubr.bf16.mxu0 0
      %2532 = vmatmul.mubr.bf16.gmra.mrb[0].mxu0 %v2219
      %v2533 = vpop.f32.mrb[0].mxu0
      %v2534 = vadd.f32 %v2249, %v2533
      %v2535 = vpop.f32.mrb[0].mxu0
      %v2536 = vpop.f32.mrb[0].mxu0
      %v2537 = vadd.f32 %v2249, %v2536
      %v2538 = vpop.f32.mrb[0].mxu0
      %2539 = vmatprep.mubr.bf16.mxu0 0
      %2540 = vmatmul.mubr.bf16.gmra.mrb[0].mxu0 %v2220
      %v2541 = vpop.f32.mrb[0].mxu0
      %v2542 = vadd.f32 %v2249, %v2541
      %v2543 = vpop.f32.mrb[0].mxu0
      %v2544 = vpop.f32.mrb[0].mxu0
      %v2545 = vadd.f32 %v2249, %v2544
      %v2546 = vpop.f32.mrb[0].mxu0
      %2547 = vmatprep.mubr.bf16.mxu0 0
      %2548 = vmatmul.mubr.bf16.gmra.mrb[0].mxu0 %v2221
      %v2549 = vpop.f32.mrb[0].mxu0
      %v2550 = vadd.f32 %v2249, %v2549
      %v2551 = vpop.f32.mrb[0].mxu0
      %v2552 = vpop.f32.mrb[0].mxu0
      %v2553 = vadd.f32 %v2249, %v2552
      %v2554 = vpop.f32.mrb[0].mxu0
      %2555 = vmatprep.mubr.bf16.mxu0 0
      %2556 = vmatmul.mubr.bf16.gmra.mrb[0].mxu0 %v2222
      %v2557 = vpop.f32.mrb[0].mxu0
      %v2558 = vadd.f32 %v2249, %v2557
      %v2559 = vpop.f32.mrb[0].mxu0
      %v2560 = vpop.f32.mrb[0].mxu0
      %v2561 = vadd.f32 %v2249, %v2560
      %v2562 = vpop.f32.mrb[0].mxu0
      %2563 = vmatprep.mubr.bf16.mxu0 0
      %2564 = vmatmul.mubr.bf16.gmra.mrb[0].mxu0 %v2223
      %v2565 = vpop.f32.mrb[0].mxu0
      %v2566 = vadd.f32 %v2249, %v2565
      %v2567 = vpop.f32.mrb[0].mxu0
      %v2568 = vpop.f32.mrb[0].mxu0
      %v2569 = vadd.f32 %v2249, %v2568
      %v2570 = vpop.f32.mrb[0].mxu0
      %2571 = vmatprep.mubr.bf16.mxu0 0
      %2572 = vmatmul.mubr.bf16.gmra.mrb[0].mxu0 %v2224
      %v2573 = vpop.f32.mrb[0].mxu0
      %v2574 = vadd.f32 %v2249, %v2573
      %v2575 = vpop.f32.mrb[0].mxu0
      %v2576 = vpop.f32.mrb[0].mxu0
      %v2577 = vadd.f32 %v2249, %v2576
      %v2578 = vpop.f32.mrb[0].mxu0
      %2579 = vmatprep.mubr.bf16.mxu0 0
      %2580 = vmatmul.mubr.bf16.gmra.mrb[0].mxu0 %v2225
      %v2581 = vpop.f32.mrb[0].mxu0
      %v2582 = vadd.f32 %v2249, %v2581
      %v2583 = vpop.f32.mrb[0].mxu0
      %v2584 = vpop.f32.mrb[0].mxu0
      %v2585 = vadd.f32 %v2249, %v2584
      %v2586 = vpop.f32.mrb[0].mxu0
      %2587 = vdwg.mxu0
      %v2588 = vmax.f32 %v2334, 0.0
      %v2589 = vmax.f32 %v2337, 0.0
      %v2590 = vmax.f32 %v2342, 0.0
      %v2591 = vmax.f32 %v2345, 0.0
      %v2592 = vmax.f32 %v2350, 0.0
      %v2593 = vmax.f32 %v2353, 0.0
      %v2594 = vmax.f32 %v2358, 0.0
      %v2595 = vmax.f32 %v2361, 0.0
      %v2596 = vmax.f32 %v2366, 0.0
      %v2597 = vmax.f32 %v2369, 0.0
      %v2598 = vmax.f32 %v2374, 0.0
      %v2599 = vmax.f32 %v2377, 0.0
      %v2600 = vmax.f32 %v2382, 0.0
      %v2601 = vmax.f32 %v2385, 0.0
      %v2602 = vmax.f32 %v2390, 0.0
      %v2603 = vmax.f32 %v2393, 0.0
      %v2604 = vmax.f32 %v2398, 0.0
      %v2605 = vmax.f32 %v2401, 0.0
      %v2606 = vmax.f32 %v2406, 0.0
      %v2607 = vmax.f32 %v2409, 0.0
      %v2608 = vmax.f32 %v2414, 0.0
      %v2609 = vmax.f32 %v2417, 0.0
      %v2610 = vmax.f32 %v2422, 0.0
      %v2611 = vmax.f32 %v2425, 0.0
      %v2612 = vmax.f32 %v2430, 0.0
      %v2613 = vmax.f32 %v2433, 0.0
      %v2614 = vmax.f32 %v2438, 0.0
      %v2615 = vmax.f32 %v2441, 0.0
      %v2616 = vmax.f32 %v2446, 0.0
      %v2617 = vmax.f32 %v2449, 0.0
      %v2618 = vmax.f32 %v2454, 0.0
      %v2619 = vmax.f32 %v2457, 0.0
      %v2620 = vmax.f32 %v2462, 0.0
      %v2621 = vmax.f32 %v2465, 0.0
      %v2622 = vmax.f32 %v2470, 0.0
      %v2623 = vmax.f32 %v2473, 0.0
      %v2624 = vmax.f32 %v2478, 0.0
      %v2625 = vmax.f32 %v2481, 0.0
      %v2626 = vmax.f32 %v2486, 0.0
      %v2627 = vmax.f32 %v2489, 0.0
      %v2628 = vmax.f32 %v2494, 0.0
      %v2629 = vmax.f32 %v2497, 0.0
      %v2630 = vmax.f32 %v2502, 0.0
      %v2631 = vmax.f32 %v2505, 0.0
      %v2632 = vmax.f32 %v2510, 0.0
      %v2633 = vmax.f32 %v2513, 0.0
      %v2634 = vmax.f32 %v2518, 0.0
      %v2635 = vmax.f32 %v2521, 0.0
      %v2636 = vmax.f32 %v2526, 0.0
      %v2637 = vmax.f32 %v2529, 0.0
      %v2638 = vmax.f32 %v2534, 0.0
      %v2639 = vmax.f32 %v2537, 0.0
      %v2640 = vmax.f32 %v2542, 0.0
      %v2641 = vmax.f32 %v2545, 0.0
      %v2642 = vmax.f32 %v2550, 0.0
      %v2643 = vmax.f32 %v2553, 0.0
      %v2644 = vmax.f32 %v2558, 0.0
      %v2645 = vmax.f32 %v2561, 0.0
      %v2646 = vmax.f32 %v2566, 0.0
      %v2647 = vmax.f32 %v2569, 0.0
      %v2648 = vmax.f32 %v2574, 0.0
      %v2649 = vmax.f32 %v2577, 0.0
      %v2650 = vmax.f32 %v2582, 0.0
      %v2651 = vmax.f32 %v2585, 0.0
      %v2652 = vmul.f32 %v2588, %v406
      %v2653 = vmul.f32 %v2589, %v407
      %v2654 = vmul.f32 %v2590, %v408
      %v2655 = vmul.f32 %v2591, %v409
      %v2656 = vmul.f32 %v2592, %v410
      %v2657 = vmul.f32 %v2593, %v411
      %v2658 = vmul.f32 %v2594, %v412
      %v2659 = vmul.f32 %v2595, %v413
      %v2660 = vmul.f32 %v2596, %v414
      %v2661 = vmul.f32 %v2597, %v415
      %v2662 = vmul.f32 %v2598, %v416
      %v2663 = vmul.f32 %v2599, %v417
      %v2664 = vmul.f32 %v2600, %v418
      %v2665 = vmul.f32 %v2601, %v419
      %v2666 = vmul.f32 %v2602, %v420
      %v2667 = vmul.f32 %v2603, %v421
      %v2668 = vmul.f32 %v2604, %v422
      %v2669 = vmul.f32 %v2605, %v423
      %v2670 = vmul.f32 %v2606, %v424
      %v2671 = vmul.f32 %v2607, %v425
      %v2672 = vmul.f32 %v2608, %v426
      %v2673 = vmul.f32 %v2609, %v427
      %v2674 = vmul.f32 %v2610, %v428
      %v2675 = vmul.f32 %v2611, %v429
      %v2676 = vmul.f32 %v2612, %v430
      %v2677 = vmul.f32 %v2613, %v431
      %v2678 = vmul.f32 %v2614, %v432
      %v2679 = vmul.f32 %v2615, %v433
      %v2680 = vmul.f32 %v2616, %v434
      %v2681 = vmul.f32 %v2617, %v435
      %v2682 = vmul.f32 %v2618, %v436
      %v2683 = vmul.f32 %v2619, %v437
      %v2684 = vmul.f32 %v2620, %v438
      %v2685 = vmul.f32 %v2621, %v439
      %v2686 = vmul.f32 %v2622, %v440
      %v2687 = vmul.f32 %v2623, %v441
      %v2688 = vmul.f32 %v2624, %v442
      %v2689 = vmul.f32 %v2625, %v443
      %v2690 = vmul.f32 %v2626, %v444
      %v2691 = vmul.f32 %v2627, %v445
      %v2692 = vmul.f32 %v2628, %v446
      %v2693 = vmul.f32 %v2629, %v447
      %v2694 = vmul.f32 %v2630, %v448
      %v2695 = vmul.f32 %v2631, %v449
      %v2696 = vmul.f32 %v2632, %v450
      %v2697 = vmul.f32 %v2633, %v451
      %v2698 = vmul.f32 %v2634, %v452
      %v2699 = vmul.f32 %v2635, %v453
      %v2700 = vmul.f32 %v2636, %v454
      %v2701 = vmul.f32 %v2637, %v455
      %v2702 = vmul.f32 %v2638, %v456
      %v2703 = vmul.f32 %v2639, %v457
      %v2704 = vmul.f32 %v2640, %v458
      %v2705 = vmul.f32 %v2641, %v459
      %v2706 = vmul.f32 %v2642, %v460
      %v2707 = vmul.f32 %v2643, %v461
      %v2708 = vmul.f32 %v2644, %v462
      %v2709 = vmul.f32 %v2645, %v463
      %v2710 = vmul.f32 %v2646, %v464
      %v2711 = vmul.f32 %v2647, %v465
      %v2712 = vmul.f32 %v2648, %v466
      %v2713 = vmul.f32 %v2649, %v467
      %v2714 = vmul.f32 %v2650, %v468
      %v2715 = vmul.f32 %v2651, %v469
      %v2716 = vpack.c.bf16 %v2653, %v2652
      %v2717 = vpack.c.bf16 %v2655, %v2654
      %v2718 = vpack.c.bf16 %v2657, %v2656
      %v2719 = vpack.c.bf16 %v2659, %v2658
      %v2720 = vpack.c.bf16 %v2661, %v2660
      %v2721 = vpack.c.bf16 %v2663, %v2662
      %v2722 = vpack.c.bf16 %v2665, %v2664
      %v2723 = vpack.c.bf16 %v2667, %v2666
      %v2724 = vpack.c.bf16 %v2669, %v2668
      %v2725 = vpack.c.bf16 %v2671, %v2670
      %v2726 = vpack.c.bf16 %v2673, %v2672
      %v2727 = vpack.c.bf16 %v2675, %v2674
      %v2728 = vpack.c.bf16 %v2677, %v2676
      %v2729 = vpack.c.bf16 %v2679, %v2678
      %v2730 = vpack.c.bf16 %v2681, %v2680
      %v2731 = vpack.c.bf16 %v2683, %v2682
      %v2732 = vpack.c.bf16 %v2685, %v2684
      %v2733 = vpack.c.bf16 %v2687, %v2686
      %v2734 = vpack.c.bf16 %v2689, %v2688
      %v2735 = vpack.c.bf16 %v2691, %v2690
      %v2736 = vpack.c.bf16 %v2693, %v2692
      %v2737 = vpack.c.bf16 %v2695, %v2694
      %v2738 = vpack.c.bf16 %v2697, %v2696
      %v2739 = vpack.c.bf16 %v2699, %v2698
      %v2740 = vpack.c.bf16 %v2701, %v2700
      %v2741 = vpack.c.bf16 %v2703, %v2702
      %v2742 = vpack.c.bf16 %v2705, %v2704
      %v2743 = vpack.c.bf16 %v2707, %v2706
      %v2744 = vpack.c.bf16 %v2709, %v2708
      %v2745 = vpack.c.bf16 %v2711, %v2710
      %v2746 = vpack.c.bf16 %v2713, %v2712
      %v2747 = vpack.c.bf16 %v2715, %v2714
      %v2748 = vld [vmem:[%s4] sm:$0xf]
      %v2749 = vld [vmem:[%s4 + $0x4] sm:$0xf]
      %v2750 = vld [vmem:[%s4 + $0x8] sm:$0xf]
      %v2751 = vld [vmem:[%s4 + $0xc] sm:$0xf]
      %v2752 = vld [vmem:[%s4 + $0x10] sm:$0xf]
      %v2753 = vld [vmem:[%s4 + $0x14] sm:$0xf]
      %v2754 = vld [vmem:[%s4 + $0x18] sm:$0xf]
      %v2755 = vld [vmem:[%s4 + $0x1c] sm:$0xf]
      %v2756 = vld [vmem:[%s4 + $0x20] sm:$0xf]
      %v2757 = vld [vmem:[%s4 + $0x24] sm:$0xf]
      %v2758 = vld [vmem:[%s4 + $0x28] sm:$0xf]
      %v2759 = vld [vmem:[%s4 + $0x2c] sm:$0xf]
      %v2760 = vld [vmem:[%s4 + $0x30] sm:$0xf]
      %v2761 = vld [vmem:[%s4 + $0x34] sm:$0xf]
      %v2762 = vld [vmem:[%s4 + $0x38] sm:$0xf]
      %v2763 = vld [vmem:[%s4 + $0x3c] sm:$0xf]
      %v2764 = vld [vmem:[%s5] sm:$0x1]
      %v2766 = vlaneseq
      %v2767 = vshrl.u32 %v2766, 7
      %v2768 = vsub.s32 0, %v2767
      %v2769 = vrot.slane %v2764, %v2768
      %v2787 = vunpack.c.l.b16 %v2748
      %v2788 = vunpack.c.l.b16 %v2749
      %v2789 = vunpack.c.l.b16 %v2750
      %v2790 = vunpack.c.l.b16 %v2751
      %v2791 = vunpack.c.l.b16 %v2752
      %v2792 = vunpack.c.l.b16 %v2753
      %v2793 = vunpack.c.l.b16 %v2754
      %v2794 = vunpack.c.l.b16 %v2755
      %v2795 = vunpack.c.l.b16 %v2756
      %v2796 = vunpack.c.l.b16 %v2757
      %v2797 = vunpack.c.l.b16 %v2758
      %v2798 = vunpack.c.l.b16 %v2759
      %v2799 = vunpack.c.l.b16 %v2760
      %v2800 = vunpack.c.l.b16 %v2761
      %v2801 = vunpack.c.l.b16 %v2762
      %v2802 = vunpack.c.l.b16 %v2763
      %v2803 = vpack.c.b16 %v2788, %v2787
      %v2804 = vpack.c.b16 %v2790, %v2789
      %v2805 = vpack.c.b16 %v2792, %v2791
      %v2806 = vpack.c.b16 %v2794, %v2793
      %v2807 = vpack.c.b16 %v2796, %v2795
      %v2808 = vpack.c.b16 %v2798, %v2797
      %v2809 = vpack.c.b16 %v2800, %v2799
      %v2810 = vpack.c.b16 %v2802, %v2801
      %2819 = vmatprep.subr.bf16.mxu0 0
      %2820 = vmatpush1.bf16.msra.mxu0 %v2803
      %2821 = vmatprep.subr.bf16.mxu0 0
      %2822 = vmatpush1.bf16.msra.mxu0 %v2804
      %2823 = vmatprep.subr.bf16.mxu0 0
      %2824 = vmatpush1.bf16.msra.mxu0 %v2805
      %2825 = vmatprep.subr.bf16.mxu0 0
      %2826 = vmatpush1.bf16.msra.mxu0 %v2806
      %2827 = vmatprep.subr.bf16.mxu0 0
      %2828 = vmatpush1.bf16.msra.mxu0 %v2807
      %2829 = vmatprep.subr.bf16.mxu0 0
      %2830 = vmatpush1.bf16.msra.mxu0 %v2808
      %2831 = vmatprep.subr.bf16.mxu0 0
      %2832 = vmatpush1.bf16.msra.mxu0 %v2809
      %2833 = vmatprep.subr.bf16.mxu0 0
      %2834 = vmatpush1.bf16.msra.mxu0 %v2810
      %2835 = vmatprep.subr.bf16.mxu0 0
      %2836 = vmatpush1.bf16.msra.mxu0 0
      %2837 = vmatprep.subr.bf16.mxu0 0
      %2838 = vmatpush1.bf16.msra.mxu0 0
      %2839 = vmatprep.subr.bf16.mxu0 0
      %2840 = vmatpush1.bf16.msra.mxu0 0
      %2841 = vmatprep.subr.bf16.mxu0 0
      %2842 = vmatpush1.bf16.msra.mxu0 0
      %2843 = vmatprep.subr.bf16.mxu0 0
      %2844 = vmatpush1.bf16.msra.mxu0 0
      %2845 = vmatprep.subr.bf16.mxu0 0
      %2846 = vmatpush1.bf16.msra.mxu0 0
      %2847 = vmatprep.subr.bf16.mxu0 0
      %2848 = vmatpush1.bf16.msra.mxu0 0
      %2849 = vmatprep.subr.bf16.mxu0 0
      %2850 = vmatpush1.bf16.msra.mxu0 0
      %2851 = vmatprep.mubr.bf16.mxu0 0
      %2852 = vmatmul.mubr.bf16.gmra.mrb[0].mxu0 %v2716
      %v2853 = vpop.f32.mrb[0].mxu0
      %v2854 = vadd.f32 %v2769, %v2853
      %v2855 = vpop.f32.mrb[0].mxu0
      %v2856 = vpop.f32.mrb[0].mxu0
      %v2857 = vadd.f32 %v2769, %v2856
      %v2858 = vpop.f32.mrb[0].mxu0
      %2859 = vmatprep.mubr.bf16.mxu0 0
      %2860 = vmatmul.mubr.bf16.gmra.mrb[0].mxu0 %v2717
      %v2861 = vpop.f32.mrb[0].mxu0
      %v2862 = vadd.f32 %v2769, %v2861
      %v2863 = vpop.f32.mrb[0].mxu0
      %v2864 = vpop.f32.mrb[0].mxu0
      %v2865 = vadd.f32 %v2769, %v2864
      %v2866 = vpop.f32.mrb[0].mxu0
      %2867 = vmatprep.mubr.bf16.mxu0 0
      %2868 = vmatmul.mubr.bf16.gmra.mrb[0].mxu0 %v2718
      %v2869 = vpop.f32.mrb[0].mxu0
      %v2870 = vadd.f32 %v2769, %v2869
      %v2871 = vpop.f32.mrb[0].mxu0
      %v2872 = vpop.f32.mrb[0].mxu0
      %v2873 = vadd.f32 %v2769, %v2872
      %v2874 = vpop.f32.mrb[0].mxu0
      %2875 = vmatprep.mubr.bf16.mxu0 0
      %2876 = vmatmul.mubr.bf16.gmra.mrb[0].mxu0 %v2719
      %v2877 = vpop.f32.mrb[0].mxu0
      %v2878 = vadd.f32 %v2769, %v2877
      %v2879 = vpop.f32.mrb[0].mxu0
      %v2880 = vpop.f32.mrb[0].mxu0
      %v2881 = vadd.f32 %v2769, %v2880
      %v2882 = vpop.f32.mrb[0].mxu0
      %2883 = vmatprep.mubr.bf16.mxu0 0
      %2884 = vmatmul.mubr.bf16.gmra.mrb[0].mxu0 %v2720
      %v2885 = vpop.f32.mrb[0].mxu0
      %v2886 = vadd.f32 %v2769, %v2885
      %v2887 = vpop.f32.mrb[0].mxu0
      %v2888 = vpop.f32.mrb[0].mxu0
      %v2889 = vadd.f32 %v2769, %v2888
      %v2890 = vpop.f32.mrb[0].mxu0
      %2891 = vmatprep.mubr.bf16.mxu0 0
      %2892 = vmatmul.mubr.bf16.gmra.mrb[0].mxu0 %v2721
      %v2893 = vpop.f32.mrb[0].mxu0
      %v2894 = vadd.f32 %v2769, %v2893
      %v2895 = vpop.f32.mrb[0].mxu0
      %v2896 = vpop.f32.mrb[0].mxu0
      %v2897 = vadd.f32 %v2769, %v2896
      %v2898 = vpop.f32.mrb[0].mxu0
      %2899 = vmatprep.mubr.bf16.mxu0 0
      %2900 = vmatmul.mubr.bf16.gmra.mrb[0].mxu0 %v2722
      %v2901 = vpop.f32.mrb[0].mxu0
      %v2902 = vadd.f32 %v2769, %v2901
      %v2903 = vpop.f32.mrb[0].mxu0
      %v2904 = vpop.f32.mrb[0].mxu0
      %v2905 = vadd.f32 %v2769, %v2904
      %v2906 = vpop.f32.mrb[0].mxu0
      %2907 = vmatprep.mubr.bf16.mxu0 0
      %2908 = vmatmul.mubr.bf16.gmra.mrb[0].mxu0 %v2723
      %v2909 = vpop.f32.mrb[0].mxu0
      %v2910 = vadd.f32 %v2769, %v2909
      %v2911 = vpop.f32.mrb[0].mxu0
      %v2912 = vpop.f32.mrb[0].mxu0
      %v2913 = vadd.f32 %v2769, %v2912
      %v2914 = vpop.f32.mrb[0].mxu0
      %2915 = vmatprep.mubr.bf16.mxu0 0
      %2916 = vmatmul.mubr.bf16.gmra.mrb[0].mxu0 %v2724
      %v2917 = vpop.f32.mrb[0].mxu0
      %v2918 = vadd.f32 %v2769, %v2917
      %v2919 = vpop.f32.mrb[0].mxu0
      %v2920 = vpop.f32.mrb[0].mxu0
      %v2921 = vadd.f32 %v2769, %v2920
      %v2922 = vpop.f32.mrb[0].mxu0
      %2923 = vmatprep.mubr.bf16.mxu0 0
      %2924 = vmatmul.mubr.bf16.gmra.mrb[0].mxu0 %v2725
      %v2925 = vpop.f32.mrb[0].mxu0
      %v2926 = vadd.f32 %v2769, %v2925
      %v2927 = vpop.f32.mrb[0].mxu0
      %v2928 = vpop.f32.mrb[0].mxu0
      %v2929 = vadd.f32 %v2769, %v2928
      %v2930 = vpop.f32.mrb[0].mxu0
      %2931 = vmatprep.mubr.bf16.mxu0 0
      %2932 = vmatmul.mubr.bf16.gmra.mrb[0].mxu0 %v2726
      %v2933 = vpop.f32.mrb[0].mxu0
      %v2934 = vadd.f32 %v2769, %v2933
      %v2935 = vpop.f32.mrb[0].mxu0
      %v2936 = vpop.f32.mrb[0].mxu0
      %v2937 = vadd.f32 %v2769, %v2936
      %v2938 = vpop.f32.mrb[0].mxu0
      %2939 = vmatprep.mubr.bf16.mxu0 0
      %2940 = vmatmul.mubr.bf16.gmra.mrb[0].mxu0 %v2727
      %v2941 = vpop.f32.mrb[0].mxu0
      %v2942 = vadd.f32 %v2769, %v2941
      %v2943 = vpop.f32.mrb[0].mxu0
      %v2944 = vpop.f32.mrb[0].mxu0
      %v2945 = vadd.f32 %v2769, %v2944
      %v2946 = vpop.f32.mrb[0].mxu0
      %2947 = vmatprep.mubr.bf16.mxu0 0
      %2948 = vmatmul.mubr.bf16.gmra.mrb[0].mxu0 %v2728
      %v2949 = vpop.f32.mrb[0].mxu0
      %v2950 = vadd.f32 %v2769, %v2949
      %v2951 = vpop.f32.mrb[0].mxu0
      %v2952 = vpop.f32.mrb[0].mxu0
      %v2953 = vadd.f32 %v2769, %v2952
      %v2954 = vpop.f32.mrb[0].mxu0
      %2955 = vmatprep.mubr.bf16.mxu0 0
      %2956 = vmatmul.mubr.bf16.gmra.mrb[0].mxu0 %v2729
      %v2957 = vpop.f32.mrb[0].mxu0
      %v2958 = vadd.f32 %v2769, %v2957
      %v2959 = vpop.f32.mrb[0].mxu0
      %v2960 = vpop.f32.mrb[0].mxu0
      %v2961 = vadd.f32 %v2769, %v2960
      %v2962 = vpop.f32.mrb[0].mxu0
      %2963 = vmatprep.mubr.bf16.mxu0 0
      %2964 = vmatmul.mubr.bf16.gmra.mrb[0].mxu0 %v2730
      %v2965 = vpop.f32.mrb[0].mxu0
      %v2966 = vadd.f32 %v2769, %v2965
      %v2967 = vpop.f32.mrb[0].mxu0
      %v2968 = vpop.f32.mrb[0].mxu0
      %v2969 = vadd.f32 %v2769, %v2968
      %v2970 = vpop.f32.mrb[0].mxu0
      %2971 = vmatprep.mubr.bf16.mxu0 0
      %2972 = vmatmul.mubr.bf16.gmra.mrb[0].mxu0 %v2731
      %v2973 = vpop.f32.mrb[0].mxu0
      %v2974 = vadd.f32 %v2769, %v2973
      %v2975 = vpop.f32.mrb[0].mxu0
      %v2976 = vpop.f32.mrb[0].mxu0
      %v2977 = vadd.f32 %v2769, %v2976
      %v2978 = vpop.f32.mrb[0].mxu0
      %2979 = vmatprep.mubr.bf16.mxu0 0
      %2980 = vmatmul.mubr.bf16.gmra.mrb[0].mxu0 %v2732
      %v2981 = vpop.f32.mrb[0].mxu0
      %v2982 = vadd.f32 %v2769, %v2981
      %v2983 = vpop.f32.mrb[0].mxu0
      %v2984 = vpop.f32.mrb[0].mxu0
      %v2985 = vadd.f32 %v2769, %v2984
      %v2986 = vpop.f32.mrb[0].mxu0
      %2987 = vmatprep.mubr.bf16.mxu0 0
      %2988 = vmatmul.mubr.bf16.gmra.mrb[0].mxu0 %v2733
      %v2989 = vpop.f32.mrb[0].mxu0
      %v2990 = vadd.f32 %v2769, %v2989
      %v2991 = vpop.f32.mrb[0].mxu0
      %v2992 = vpop.f32.mrb[0].mxu0
      %v2993 = vadd.f32 %v2769, %v2992
      %v2994 = vpop.f32.mrb[0].mxu0
      %2995 = vmatprep.mubr.bf16.mxu0 0
      %2996 = vmatmul.mubr.bf16.gmra.mrb[0].mxu0 %v2734
      %v2997 = vpop.f32.mrb[0].mxu0
      %v2998 = vadd.f32 %v2769, %v2997
      %v2999 = vpop.f32.mrb[0].mxu0
      %v3000 = vpop.f32.mrb[0].mxu0
      %v3001 = vadd.f32 %v2769, %v3000
      %v3002 = vpop.f32.mrb[0].mxu0
      %3003 = vmatprep.mubr.bf16.mxu0 0
      %3004 = vmatmul.mubr.bf16.gmra.mrb[0].mxu0 %v2735
      %v3005 = vpop.f32.mrb[0].mxu0
      %v3006 = vadd.f32 %v2769, %v3005
      %v3007 = vpop.f32.mrb[0].mxu0
      %v3008 = vpop.f32.mrb[0].mxu0
      %v3009 = vadd.f32 %v2769, %v3008
      %v3010 = vpop.f32.mrb[0].mxu0
      %3011 = vmatprep.mubr.bf16.mxu0 0
      %3012 = vmatmul.mubr.bf16.gmra.mrb[0].mxu0 %v2736
      %v3013 = vpop.f32.mrb[0].mxu0
      %v3014 = vadd.f32 %v2769, %v3013
      %v3015 = vpop.f32.mrb[0].mxu0
      %v3016 = vpop.f32.mrb[0].mxu0
      %v3017 = vadd.f32 %v2769, %v3016
      %v3018 = vpop.f32.mrb[0].mxu0
      %3019 = vmatprep.mubr.bf16.mxu0 0
      %3020 = vmatmul.mubr.bf16.gmra.mrb[0].mxu0 %v2737
      %v3021 = vpop.f32.mrb[0].mxu0
      %v3022 = vadd.f32 %v2769, %v3021
      %v3023 = vpop.f32.mrb[0].mxu0
      %v3024 = vpop.f32.mrb[0].mxu0
      %v3025 = vadd.f32 %v2769, %v3024
      %v3026 = vpop.f32.mrb[0].mxu0
      %3027 = vmatprep.mubr.bf16.mxu0 0
      %3028 = vmatmul.mubr.bf16.gmra.mrb[0].mxu0 %v2738
      %v3029 = vpop.f32.mrb[0].mxu0
      %v3030 = vadd.f32 %v2769, %v3029
      %v3031 = vpop.f32.mrb[0].mxu0
      %v3032 = vpop.f32.mrb[0].mxu0
      %v3033 = vadd.f32 %v2769, %v3032
      %v3034 = vpop.f32.mrb[0].mxu0
      %3035 = vmatprep.mubr.bf16.mxu0 0
      %3036 = vmatmul.mubr.bf16.gmra.mrb[0].mxu0 %v2739
      %v3037 = vpop.f32.mrb[0].mxu0
      %v3038 = vadd.f32 %v2769, %v3037
      %v3039 = vpop.f32.mrb[0].mxu0
      %v3040 = vpop.f32.mrb[0].mxu0
      %v3041 = vadd.f32 %v2769, %v3040
      %v3042 = vpop.f32.mrb[0].mxu0
      %3043 = vmatprep.mubr.bf16.mxu0 0
      %3044 = vmatmul.mubr.bf16.gmra.mrb[0].mxu0 %v2740
      %v3045 = vpop.f32.mrb[0].mxu0
      %v3046 = vadd.f32 %v2769, %v3045
      %v3047 = vpop.f32.mrb[0].mxu0
      %v3048 = vpop.f32.mrb[0].mxu0
      %v3049 = vadd.f32 %v2769, %v3048
      %v3050 = vpop.f32.mrb[0].mxu0
      %3051 = vmatprep.mubr.bf16.mxu0 0
      %3052 = vmatmul.mubr.bf16.gmra.mrb[0].mxu0 %v2741
      %v3053 = vpop.f32.mrb[0].mxu0
      %v3054 = vadd.f32 %v2769, %v3053
      %v3055 = vpop.f32.mrb[0].mxu0
      %v3056 = vpop.f32.mrb[0].mxu0
      %v3057 = vadd.f32 %v2769, %v3056
      %v3058 = vpop.f32.mrb[0].mxu0
      %3059 = vmatprep.mubr.bf16.mxu0 0
      %3060 = vmatmul.mubr.bf16.gmra.mrb[0].mxu0 %v2742
      %v3061 = vpop.f32.mrb[0].mxu0
      %v3062 = vadd.f32 %v2769, %v3061
      %v3063 = vpop.f32.mrb[0].mxu0
      %v3064 = vpop.f32.mrb[0].mxu0
      %v3065 = vadd.f32 %v2769, %v3064
      %v3066 = vpop.f32.mrb[0].mxu0
      %3067 = vmatprep.mubr.bf16.mxu0 0
      %3068 = vmatmul.mubr.bf16.gmra.mrb[0].mxu0 %v2743
      %v3069 = vpop.f32.mrb[0].mxu0
      %v3070 = vadd.f32 %v2769, %v3069
      %v3071 = vpop.f32.mrb[0].mxu0
      %v3072 = vpop.f32.mrb[0].mxu0
      %v3073 = vadd.f32 %v2769, %v3072
      %v3074 = vpop.f32.mrb[0].mxu0
      %3075 = vmatprep.mubr.bf16.mxu0 0
      %3076 = vmatmul.mubr.bf16.gmra.mrb[0].mxu0 %v2744
      %v3077 = vpop.f32.mrb[0].mxu0
      %v3078 = vadd.f32 %v2769, %v3077
      %v3079 = vpop.f32.mrb[0].mxu0
      %v3080 = vpop.f32.mrb[0].mxu0
      %v3081 = vadd.f32 %v2769, %v3080
      %v3082 = vpop.f32.mrb[0].mxu0
      %3083 = vmatprep.mubr.bf16.mxu0 0
      %3084 = vmatmul.mubr.bf16.gmra.mrb[0].mxu0 %v2745
      %v3085 = vpop.f32.mrb[0].mxu0
      %v3086 = vadd.f32 %v2769, %v3085
      %v3087 = vpop.f32.mrb[0].mxu0
      %v3088 = vpop.f32.mrb[0].mxu0
      %v3089 = vadd.f32 %v2769, %v3088
      %v3090 = vpop.f32.mrb[0].mxu0
      %3091 = vmatprep.mubr.bf16.mxu0 0
      %3092 = vmatmul.mubr.bf16.gmra.mrb[0].mxu0 %v2746
      %v3093 = vpop.f32.mrb[0].mxu0
      %v3094 = vadd.f32 %v2769, %v3093
      %v3095 = vpop.f32.mrb[0].mxu0
      %v3096 = vpop.f32.mrb[0].mxu0
      %v3097 = vadd.f32 %v2769, %v3096
      %v3098 = vpop.f32.mrb[0].mxu0
      %3099 = vmatprep.mubr.bf16.mxu0 0
      %3100 = vmatmul.mubr.bf16.gmra.mrb[0].mxu0 %v2747
      %v3101 = vpop.f32.mrb[0].mxu0
      %v3102 = vadd.f32 %v2769, %v3101
      %v3103 = vpop.f32.mrb[0].mxu0
      %v3104 = vpop.f32.mrb[0].mxu0
      %v3105 = vadd.f32 %v2769, %v3104
      %v3106 = vpop.f32.mrb[0].mxu0
      %3107 = vdwg.mxu0
      %vm3108 = vcmask 31744
      %3109 = vst.msk [vmem:[%s275] sm:$0xff] %vm3108, %v2854
      %3110 = vst.msk [vmem:[%s275 + $0x8] sm:$0xff] %vm3108, %v2857
      %3111 = vst.msk [vmem:[%s275 + $0x10] sm:$0xff] %vm3108, %v2862
      %3112 = vst.msk [vmem:[%s275 + $0x18] sm:$0xff] %vm3108, %v2865
      %3113 = vst.msk [vmem:[%s275 + $0x20] sm:$0xff] %vm3108, %v2870
      %3114 = vst.msk [vmem:[%s275 + $0x28] sm:$0xff] %vm3108, %v2873
      %3115 = vst.msk [vmem:[%s275 + $0x30] sm:$0xff] %vm3108, %v2878
      %3116 = vst.msk [vmem:[%s275 + $0x38] sm:$0xff] %vm3108, %v2881
      %3117 = vst.msk [vmem:[%s275 + $0x40] sm:$0xff] %vm3108, %v2886
      %3118 = vst.msk [vmem:[%s275 + $0x48] sm:$0xff] %vm3108, %v2889
      %3119 = vst.msk [vmem:[%s275 + $0x50] sm:$0xff] %vm3108, %v2894
      %3120 = vst.msk [vmem:[%s275 + $0x58] sm:$0xff] %vm3108, %v2897
      %3121 = vst.msk [vmem:[%s275 + $0x60] sm:$0xff] %vm3108, %v2902
      %3122 = vst.msk [vmem:[%s275 + $0x68] sm:$0xff] %vm3108, %v2905
      %3123 = vst.msk [vmem:[%s275 + $0x70] sm:$0xff] %vm3108, %v2910
      %3124 = vst.msk [vmem:[%s275 + $0x78] sm:$0xff] %vm3108, %v2913
      %3125 = vst.msk [vmem:[%s275 + $0x80] sm:$0xff] %vm3108, %v2918
      %3126 = vst.msk [vmem:[%s275 + $0x88] sm:$0xff] %vm3108, %v2921
      %3127 = vst.msk [vmem:[%s275 + $0x90] sm:$0xff] %vm3108, %v2926
      %3128 = vst.msk [vmem:[%s275 + $0x98] sm:$0xff] %vm3108, %v2929
      %3129 = vst.msk [vmem:[%s275 + $0xa0] sm:$0xff] %vm3108, %v2934
      %3130 = vst.msk [vmem:[%s275 + $0xa8] sm:$0xff] %vm3108, %v2937
      %3131 = vst.msk [vmem:[%s275 + $0xb0] sm:$0xff] %vm3108, %v2942
      %3132 = vst.msk [vmem:[%s275 + $0xb8] sm:$0xff] %vm3108, %v2945
      %3133 = vst.msk [vmem:[%s275 + $0xc0] sm:$0xff] %vm3108, %v2950
      %3134 = vst.msk [vmem:[%s275 + $0xc8] sm:$0xff] %vm3108, %v2953
      %3135 = vst.msk [vmem:[%s275 + $0xd0] sm:$0xff] %vm3108, %v2958
      %3136 = vst.msk [vmem:[%s275 + $0xd8] sm:$0xff] %vm3108, %v2961
      %3137 = vst.msk [vmem:[%s275 + $0xe0] sm:$0xff] %vm3108, %v2966
      %3138 = vst.msk [vmem:[%s275 + $0xe8] sm:$0xff] %vm3108, %v2969
      %3139 = vst.msk [vmem:[%s275 + $0xf0] sm:$0xff] %vm3108, %v2974
      %3140 = vst.msk [vmem:[%s275 + $0xf8] sm:$0xff] %vm3108, %v2977
      %3141 = vst.msk [vmem:[%s275 + $0x100] sm:$0xff] %vm3108, %v2982
      %3142 = vst.msk [vmem:[%s275 + $0x108] sm:$0xff] %vm3108, %v2985
      %3143 = vst.msk [vmem:[%s275 + $0x110] sm:$0xff] %vm3108, %v2990
      %3144 = vst.msk [vmem:[%s275 + $0x118] sm:$0xff] %vm3108, %v2993
      %3145 = vst.msk [vmem:[%s275 + $0x120] sm:$0xff] %vm3108, %v2998
      %3146 = vst.msk [vmem:[%s275 + $0x128] sm:$0xff] %vm3108, %v3001
      %3147 = vst.msk [vmem:[%s275 + $0x130] sm:$0xff] %vm3108, %v3006
      %3148 = vst.msk [vmem:[%s275 + $0x138] sm:$0xff] %vm3108, %v3009
      %3149 = vst.msk [vmem:[%s275 + $0x140] sm:$0xff] %vm3108, %v3014
      %3150 = vst.msk [vmem:[%s275 + $0x148] sm:$0xff] %vm3108, %v3017
      %3151 = vst.msk [vmem:[%s275 + $0x150] sm:$0xff] %vm3108, %v3022
      %3152 = vst.msk [vmem:[%s275 + $0x158] sm:$0xff] %vm3108, %v3025
      %3153 = vst.msk [vmem:[%s275 + $0x160] sm:$0xff] %vm3108, %v3030
      %3154 = vst.msk [vmem:[%s275 + $0x168] sm:$0xff] %vm3108, %v3033
      %3155 = vst.msk [vmem:[%s275 + $0x170] sm:$0xff] %vm3108, %v3038
      %3156 = vst.msk [vmem:[%s275 + $0x178] sm:$0xff] %vm3108, %v3041
      %3157 = vst.msk [vmem:[%s275 + $0x180] sm:$0xff] %vm3108, %v3046
      %3158 = vst.msk [vmem:[%s275 + $0x188] sm:$0xff] %vm3108, %v3049
      %3159 = vst.msk [vmem:[%s275 + $0x190] sm:$0xff] %vm3108, %v3054
      %3160 = vst.msk [vmem:[%s275 + $0x198] sm:$0xff] %vm3108, %v3057
      %3161 = vst.msk [vmem:[%s275 + $0x1a0] sm:$0xff] %vm3108, %v3062
      %3162 = vst.msk [vmem:[%s275 + $0x1a8] sm:$0xff] %vm3108, %v3065
      %3163 = vst.msk [vmem:[%s275 + $0x1b0] sm:$0xff] %vm3108, %v3070
      %3164 = vst.msk [vmem:[%s275 + $0x1b8] sm:$0xff] %vm3108, %v3073
      %3165 = vst.msk [vmem:[%s275 + $0x1c0] sm:$0xff] %vm3108, %v3078
      %3166 = vst.msk [vmem:[%s275 + $0x1c8] sm:$0xff] %vm3108, %v3081
      %3167 = vst.msk [vmem:[%s275 + $0x1d0] sm:$0xff] %vm3108, %v3086
      %3168 = vst.msk [vmem:[%s275 + $0x1d8] sm:$0xff] %vm3108, %v3089
      %3169 = vst.msk [vmem:[%s275 + $0x1e0] sm:$0xff] %vm3108, %v3094
      %3170 = vst.msk [vmem:[%s275 + $0x1e8] sm:$0xff] %vm3108, %v3097
      %3171 = vst.msk [vmem:[%s275 + $0x1f0] sm:$0xff] %vm3108, %v3102
      %3172 = vst.msk [vmem:[%s275 + $0x1f8] sm:$0xff] %vm3108, %v3105
      %s3173 = smul.u32 64, %s17
      %p3174 = scmp.lt.s32.totalorder %s3173, 127
      %s3175 = scalar_select %p3174, %s3173, 127
      %s3176 = smul.addr %s3175, 8
      %s3177 = scalar_lea.vmem %s6, %s3176
      // Predicated region
      $region45: #{time_transformer_forward.1} parent=43 // pred_check
        %p3178 = pneg %p171
      $region46: #{time_transformer_forward.1} parent=43 // pred_check_branch
        %3180 = sbr.rel (%p3178) target = $region48
      $region47: #{time_transformer_forward.1} parent=43 // pred_region
        %s3181 = smul.u32 64, %s17
      $region48: #{time_transformer_forward.1} parent=43 // pred_fallthru
        _
    $region44: #{time_transformer_forward.1} parent=5 // pred_fallthru
      _
    %p3182 = scmp.le.s32.totalorder 2, %s12
    // Predicated region
    $region49: #{time_transformer_forward.1} parent=5 // pred_check
      %p3183 = pneg %p3182
    $region50: #{time_transformer_forward.1} parent=5 // pred_check_branch
      %3185 = sbr.rel (%p3183) target = $region52
    $region51: #{time_transformer_forward.1} parent=5 // pred_region
      %s3186 = ssub.s32 %s12, 2
      // Predicated region
      $region53: #{time_transformer_forward.1} parent=51 // pred_check
        %p3187 = pneg %p177
      $region54: #{time_transformer_forward.1} parent=51 // pred_check_branch
        %3189 = sbr.rel (%p3187) target = $region56
      $region55: #{time_transformer_forward.1} parent=51 // pred_region
        %s3190 = smul.u32 64, %s18
        %p3191 = scmp.lt.s32.totalorder %s3190, 127
        %s3192 = scalar_select %p3191, %s3190, 127
        %s3193 = smul.addr %s3192, 8
        %s3194 = scalar_lea.vmem %s6, %s3193
      $region56: #{time_transformer_forward.1} parent=51 // pred_fallthru
        _
    $region52: #{time_transformer_forward.1} parent=5 // pred_fallthru
      _
  $region6: #{time_transformer_forward.1} parent=0 // loop_footer
    %s16 = sadd.s32 1, %s12
  $region7: #{time_transformer_forward.1} parent=0 // loop_footer_branch
    %11 = sbr.rel target = $region3
  $region8: #{time_transformer_forward.1} parent=0 // loop_exit
    _

</llo_original>
